<compile_context>
chip_gen: v6e
topology: v6e:2x2x1
jax: 0.10.0
libtpu: 0.0.40
codegen_flags: <defaults>
</compile_context>

<pallas_src>
import functools
import math

import jax
import jax.numpy as jnp
from jax.experimental import pallas as pl
from jax.experimental.pallas import tpu as pltpu


_WEIGHT_ORDER = ("w1", "a1", "w2", "a2", "w3", "a3",
                 "pw1", "pb1", "pw2", "pb2",
                 "lw1", "lb1", "lw2", "lb2")


# -----------------------------------------------------------------------------
# Fused kernel: entire MinCutPoolNet forward for a block of `bt` graphs
# -----------------------------------------------------------------------------
def _forward_kernel(x_ref, adj_ref,
                    w1_ref, a1_ref, w2_ref, a2_ref, w3_ref, a3_ref,
                    pw1_ref, pb1_ref, pw2_ref, pb2_ref,
                    lw1_ref, lb1_ref, lw2_ref, lb2_ref,
                    out_ref, *, hidden, bt, num_classes, out_lanes):
    f32 = jnp.float32
    bf16 = jnp.bfloat16

    def sage_layer(h, a_bf, inv_deg, w_ref, off, cin, a_ref, layer):
        # DenseSAGEConv (lin_rel w/ bias, lin_root bias-free) -> ReLU -> folded BN(eval).
        # Single fused bf16 MXU matmul: [mean_agg | h] @ [wrel; wroot].
        w = w_ref[off:off + 2 * cin, :]                     # (2*Cin, H) bf16 slab slice
        row = 3 * layer
        bias = a_ref[row:row + 1, :]                        # (1, H) f32
        scale = a_ref[row + 1:row + 2, :]                   # gamma * rsqrt(var + eps)
        shift = a_ref[row + 2:row + 3, :]                   # beta - mean * scale
        h_bf = h.astype(bf16)
        agg = jnp.dot(a_bf, h_bf, preferred_element_type=f32) * inv_deg    # mean agg (f32)
        inp = jnp.concatenate([agg, h.astype(f32)], axis=-1).astype(bf16)  # (N, 2*Cin)
        out = jnp.dot(inp, w, preferred_element_type=f32) + bias
        out = jnp.maximum(out, 0.0)                         # ReLU (before BN, as in the block)
        return out * scale + shift

    def gnn_block(h, a_f32, w_ref, a_ref, cin):
        # GNN(..., lin=False): 3x (SAGE -> ReLU -> BN), channel-concat of h1|h2|h3.
        deg = jnp.maximum(jnp.sum(a_f32, axis=-1, keepdims=True), 1.0)   # clamp(min=1)
        inv_deg = 1.0 / deg                                              # exact division
        a_bf = a_f32.astype(bf16)
        h1 = sage_layer(h, a_bf, inv_deg, w_ref, 0, cin, a_ref, 0)
        h2 = sage_layer(h1, a_bf, inv_deg, w_ref, 2 * cin, hidden, a_ref, 1)
        h3 = sage_layer(h2, a_bf, inv_deg, w_ref, 2 * cin + 2 * hidden, hidden, a_ref, 2)
        # TODO(synk): at larger hidden, write h1/h2/h3 into lane slices of a VMEM
        #             scratch instead of a lane concat (negligible at hidden=32).
        return jnp.concatenate([h1, h2, h3], axis=-1)                    # (N, 3H) f32

    def mincut_pool(h, a_f32, logits):
        # dense_mincut_pool; kept in f32 (tiny K<=8 dots, feeds the loss scalars).
        k = logits.shape[-1]
        m = jnp.max(logits, axis=-1, keepdims=True)
        e = jnp.exp(logits - m)
        s = e / jnp.sum(e, axis=-1, keepdims=True)                       # exact softmax (N, K)

        tdot = (((0,), (0,)), ((), ()))   # contract over the node axis: s^T @ (.)
        out_x = jax.lax.dot_general(s, h, tdot, preferred_element_type=f32)     # (K, C)
        s_adj = jax.lax.dot_general(s, a_f32, tdot, preferred_element_type=f32) # (K, N)
        out_adj = jnp.dot(s_adj, s, preferred_element_type=f32)                 # (K, K)

        eye = jnp.eye(k, dtype=f32)

        # MinCut loss: -trace(S^T A S) / trace(S^T D S)
        mincut_num = jnp.sum(out_adj * eye)
        d_flat = jnp.sum(a_f32, axis=-1, keepdims=True)                         # (N, 1)
        mincut_den = jnp.sum(d_flat * jnp.sum(s * s, axis=-1, keepdims=True))
        mc = -(mincut_num / mincut_den)

        # Orthogonality loss: || S^T S / ||S^T S||_F - I/sqrt(K) ||_F
        ss = jax.lax.dot_general(s, s, tdot, preferred_element_type=f32)        # (K, K)
        ss_norm = jnp.sqrt(jnp.sum(ss * ss))
        diff = ss / ss_norm - eye * (1.0 / math.sqrt(k))
        ortho = jnp.sqrt(jnp.sum(diff * diff))

        # Zero diagonal + symmetric degree normalization (torch_geometric convention).
        oa = out_adj * (1.0 - eye)
        d = jnp.sqrt(jnp.sum(oa, axis=-1, keepdims=True)) + 1e-15               # (K, 1)
        r = 1.0 / d
        r_row = jnp.sum(eye * r, axis=0, keepdims=True)                         # (1, K)
        oa = oa * r * r_row                                                     # (oa / d) / d^T
        return out_x, oa, mc, ortho

    f_in = x_ref.shape[-1]
    lane = jax.lax.broadcasted_iota(jnp.int32, (1, out_lanes), 1)
    cls_mask = lane < num_classes

    # Static (compile-time) loop over the graphs in this block.
    for g in range(bt):
        x = x_ref[g]                           # (N, F) bf16
        adj = adj_ref[g].astype(f32)           # (N, N) f32 (0/1, exact in bf16 storage)

        # --- stage 1: conv1 -> relu, pool1 logits, dense_mincut_pool ----------
        h1 = jnp.maximum(gnn_block(x, adj, w1_ref, a1_ref, f_in), 0.0)
        s1 = (jnp.dot(h1.astype(bf16), pw1_ref[...], preferred_element_type=f32)
              + pb1_ref[...])
        x1, adj1, mc1, o1 = mincut_pool(h1, adj, s1)

        # --- stage 2: conv2 -> relu, pool2 logits, dense_mincut_pool ----------
        h2 = jnp.maximum(gnn_block(x1, adj1, w2_ref, a2_ref, 3 * hidden), 0.0)
        s2 = (jnp.dot(h2.astype(bf16), pw2_ref[...], preferred_element_type=f32)
              + pb2_ref[...])
        x2, adj2, mc2, o2 = mincut_pool(h2, adj1, s2)

        # --- stage 3: conv3, readout, lin1 -> relu -> lin2 -> log_softmax -----
        h3 = gnn_block(x2, adj2, w3_ref, a3_ref, 3 * hidden)
        gemb = jnp.mean(h3, axis=0, keepdims=True)                       # (1, 3H)
        hh = jnp.maximum(
            jnp.dot(gemb.astype(bf16), lw1_ref[...], preferred_element_type=f32)
            + lb1_ref[...], 0.0)
        # lin2 is zero-padded to `out_lanes` columns -> logits row is lane-dense.
        logits = (jnp.dot(hh.astype(bf16), lw2_ref[...], preferred_element_type=f32)
                  + lb2_ref[...])                                        # (1, out_lanes)
        mmax = jnp.max(jnp.where(cls_mask, logits, -jnp.inf), axis=-1, keepdims=True)
        esum = jnp.sum(jnp.where(cls_mask, jnp.exp(logits - mmax), 0.0),
                       axis=-1, keepdims=True)
        logp = logits - (jnp.log(esum) + mmax)

        # Pack log-probs + the two loss partials into ONE lane-dense row:
        #   lanes [0,C): log-probs, lane C: mc1+mc2, lane C+1: o1+o2, rest 0.
        row = jnp.where(cls_mask, logp, 0.0)
        row = jnp.where(lane == num_classes, mc1 + mc2, row)
        row = jnp.where(lane == num_classes + 1, o1 + o2, row)
        out_ref[g] = row


# -----------------------------------------------------------------------------
# Wrapper: one pallas_call for the whole forward
# -----------------------------------------------------------------------------
def _rep_spec(arr):
    """Full-array block, same block for every grid step (weights stay VMEM-resident)."""
    zeros = (0,) * arr.ndim
    return pl.BlockSpec(arr.shape, lambda b, _z=zeros: _z)


def mincut_pool_net_forward(params, x, adj, *, graphs_per_step=None):
    """MinCutPoolNet.forward (mask=None path): returns (log_softmax, mc_loss, ortho_loss)."""
    B, N, F = x.shape
    hidden = params["lw2"].shape[0]
    num_classes = params["lw2"].shape[1]
    out_lanes = max(128, -(-(num_classes + 2) // 128) * 128)   # lane-dense output width

    if graphs_per_step is None:
        # Small batches: one graph per step keeps the grid length >= 2 so both
        # v7x TensorCores get work; raise for large B to amortize step overhead.
        graphs_per_step = 1 if B <= 2 else 2
    while B % graphs_per_step:
        graphs_per_step -= 1
    steps = B // graphs_per_step

    kernel = functools.partial(_forward_kernel, hidden=hidden, bt=graphs_per_step,
                               num_classes=num_classes, out_lanes=out_lanes)

    # Zero-pad lin2 (weights/bias) to the lane-dense output width (tiny, exact).
    wdict = dict(params)
    wdict["lw2"] = jnp.pad(params["lw2"], ((0, 0), (0, out_lanes - num_classes)))
    wdict["lb2"] = jnp.pad(params["lb2"], ((0, 0), (0, out_lanes - num_classes)))
    weights = [wdict[k] for k in _WEIGHT_ORDER]

    in_specs = [
        pl.BlockSpec((graphs_per_step, N, F), lambda b: (b, 0, 0)),
        pl.BlockSpec((graphs_per_step, N, N), lambda b: (b, 0, 0)),
    ] + [_rep_spec(w) for w in weights]

    packed = pl.pallas_call(
        kernel,
        out_shape=jax.ShapeDtypeStruct((B, 1, out_lanes), jnp.float32),
        grid=(steps,),
        in_specs=in_specs,
        out_specs=pl.BlockSpec((graphs_per_step, 1, out_lanes), lambda b: (b, 0, 0)),
        compiler_params=pltpu.CompilerParams(
            dimension_semantics=("parallel",)),    # v7x: grid split across the 2 TCs
        # NOTE(v7x): x/adj are stored bf16 (halved DMA/VMEM); for much larger N,
        # additionally tile the aggregation or raise vmem_limit_bytes.
    )(x.astype(jnp.bfloat16), adj.astype(jnp.bfloat16), *weights)

    logp = packed[:, 0, :num_classes]
    mc = jnp.mean(packed[:, 0, num_classes])
    ortho = jnp.mean(packed[:, 0, num_classes + 1])
    return logp, mc, ortho


# -----------------------------------------------------------------------------
# Parameter init (deterministic, synthetic) with packing + folded BatchNorm
# -----------------------------------------------------------------------------
def _rand(key, shape):
    return 0.1 * jax.random.normal(key, shape, jnp.float32)


def _init_sage_layer(key, cin, cout):
    k1, k2, k3 = jax.random.split(key, 3)
    wrel = _rand(k1, (cin, cout))
    wroot = _rand(k2, (cin, cout))
    bias = _rand(k3, (cout,))
    # BatchNorm1d eval-mode params (gamma=1, beta=0, running stats 0/1) folded.
    gamma = jnp.ones((cout,), jnp.float32)
    beta = jnp.zeros((cout,), jnp.float32)
    mean = jnp.zeros((cout,), jnp.float32)
    var = jnp.ones((cout,), jnp.float32)
    scale = gamma * jax.lax.rsqrt(var + 1e-5)
    shift = beta - mean * scale
    return wrel, wroot, (bias, scale, shift)


def _init_gnn_block(key, cin, hidden):
    k1, k2, k3 = jax.random.split(key, 3)
    wr1, wo1, aff1 = _init_sage_layer(k1, cin, hidden)
    wr2, wo2, aff2 = _init_sage_layer(k2, hidden, hidden)
    wr3, wo3, aff3 = _init_sage_layer(k3, hidden, hidden)
    # Stacked weight slab (bf16): [wrel1; wroot1; wrel2; wroot2; wrel3; wroot3]
    w = jnp.concatenate([wr1, wo1, wr2, wo2, wr3, wo3], axis=0).astype(jnp.bfloat16)
    # Flat affine slab (f32): rows [b1,scale1,shift1, b2,scale2,shift2, b3,scale3,shift3]
    a = jnp.stack(list(aff1) + list(aff2) + list(aff3), axis=0)          # (9, hidden)
    return w, a


def _init_linear(key, cin, cout):
    k1, k2 = jax.random.split(key)
    return _rand(k1, (cin, cout)).astype(jnp.bfloat16), _rand(k2, (1, cout))


def init_params(key, num_feats, num_classes, max_nodes, hidden):
    ks = jax.random.split(key, 7)
    n1 = math.ceil(0.5 * max_nodes)
    n2 = math.ceil(0.5 * n1)
    w1, a1 = _init_gnn_block(ks[0], num_feats, hidden)
    pw1, pb1 = _init_linear(ks[1], 3 * hidden, n1)
    w2, a2 = _init_gnn_block(ks[2], 3 * hidden, hidden)
    pw2, pb2 = _init_linear(ks[3], 3 * hidden, n2)
    w3, a3 = _init_gnn_block(ks[4], 3 * hidden, hidden)
    lw1, lb1 = _init_linear(ks[5], 3 * hidden, hidden)
    lw2, lb2 = _init_linear(ks[6], hidden, num_classes)
    return dict(w1=w1, a1=a1, w2=w2, a2=a2, w3=w3, a3=a3,
                pw1=pw1, pb1=pb1, pw2=pw2, pb2=pb2,
                lw1=lw1, lb1=lb1, lw2=lw2, lb2=lb2)


# -----------------------------------------------------------------------------
if __name__ == "__main__":
    B, N, F_IN, HIDDEN, NUM_CLASSES = 2, 16, 16, 32, 4

    key = jax.random.PRNGKey(0)
    k_x, k_adj, k_p = jax.random.split(key, 3)

    x = jax.random.normal(k_x, (B, N, F_IN), jnp.float32)
    a = (jax.random.uniform(k_adj, (B, N, N)) < 0.3).astype(jnp.float32)
    adj = jnp.maximum(a, jnp.swapaxes(a, 1, 2))          # symmetric dense 0/1 adjacency

    params = init_params(k_p, F_IN, NUM_CLASSES, N, HIDDEN)

    fwd = jax.jit(mincut_pool_net_forward)
    logp, mc_loss, ortho_loss = fwd(params, x, adj)
    jax.block_until_ready((logp, mc_loss, ortho_loss))

    assert logp.shape == (B, NUM_CLASSES)
    assert mc_loss.shape == () and ortho_loss.shape == ()
    print("KERNEL_OK")
</pallas_src>

<mosaic_0001>
module attributes {stable_mosaic.version = 11 : i64} {
  func.func @_forward_kernel(%arg0: i32, %arg1: memref<1x16x16xbf16, #tpu.memory_space<vmem>>, %arg2: memref<1x16x16xbf16, #tpu.memory_space<vmem>>, %arg3: memref<160x32xbf16, #tpu.memory_space<vmem>>, %arg4: memref<9x32xf32, #tpu.memory_space<vmem>>, %arg5: memref<320x32xbf16, #tpu.memory_space<vmem>>, %arg6: memref<9x32xf32, #tpu.memory_space<vmem>>, %arg7: memref<320x32xbf16, #tpu.memory_space<vmem>>, %arg8: memref<9x32xf32, #tpu.memory_space<vmem>>, %arg9: memref<96x8xbf16, #tpu.memory_space<vmem>>, %arg10: memref<1x8xf32, #tpu.memory_space<vmem>>, %arg11: memref<96x4xbf16, #tpu.memory_space<vmem>>, %arg12: memref<1x4xf32, #tpu.memory_space<vmem>>, %arg13: memref<96x32xbf16, #tpu.memory_space<vmem>>, %arg14: memref<1x32xf32, #tpu.memory_space<vmem>>, %arg15: memref<32x128xbf16, #tpu.memory_space<vmem>>, %arg16: memref<1x128xf32, #tpu.memory_space<vmem>>, %arg17: memref<1x1x128xf32, #tpu.memory_space<vmem>>) attributes {dimension_semantics = [#tpu.dimension_semantics<parallel>], iteration_bounds = array<i64: 2>, scalar_prefetch = 0 : i64, scratch_operands = 0 : i64, tpu.core_type = #tpu.core_type<tc>, window_params = [{transform_indices = @transform_0, window_bounds = array<i64: 1, 16, 16>}, {transform_indices = @transform_1, window_bounds = array<i64: 1, 16, 16>}, {pipeline_mode = #tpu.pipeline_mode<synchronous>, transform_indices = @transform_2, window_bounds = array<i64: 160, 32>}, {pipeline_mode = #tpu.pipeline_mode<synchronous>, transform_indices = @transform_3, window_bounds = array<i64: 9, 32>}, {pipeline_mode = #tpu.pipeline_mode<synchronous>, transform_indices = @transform_4, window_bounds = array<i64: 320, 32>}, {pipeline_mode = #tpu.pipeline_mode<synchronous>, transform_indices = @transform_5, window_bounds = array<i64: 9, 32>}, {pipeline_mode = #tpu.pipeline_mode<synchronous>, transform_indices = @transform_6, window_bounds = array<i64: 320, 32>}, {pipeline_mode = #tpu.pipeline_mode<synchronous>, transform_indices = @transform_7, window_bounds = array<i64: 9, 32>}, {pipeline_mode = #tpu.pipeline_mode<synchronous>, transform_indices = @transform_8, window_bounds = array<i64: 96, 8>}, {pipeline_mode = #tpu.pipeline_mode<synchronous>, transform_indices = @transform_9, window_bounds = array<i64: 1, 8>}, {pipeline_mode = #tpu.pipeline_mode<synchronous>, transform_indices = @transform_10, window_bounds = array<i64: 96, 4>}, {pipeline_mode = #tpu.pipeline_mode<synchronous>, transform_indices = @transform_11, window_bounds = array<i64: 1, 4>}, {pipeline_mode = #tpu.pipeline_mode<synchronous>, transform_indices = @transform_12, window_bounds = array<i64: 96, 32>}, {pipeline_mode = #tpu.pipeline_mode<synchronous>, transform_indices = @transform_13, window_bounds = array<i64: 1, 32>}, {pipeline_mode = #tpu.pipeline_mode<synchronous>, transform_indices = @transform_14, window_bounds = array<i64: 32, 128>}, {pipeline_mode = #tpu.pipeline_mode<synchronous>, transform_indices = @transform_15, window_bounds = array<i64: 1, 128>}, {transform_indices = @transform_16, window_bounds = array<i64: 1, 1, 128>}]} {
    %0 = tpu.iota {dimensions = array<i32: 1>} : vector<1x128xi32>
    %c4_i32 = arith.constant 4 : i32
    %1 = vector.broadcast %c4_i32 : i32 to vector<1x128xi32>
    %2 = arith.cmpi slt, %0, %1 : vector<1x128xi32>
    %c0 = arith.constant 0 : index
    %c0_0 = arith.constant 0 : index
    %c0_1 = arith.constant 0 : index
    %3 = vector.load %arg1[%c0, %c0_0, %c0_1] : memref<1x16x16xbf16, #tpu.memory_space<vmem>>, vector<1x16x16xbf16>
    %4 = vector.shape_cast %3 : vector<1x16x16xbf16> to vector<16x16xbf16>
    %c0_2 = arith.constant 0 : index
    %c0_3 = arith.constant 0 : index
    %c0_4 = arith.constant 0 : index
    %5 = vector.load %arg2[%c0_2, %c0_3, %c0_4] : memref<1x16x16xbf16, #tpu.memory_space<vmem>>, vector<1x16x16xbf16>
    %6 = vector.shape_cast %5 : vector<1x16x16xbf16> to vector<16x16xbf16>
    %7 = arith.extf %6 : vector<16x16xbf16> to vector<16x16xf32>
    %cst = arith.constant dense<0.000000e+00> : vector<16xf32>
    %8 = vector.multi_reduction <add>, %7, %cst [1] : vector<16x16xf32> to vector<16xf32>
    %9 = vector.shape_cast %8 : vector<16xf32> to vector<16x1xf32>
    %cst_5 = arith.constant 1.000000e+00 : f32
    %10 = vector.broadcast %cst_5 : f32 to vector<16x1xf32>
    %11 = arith.maximumf %9, %10 : vector<16x1xf32>
    %cst_6 = arith.constant 1.000000e+00 : f32
    %12 = vector.broadcast %cst_6 : f32 to vector<16x1xf32>
    %13 = arith.divf %12, %11 : vector<16x1xf32>
    %14 = arith.truncf %7 : vector<16x16xf32> to vector<16x16xbf16>
    %c0_7 = arith.constant 0 : index
    %c0_8 = arith.constant 0 : index
    %15 = vector.load %arg3[%c0_7, %c0_8] : memref<160x32xbf16, #tpu.memory_space<vmem>>, vector<32x32xbf16>
    %c0_9 = arith.constant 0 : index
    %c0_10 = arith.constant 0 : index
    %16 = vector.load %arg4[%c0_9, %c0_10] : memref<9x32xf32, #tpu.memory_space<vmem>>, vector<1x32xf32>
    %c1 = arith.constant 1 : index
    %c0_11 = arith.constant 0 : index
    %17 = vector.load %arg4[%c1, %c0_11] : memref<9x32xf32, #tpu.memory_space<vmem>>, vector<1x32xf32>
    %c2 = arith.constant 2 : index
    %c0_12 = arith.constant 0 : index
    %18 = vector.load %arg4[%c2, %c0_12] : memref<9x32xf32, #tpu.memory_space<vmem>>, vector<1x32xf32>
    %cst_13 = arith.constant dense<0.000000e+00> : vector<16x16xf32>
    %19 = tpu.matmul %14, %4, %cst_13 {dimension_numbers = #tpu.dot_dimension_numbers<[1], [0], [0], [1], [0, 0, 1, 1], [], []>} : vector<16x16xbf16>, vector<16x16xbf16>, vector<16x16xf32> -> vector<16x16xf32>
    %20 = vector.broadcast %13 : vector<16x1xf32> to vector<16x16xf32>
    %21 = arith.mulf %19, %20 : vector<16x16xf32>
    %22 = arith.extf %4 : vector<16x16xbf16> to vector<16x16xf32>
    %23 = tpu.concatenate %21, %22 in 1 : vector<16x16xf32>, vector<16x16xf32> -> vector<16x32xf32>
    %24 = arith.truncf %23 : vector<16x32xf32> to vector<16x32xbf16>
    %cst_14 = arith.constant dense<0.000000e+00> : vector<16x32xf32>
    %25 = tpu.matmul %24, %15, %cst_14 {dimension_numbers = #tpu.dot_dimension_numbers<[1], [0], [0], [1], [0, 0, 1, 1], [], []>} : vector<16x32xbf16>, vector<32x32xbf16>, vector<16x32xf32> -> vector<16x32xf32>
    %26 = vector.broadcast %16 : vector<1x32xf32> to vector<16x32xf32>
    %27 = arith.addf %25, %26 : vector<16x32xf32>
    %cst_15 = arith.constant 0.000000e+00 : f32
    %28 = vector.broadcast %cst_15 : f32 to vector<16x32xf32>
    %29 = arith.maximumf %27, %28 : vector<16x32xf32>
    %30 = vector.broadcast %17 : vector<1x32xf32> to vector<16x32xf32>
    %31 = arith.mulf %29, %30 : vector<16x32xf32>
    %32 = vector.broadcast %18 : vector<1x32xf32> to vector<16x32xf32>
    %33 = arith.addf %31, %32 : vector<16x32xf32>
    %c32 = arith.constant 32 : index
    %c0_16 = arith.constant 0 : index
    %34 = vector.load %arg3[%c32, %c0_16] : memref<160x32xbf16, #tpu.memory_space<vmem>>, vector<64x32xbf16>
    %c3 = arith.constant 3 : index
    %c0_17 = arith.constant 0 : index
    %35 = vector.load %arg4[%c3, %c0_17] : memref<9x32xf32, #tpu.memory_space<vmem>>, vector<1x32xf32>
    %c4 = arith.constant 4 : index
    %c0_18 = arith.constant 0 : index
    %36 = vector.load %arg4[%c4, %c0_18] : memref<9x32xf32, #tpu.memory_space<vmem>>, vector<1x32xf32>
    %c5 = arith.constant 5 : index
    %c0_19 = arith.constant 0 : index
    %37 = vector.load %arg4[%c5, %c0_19] : memref<9x32xf32, #tpu.memory_space<vmem>>, vector<1x32xf32>
    %38 = arith.truncf %33 : vector<16x32xf32> to vector<16x32xbf16>
    %cst_20 = arith.constant dense<0.000000e+00> : vector<16x32xf32>
    %39 = tpu.matmul %14, %38, %cst_20 {dimension_numbers = #tpu.dot_dimension_numbers<[1], [0], [0], [1], [0, 0, 1, 1], [], []>} : vector<16x16xbf16>, vector<16x32xbf16>, vector<16x32xf32> -> vector<16x32xf32>
    %40 = vector.broadcast %13 : vector<16x1xf32> to vector<16x32xf32>
    %41 = arith.mulf %39, %40 : vector<16x32xf32>
    %42 = tpu.concatenate %41, %33 in 1 : vector<16x32xf32>, vector<16x32xf32> -> vector<16x64xf32>
    %43 = arith.truncf %42 : vector<16x64xf32> to vector<16x64xbf16>
    %cst_21 = arith.constant dense<0.000000e+00> : vector<16x32xf32>
    %44 = tpu.matmul %43, %34, %cst_21 {dimension_numbers = #tpu.dot_dimension_numbers<[1], [0], [0], [1], [0, 0, 1, 1], [], []>} : vector<16x64xbf16>, vector<64x32xbf16>, vector<16x32xf32> -> vector<16x32xf32>
    %45 = vector.broadcast %35 : vector<1x32xf32> to vector<16x32xf32>
    %46 = arith.addf %44, %45 : vector<16x32xf32>
    %cst_22 = arith.constant 0.000000e+00 : f32
    %47 = vector.broadcast %cst_22 : f32 to vector<16x32xf32>
    %48 = arith.maximumf %46, %47 : vector<16x32xf32>
    %49 = vector.broadcast %36 : vector<1x32xf32> to vector<16x32xf32>
    %50 = arith.mulf %48, %49 : vector<16x32xf32>
    %51 = vector.broadcast %37 : vector<1x32xf32> to vector<16x32xf32>
    %52 = arith.addf %50, %51 : vector<16x32xf32>
    %c96 = arith.constant 96 : index
    %c0_23 = arith.constant 0 : index
    %53 = vector.load %arg3[%c96, %c0_23] : memref<160x32xbf16, #tpu.memory_space<vmem>>, vector<64x32xbf16>
    %c6 = arith.constant 6 : index
    %c0_24 = arith.constant 0 : index
    %54 = vector.load %arg4[%c6, %c0_24] : memref<9x32xf32, #tpu.memory_space<vmem>>, vector<1x32xf32>
    %c7 = arith.constant 7 : index
    %c0_25 = arith.constant 0 : index
    %55 = vector.load %arg4[%c7, %c0_25] : memref<9x32xf32, #tpu.memory_space<vmem>>, vector<1x32xf32>
    %c8 = arith.constant 8 : index
    %c0_26 = arith.constant 0 : index
    %56 = vector.load %arg4[%c8, %c0_26] : memref<9x32xf32, #tpu.memory_space<vmem>>, vector<1x32xf32>
    %57 = arith.truncf %52 : vector<16x32xf32> to vector<16x32xbf16>
    %cst_27 = arith.constant dense<0.000000e+00> : vector<16x32xf32>
    %58 = tpu.matmul %14, %57, %cst_27 {dimension_numbers = #tpu.dot_dimension_numbers<[1], [0], [0], [1], [0, 0, 1, 1], [], []>} : vector<16x16xbf16>, vector<16x32xbf16>, vector<16x32xf32> -> vector<16x32xf32>
    %59 = vector.broadcast %13 : vector<16x1xf32> to vector<16x32xf32>
    %60 = arith.mulf %58, %59 : vector<16x32xf32>
    %61 = tpu.concatenate %60, %52 in 1 : vector<16x32xf32>, vector<16x32xf32> -> vector<16x64xf32>
    %62 = arith.truncf %61 : vector<16x64xf32> to vector<16x64xbf16>
    %cst_28 = arith.constant dense<0.000000e+00> : vector<16x32xf32>
    %63 = tpu.matmul %62, %53, %cst_28 {dimension_numbers = #tpu.dot_dimension_numbers<[1], [0], [0], [1], [0, 0, 1, 1], [], []>} : vector<16x64xbf16>, vector<64x32xbf16>, vector<16x32xf32> -> vector<16x32xf32>
    %64 = vector.broadcast %54 : vector<1x32xf32> to vector<16x32xf32>
    %65 = arith.addf %63, %64 : vector<16x32xf32>
    %cst_29 = arith.constant 0.000000e+00 : f32
    %66 = vector.broadcast %cst_29 : f32 to vector<16x32xf32>
    %67 = arith.maximumf %65, %66 : vector<16x32xf32>
    %68 = vector.broadcast %55 : vector<1x32xf32> to vector<16x32xf32>
    %69 = arith.mulf %67, %68 : vector<16x32xf32>
    %70 = vector.broadcast %56 : vector<1x32xf32> to vector<16x32xf32>
    %71 = arith.addf %69, %70 : vector<16x32xf32>
    %72 = tpu.concatenate %33, %52, %71 in 1 : vector<16x32xf32>, vector<16x32xf32>, vector<16x32xf32> -> vector<16x96xf32>
    %cst_30 = arith.constant 0.000000e+00 : f32
    %73 = vector.broadcast %cst_30 : f32 to vector<16x96xf32>
    %74 = arith.maximumf %72, %73 : vector<16x96xf32>
    %75 = arith.truncf %74 : vector<16x96xf32> to vector<16x96xbf16>
    %c0_31 = arith.constant 0 : index
    %c0_32 = arith.constant 0 : index
    %76 = vector.load %arg9[%c0_31, %c0_32] : memref<96x8xbf16, #tpu.memory_space<vmem>>, vector<96x8xbf16>
    %cst_33 = arith.constant dense<0.000000e+00> : vector<16x8xf32>
    %77 = tpu.matmul %75, %76, %cst_33 {dimension_numbers = #tpu.dot_dimension_numbers<[1], [0], [0], [1], [0, 0, 1, 1], [], []>} : vector<16x96xbf16>, vector<96x8xbf16>, vector<16x8xf32> -> vector<16x8xf32>
    %c0_34 = arith.constant 0 : index
    %c0_35 = arith.constant 0 : index
    %78 = vector.load %arg10[%c0_34, %c0_35] : memref<1x8xf32, #tpu.memory_space<vmem>>, vector<1x8xf32>
    %79 = vector.broadcast %78 : vector<1x8xf32> to vector<16x8xf32>
    %80 = arith.addf %77, %79 : vector<16x8xf32>
    %cst_36 = arith.constant dense<0xFF800000> : vector<16xf32>
    %81 = vector.multi_reduction <maximumf>, %80, %cst_36 [1] : vector<16x8xf32> to vector<16xf32>
    %82 = vector.shape_cast %81 : vector<16xf32> to vector<16x1xf32>
    %83 = vector.broadcast %82 : vector<16x1xf32> to vector<16x8xf32>
    %84 = arith.subf %80, %83 : vector<16x8xf32>
    %85 = math.exp %84 : vector<16x8xf32>
    %cst_37 = arith.constant dense<0.000000e+00> : vector<16xf32>
    %86 = vector.multi_reduction <add>, %85, %cst_37 [1] : vector<16x8xf32> to vector<16xf32>
    %87 = vector.shape_cast %86 : vector<16xf32> to vector<16x1xf32>
    %88 = vector.broadcast %87 : vector<16x1xf32> to vector<16x8xf32>
    %89 = arith.divf %85, %88 : vector<16x8xf32>
    %cst_38 = arith.constant dense<0.000000e+00> : vector<8x96xf32>
    %90 = tpu.matmul %89, %74, %cst_38 {dimension_numbers = #tpu.dot_dimension_numbers<[0], [0], [1], [1], [0, 1, 1, 1], [], []>} : vector<16x8xf32>, vector<16x96xf32>, vector<8x96xf32> -> vector<8x96xf32>
    %cst_39 = arith.constant dense<0.000000e+00> : vector<8x16xf32>
    %91 = tpu.matmul %89, %7, %cst_39 {dimension_numbers = #tpu.dot_dimension_numbers<[0], [0], [1], [1], [0, 1, 1, 1], [], []>} : vector<16x8xf32>, vector<16x16xf32>, vector<8x16xf32> -> vector<8x16xf32>
    %cst_40 = arith.constant dense<0.000000e+00> : vector<8x8xf32>
    %92 = tpu.matmul %91, %89, %cst_40 {dimension_numbers = #tpu.dot_dimension_numbers<[1], [0], [0], [1], [0, 0, 1, 1], [], []>} : vector<8x16xf32>, vector<16x8xf32>, vector<8x8xf32> -> vector<8x8xf32>
    %93 = tpu.iota {dimensions = array<i32: 0>} : vector<8x8xi32>
    %94 = tpu.iota {dimensions = array<i32: 1>} : vector<8x8xi32>
    %c0_i32 = arith.constant 0 : i32
    %95 = vector.broadcast %c0_i32 : i32 to vector<8x8xi32>
    %96 = arith.addi %93, %95 : vector<8x8xi32>
    %97 = arith.cmpi eq, %96, %94 : vector<8x8xi32>
    %98 = arith.extui %97 : vector<8x8xi1> to vector<8x8xi32>
    %99 = arith.sitofp %98 : vector<8x8xi32> to vector<8x8xf32>
    %100 = arith.mulf %92, %99 : vector<8x8xf32>
    %101 = vector.shape_cast %100 : vector<8x8xf32> to vector<1x8x8xf32>
    %cst_41 = arith.constant dense<0.000000e+00> : vector<1xf32>
    %102 = vector.multi_reduction <add>, %101, %cst_41 [1, 2] : vector<1x8x8xf32> to vector<1xf32>
    %103 = vector.shape_cast %102 : vector<1xf32> to vector<1x1x1xf32>
    %104 = vector.extract %103[0, 0, 0] : f32 from vector<1x1x1xf32>
    %cst_42 = arith.constant dense<0.000000e+00> : vector<16xf32>
    %105 = vector.multi_reduction <add>, %7, %cst_42 [1] : vector<16x16xf32> to vector<16xf32>
    %106 = vector.shape_cast %105 : vector<16xf32> to vector<16x1xf32>
    %107 = arith.mulf %89, %89 : vector<16x8xf32>
    %cst_43 = arith.constant dense<0.000000e+00> : vector<16xf32>
    %108 = vector.multi_reduction <add>, %107, %cst_43 [1] : vector<16x8xf32> to vector<16xf32>
    %109 = vector.shape_cast %108 : vector<16xf32> to vector<16x1xf32>
    %110 = arith.mulf %106, %109 : vector<16x1xf32>
    %111 = vector.shape_cast %110 : vector<16x1xf32> to vector<1x16x1xf32>
    %cst_44 = arith.constant dense<0.000000e+00> : vector<1xf32>
    %112 = vector.multi_reduction <add>, %111, %cst_44 [1, 2] : vector<1x16x1xf32> to vector<1xf32>
    %113 = vector.shape_cast %112 : vector<1xf32> to vector<1x1x1xf32>
    %114 = vector.extract %113[0, 0, 0] : f32 from vector<1x1x1xf32>
    %115 = arith.divf %104, %114 : f32
    %cst_45 = arith.constant 0.000000e+00 : f32
    %116 = arith.subf %cst_45, %115 : f32
    %cst_46 = arith.constant dense<0.000000e+00> : vector<8x8xf32>
    %117 = tpu.matmul %89, %89, %cst_46 {dimension_numbers = #tpu.dot_dimension_numbers<[0], [0], [1], [1], [0, 1, 1, 1], [], []>} : vector<16x8xf32>, vector<16x8xf32>, vector<8x8xf32> -> vector<8x8xf32>
    %118 = arith.mulf %117, %117 : vector<8x8xf32>
    %119 = vector.shape_cast %118 : vector<8x8xf32> to vector<1x8x8xf32>
    %cst_47 = arith.constant dense<0.000000e+00> : vector<1xf32>
    %120 = vector.multi_reduction <add>, %119, %cst_47 [1, 2] : vector<1x8x8xf32> to vector<1xf32>
    %121 = vector.shape_cast %120 : vector<1xf32> to vector<1x1x1xf32>
    %122 = vector.extract %121[0, 0, 0] : f32 from vector<1x1x1xf32>
    %123 = math.sqrt %122 : f32
    %124 = vector.broadcast %123 : f32 to vector<8x8xf32>
    %125 = arith.divf %117, %124 : vector<8x8xf32>
    %cst_48 = arith.constant 0.353553385 : f32
    %126 = vector.broadcast %cst_48 : f32 to vector<8x8xf32>
    %127 = arith.mulf %99, %126 : vector<8x8xf32>
    %128 = arith.subf %125, %127 : vector<8x8xf32>
    %129 = arith.mulf %128, %128 : vector<8x8xf32>
    %130 = vector.shape_cast %129 : vector<8x8xf32> to vector<1x8x8xf32>
    %cst_49 = arith.constant dense<0.000000e+00> : vector<1xf32>
    %131 = vector.multi_reduction <add>, %130, %cst_49 [1, 2] : vector<1x8x8xf32> to vector<1xf32>
    %132 = vector.shape_cast %131 : vector<1xf32> to vector<1x1x1xf32>
    %133 = vector.extract %132[0, 0, 0] : f32 from vector<1x1x1xf32>
    %134 = math.sqrt %133 : f32
    %cst_50 = arith.constant 1.000000e+00 : f32
    %135 = vector.broadcast %cst_50 : f32 to vector<8x8xf32>
    %136 = arith.subf %135, %99 : vector<8x8xf32>
    %137 = arith.mulf %92, %136 : vector<8x8xf32>
    %cst_51 = arith.constant dense<0.000000e+00> : vector<8xf32>
    %138 = vector.multi_reduction <add>, %137, %cst_51 [1] : vector<8x8xf32> to vector<8xf32>
    %139 = vector.shape_cast %138 : vector<8xf32> to vector<8x1xf32>
    %140 = math.sqrt %139 : vector<8x1xf32>
    %cst_52 = arith.constant 1.000000e-15 : f32
    %141 = vector.broadcast %cst_52 : f32 to vector<8x1xf32>
    %142 = arith.addf %140, %141 : vector<8x1xf32>
    %cst_53 = arith.constant 1.000000e+00 : f32
    %143 = vector.broadcast %cst_53 : f32 to vector<8x1xf32>
    %144 = arith.divf %143, %142 : vector<8x1xf32>
    %145 = vector.broadcast %144 : vector<8x1xf32> to vector<8x8xf32>
    %146 = arith.mulf %99, %145 : vector<8x8xf32>
    %cst_54 = arith.constant dense<0.000000e+00> : vector<8xf32>
    %147 = vector.multi_reduction <add>, %146, %cst_54 [0] : vector<8x8xf32> to vector<8xf32>
    %148 = vector.shape_cast %147 : vector<8xf32> to vector<1x8xf32>
    %149 = vector.broadcast %144 : vector<8x1xf32> to vector<8x8xf32>
    %150 = arith.mulf %137, %149 : vector<8x8xf32>
    %151 = vector.broadcast %148 : vector<1x8xf32> to vector<8x8xf32>
    %152 = arith.mulf %150, %151 : vector<8x8xf32>
    %cst_55 = arith.constant dense<0.000000e+00> : vector<8xf32>
    %153 = vector.multi_reduction <add>, %152, %cst_55 [1] : vector<8x8xf32> to vector<8xf32>
    %154 = vector.shape_cast %153 : vector<8xf32> to vector<8x1xf32>
    %cst_56 = arith.constant 1.000000e+00 : f32
    %155 = vector.broadcast %cst_56 : f32 to vector<8x1xf32>
    %156 = arith.maximumf %154, %155 : vector<8x1xf32>
    %cst_57 = arith.constant 1.000000e+00 : f32
    %157 = vector.broadcast %cst_57 : f32 to vector<8x1xf32>
    %158 = arith.divf %157, %156 : vector<8x1xf32>
    %159 = arith.truncf %152 : vector<8x8xf32> to vector<8x8xbf16>
    %c0_58 = arith.constant 0 : index
    %c0_59 = arith.constant 0 : index
    %160 = vector.load %arg5[%c0_58, %c0_59] : memref<320x32xbf16, #tpu.memory_space<vmem>>, vector<192x32xbf16>
    %c0_60 = arith.constant 0 : index
    %c0_61 = arith.constant 0 : index
    %161 = vector.load %arg6[%c0_60, %c0_61] : memref<9x32xf32, #tpu.memory_space<vmem>>, vector<1x32xf32>
    %c1_62 = arith.constant 1 : index
    %c0_63 = arith.constant 0 : index
    %162 = vector.load %arg6[%c1_62, %c0_63] : memref<9x32xf32, #tpu.memory_space<vmem>>, vector<1x32xf32>
    %c2_64 = arith.constant 2 : index
    %c0_65 = arith.constant 0 : index
    %163 = vector.load %arg6[%c2_64, %c0_65] : memref<9x32xf32, #tpu.memory_space<vmem>>, vector<1x32xf32>
    %164 = arith.truncf %90 : vector<8x96xf32> to vector<8x96xbf16>
    %cst_66 = arith.constant dense<0.000000e+00> : vector<8x96xf32>
    %165 = tpu.matmul %159, %164, %cst_66 {dimension_numbers = #tpu.dot_dimension_numbers<[1], [0], [0], [1], [0, 0, 1, 1], [], []>} : vector<8x8xbf16>, vector<8x96xbf16>, vector<8x96xf32> -> vector<8x96xf32>
    %166 = vector.broadcast %158 : vector<8x1xf32> to vector<8x96xf32>
    %167 = arith.mulf %165, %166 : vector<8x96xf32>
    %168 = tpu.concatenate %167, %90 in 1 : vector<8x96xf32>, vector<8x96xf32> -> vector<8x192xf32>
    %169 = arith.truncf %168 : vector<8x192xf32> to vector<8x192xbf16>
    %cst_67 = arith.constant dense<0.000000e+00> : vector<8x32xf32>
    %170 = tpu.matmul %169, %160, %cst_67 {dimension_numbers = #tpu.dot_dimension_numbers<[1], [0], [0], [1], [0, 0, 1, 1], [], []>} : vector<8x192xbf16>, vector<192x32xbf16>, vector<8x32xf32> -> vector<8x32xf32>
    %171 = vector.broadcast %161 : vector<1x32xf32> to vector<8x32xf32>
    %172 = arith.addf %170, %171 : vector<8x32xf32>
    %cst_68 = arith.constant 0.000000e+00 : f32
    %173 = vector.broadcast %cst_68 : f32 to vector<8x32xf32>
    %174 = arith.maximumf %172, %173 : vector<8x32xf32>
    %175 = vector.broadcast %162 : vector<1x32xf32> to vector<8x32xf32>
    %176 = arith.mulf %174, %175 : vector<8x32xf32>
    %177 = vector.broadcast %163 : vector<1x32xf32> to vector<8x32xf32>
    %178 = arith.addf %176, %177 : vector<8x32xf32>
    %c192 = arith.constant 192 : index
    %c0_69 = arith.constant 0 : index
    %179 = vector.load %arg5[%c192, %c0_69] : memref<320x32xbf16, #tpu.memory_space<vmem>>, vector<64x32xbf16>
    %c3_70 = arith.constant 3 : index
    %c0_71 = arith.constant 0 : index
    %180 = vector.load %arg6[%c3_70, %c0_71] : memref<9x32xf32, #tpu.memory_space<vmem>>, vector<1x32xf32>
    %c4_72 = arith.constant 4 : index
    %c0_73 = arith.constant 0 : index
    %181 = vector.load %arg6[%c4_72, %c0_73] : memref<9x32xf32, #tpu.memory_space<vmem>>, vector<1x32xf32>
    %c5_74 = arith.constant 5 : index
    %c0_75 = arith.constant 0 : index
    %182 = vector.load %arg6[%c5_74, %c0_75] : memref<9x32xf32, #tpu.memory_space<vmem>>, vector<1x32xf32>
    %183 = arith.truncf %178 : vector<8x32xf32> to vector<8x32xbf16>
    %cst_76 = arith.constant dense<0.000000e+00> : vector<8x32xf32>
    %184 = tpu.matmul %159, %183, %cst_76 {dimension_numbers = #tpu.dot_dimension_numbers<[1], [0], [0], [1], [0, 0, 1, 1], [], []>} : vector<8x8xbf16>, vector<8x32xbf16>, vector<8x32xf32> -> vector<8x32xf32>
    %185 = vector.broadcast %158 : vector<8x1xf32> to vector<8x32xf32>
    %186 = arith.mulf %184, %185 : vector<8x32xf32>
    %187 = tpu.concatenate %186, %178 in 1 : vector<8x32xf32>, vector<8x32xf32> -> vector<8x64xf32>
    %188 = arith.truncf %187 : vector<8x64xf32> to vector<8x64xbf16>
    %cst_77 = arith.constant dense<0.000000e+00> : vector<8x32xf32>
    %189 = tpu.matmul %188, %179, %cst_77 {dimension_numbers = #tpu.dot_dimension_numbers<[1], [0], [0], [1], [0, 0, 1, 1], [], []>} : vector<8x64xbf16>, vector<64x32xbf16>, vector<8x32xf32> -> vector<8x32xf32>
    %190 = vector.broadcast %180 : vector<1x32xf32> to vector<8x32xf32>
    %191 = arith.addf %189, %190 : vector<8x32xf32>
    %cst_78 = arith.constant 0.000000e+00 : f32
    %192 = vector.broadcast %cst_78 : f32 to vector<8x32xf32>
    %193 = arith.maximumf %191, %192 : vector<8x32xf32>
    %194 = vector.broadcast %181 : vector<1x32xf32> to vector<8x32xf32>
    %195 = arith.mulf %193, %194 : vector<8x32xf32>
    %196 = vector.broadcast %182 : vector<1x32xf32> to vector<8x32xf32>
    %197 = arith.addf %195, %196 : vector<8x32xf32>
    %c256 = arith.constant 256 : index
    %c0_79 = arith.constant 0 : index
    %198 = vector.load %arg5[%c256, %c0_79] : memref<320x32xbf16, #tpu.memory_space<vmem>>, vector<64x32xbf16>
    %c6_80 = arith.constant 6 : index
    %c0_81 = arith.constant 0 : index
    %199 = vector.load %arg6[%c6_80, %c0_81] : memref<9x32xf32, #tpu.memory_space<vmem>>, vector<1x32xf32>
    %c7_82 = arith.constant 7 : index
    %c0_83 = arith.constant 0 : index
    %200 = vector.load %arg6[%c7_82, %c0_83] : memref<9x32xf32, #tpu.memory_space<vmem>>, vector<1x32xf32>
    %c8_84 = arith.constant 8 : index
    %c0_85 = arith.constant 0 : index
    %201 = vector.load %arg6[%c8_84, %c0_85] : memref<9x32xf32, #tpu.memory_space<vmem>>, vector<1x32xf32>
    %202 = arith.truncf %197 : vector<8x32xf32> to vector<8x32xbf16>
    %cst_86 = arith.constant dense<0.000000e+00> : vector<8x32xf32>
    %203 = tpu.matmul %159, %202, %cst_86 {dimension_numbers = #tpu.dot_dimension_numbers<[1], [0], [0], [1], [0, 0, 1, 1], [], []>} : vector<8x8xbf16>, vector<8x32xbf16>, vector<8x32xf32> -> vector<8x32xf32>
    %204 = vector.broadcast %158 : vector<8x1xf32> to vector<8x32xf32>
    %205 = arith.mulf %203, %204 : vector<8x32xf32>
    %206 = tpu.concatenate %205, %197 in 1 : vector<8x32xf32>, vector<8x32xf32> -> vector<8x64xf32>
    %207 = arith.truncf %206 : vector<8x64xf32> to vector<8x64xbf16>
    %cst_87 = arith.constant dense<0.000000e+00> : vector<8x32xf32>
    %208 = tpu.matmul %207, %198, %cst_87 {dimension_numbers = #tpu.dot_dimension_numbers<[1], [0], [0], [1], [0, 0, 1, 1], [], []>} : vector<8x64xbf16>, vector<64x32xbf16>, vector<8x32xf32> -> vector<8x32xf32>
    %209 = vector.broadcast %199 : vector<1x32xf32> to vector<8x32xf32>
    %210 = arith.addf %208, %209 : vector<8x32xf32>
    %cst_88 = arith.constant 0.000000e+00 : f32
    %211 = vector.broadcast %cst_88 : f32 to vector<8x32xf32>
    %212 = arith.maximumf %210, %211 : vector<8x32xf32>
    %213 = vector.broadcast %200 : vector<1x32xf32> to vector<8x32xf32>
    %214 = arith.mulf %212, %213 : vector<8x32xf32>
    %215 = vector.broadcast %201 : vector<1x32xf32> to vector<8x32xf32>
    %216 = arith.addf %214, %215 : vector<8x32xf32>
    %217 = tpu.concatenate %178, %197, %216 in 1 : vector<8x32xf32>, vector<8x32xf32>, vector<8x32xf32> -> vector<8x96xf32>
    %cst_89 = arith.constant 0.000000e+00 : f32
    %218 = vector.broadcast %cst_89 : f32 to vector<8x96xf32>
    %219 = arith.maximumf %217, %218 : vector<8x96xf32>
    %220 = arith.truncf %219 : vector<8x96xf32> to vector<8x96xbf16>
    %c0_90 = arith.constant 0 : index
    %c0_91 = arith.constant 0 : index
    %221 = vector.load %arg11[%c0_90, %c0_91] : memref<96x4xbf16, #tpu.memory_space<vmem>>, vector<96x4xbf16>
    %cst_92 = arith.constant dense<0.000000e+00> : vector<8x4xf32>
    %222 = tpu.matmul %220, %221, %cst_92 {dimension_numbers = #tpu.dot_dimension_numbers<[1], [0], [0], [1], [0, 0, 1, 1], [], []>} : vector<8x96xbf16>, vector<96x4xbf16>, vector<8x4xf32> -> vector<8x4xf32>
    %c0_93 = arith.constant 0 : index
    %c0_94 = arith.constant 0 : index
    %223 = vector.load %arg12[%c0_93, %c0_94] : memref<1x4xf32, #tpu.memory_space<vmem>>, vector<1x4xf32>
    %224 = vector.broadcast %223 : vector<1x4xf32> to vector<8x4xf32>
    %225 = arith.addf %222, %224 : vector<8x4xf32>
    %cst_95 = arith.constant dense<0xFF800000> : vector<8xf32>
    %226 = vector.multi_reduction <maximumf>, %225, %cst_95 [1] : vector<8x4xf32> to vector<8xf32>
    %227 = vector.shape_cast %226 : vector<8xf32> to vector<8x1xf32>
    %228 = vector.broadcast %227 : vector<8x1xf32> to vector<8x4xf32>
    %229 = arith.subf %225, %228 : vector<8x4xf32>
    %230 = math.exp %229 : vector<8x4xf32>
    %cst_96 = arith.constant dense<0.000000e+00> : vector<8xf32>
    %231 = vector.multi_reduction <add>, %230, %cst_96 [1] : vector<8x4xf32> to vector<8xf32>
    %232 = vector.shape_cast %231 : vector<8xf32> to vector<8x1xf32>
    %233 = vector.broadcast %232 : vector<8x1xf32> to vector<8x4xf32>
    %234 = arith.divf %230, %233 : vector<8x4xf32>
    %cst_97 = arith.constant dense<0.000000e+00> : vector<4x96xf32>
    %235 = tpu.matmul %234, %219, %cst_97 {dimension_numbers = #tpu.dot_dimension_numbers<[0], [0], [1], [1], [0, 1, 1, 1], [], []>} : vector<8x4xf32>, vector<8x96xf32>, vector<4x96xf32> -> vector<4x96xf32>
    %cst_98 = arith.constant dense<0.000000e+00> : vector<4x8xf32>
    %236 = tpu.matmul %234, %152, %cst_98 {dimension_numbers = #tpu.dot_dimension_numbers<[0], [0], [1], [1], [0, 1, 1, 1], [], []>} : vector<8x4xf32>, vector<8x8xf32>, vector<4x8xf32> -> vector<4x8xf32>
    %cst_99 = arith.constant dense<0.000000e+00> : vector<4x4xf32>
    %237 = tpu.matmul %236, %234, %cst_99 {dimension_numbers = #tpu.dot_dimension_numbers<[1], [0], [0], [1], [0, 0, 1, 1], [], []>} : vector<4x8xf32>, vector<8x4xf32>, vector<4x4xf32> -> vector<4x4xf32>
    %238 = tpu.iota {dimensions = array<i32: 0>} : vector<4x4xi32>
    %239 = tpu.iota {dimensions = array<i32: 1>} : vector<4x4xi32>
    %c0_i32_100 = arith.constant 0 : i32
    %240 = vector.broadcast %c0_i32_100 : i32 to vector<4x4xi32>
    %241 = arith.addi %238, %240 : vector<4x4xi32>
    %242 = arith.cmpi eq, %241, %239 : vector<4x4xi32>
    %243 = arith.extui %242 : vector<4x4xi1> to vector<4x4xi32>
    %244 = arith.sitofp %243 : vector<4x4xi32> to vector<4x4xf32>
    %245 = arith.mulf %237, %244 : vector<4x4xf32>
    %246 = vector.shape_cast %245 : vector<4x4xf32> to vector<1x4x4xf32>
    %cst_101 = arith.constant dense<0.000000e+00> : vector<1xf32>
    %247 = vector.multi_reduction <add>, %246, %cst_101 [1, 2] : vector<1x4x4xf32> to vector<1xf32>
    %248 = vector.shape_cast %247 : vector<1xf32> to vector<1x1x1xf32>
    %249 = vector.extract %248[0, 0, 0] : f32 from vector<1x1x1xf32>
    %cst_102 = arith.constant dense<0.000000e+00> : vector<8xf32>
    %250 = vector.multi_reduction <add>, %152, %cst_102 [1] : vector<8x8xf32> to vector<8xf32>
    %251 = vector.shape_cast %250 : vector<8xf32> to vector<8x1xf32>
    %252 = arith.mulf %234, %234 : vector<8x4xf32>
    %cst_103 = arith.constant dense<0.000000e+00> : vector<8xf32>
    %253 = vector.multi_reduction <add>, %252, %cst_103 [1] : vector<8x4xf32> to vector<8xf32>
    %254 = vector.shape_cast %253 : vector<8xf32> to vector<8x1xf32>
    %255 = arith.mulf %251, %254 : vector<8x1xf32>
    %256 = vector.shape_cast %255 : vector<8x1xf32> to vector<1x8x1xf32>
    %cst_104 = arith.constant dense<0.000000e+00> : vector<1xf32>
    %257 = vector.multi_reduction <add>, %256, %cst_104 [1, 2] : vector<1x8x1xf32> to vector<1xf32>
    %258 = vector.shape_cast %257 : vector<1xf32> to vector<1x1x1xf32>
    %259 = vector.extract %258[0, 0, 0] : f32 from vector<1x1x1xf32>
    %260 = arith.divf %249, %259 : f32
    %cst_105 = arith.constant 0.000000e+00 : f32
    %261 = arith.subf %cst_105, %260 : f32
    %cst_106 = arith.constant dense<0.000000e+00> : vector<4x4xf32>
    %262 = tpu.matmul %234, %234, %cst_106 {dimension_numbers = #tpu.dot_dimension_numbers<[0], [0], [1], [1], [0, 1, 1, 1], [], []>} : vector<8x4xf32>, vector<8x4xf32>, vector<4x4xf32> -> vector<4x4xf32>
    %263 = arith.mulf %262, %262 : vector<4x4xf32>
    %264 = vector.shape_cast %263 : vector<4x4xf32> to vector<1x4x4xf32>
    %cst_107 = arith.constant dense<0.000000e+00> : vector<1xf32>
    %265 = vector.multi_reduction <add>, %264, %cst_107 [1, 2] : vector<1x4x4xf32> to vector<1xf32>
    %266 = vector.shape_cast %265 : vector<1xf32> to vector<1x1x1xf32>
    %267 = vector.extract %266[0, 0, 0] : f32 from vector<1x1x1xf32>
    %268 = math.sqrt %267 : f32
    %269 = vector.broadcast %268 : f32 to vector<4x4xf32>
    %270 = arith.divf %262, %269 : vector<4x4xf32>
    %cst_108 = arith.constant 5.000000e-01 : f32
    %271 = vector.broadcast %cst_108 : f32 to vector<4x4xf32>
    %272 = arith.mulf %244, %271 : vector<4x4xf32>
    %273 = arith.subf %270, %272 : vector<4x4xf32>
    %274 = arith.mulf %273, %273 : vector<4x4xf32>
    %275 = vector.shape_cast %274 : vector<4x4xf32> to vector<1x4x4xf32>
    %cst_109 = arith.constant dense<0.000000e+00> : vector<1xf32>
    %276 = vector.multi_reduction <add>, %275, %cst_109 [1, 2] : vector<1x4x4xf32> to vector<1xf32>
    %277 = vector.shape_cast %276 : vector<1xf32> to vector<1x1x1xf32>
    %278 = vector.extract %277[0, 0, 0] : f32 from vector<1x1x1xf32>
    %279 = math.sqrt %278 : f32
    %cst_110 = arith.constant 1.000000e+00 : f32
    %280 = vector.broadcast %cst_110 : f32 to vector<4x4xf32>
    %281 = arith.subf %280, %244 : vector<4x4xf32>
    %282 = arith.mulf %237, %281 : vector<4x4xf32>
    %cst_111 = arith.constant dense<0.000000e+00> : vector<4xf32>
    %283 = vector.multi_reduction <add>, %282, %cst_111 [1] : vector<4x4xf32> to vector<4xf32>
    %284 = vector.shape_cast %283 : vector<4xf32> to vector<4x1xf32>
    %285 = math.sqrt %284 : vector<4x1xf32>
    %cst_112 = arith.constant 1.000000e-15 : f32
    %286 = vector.broadcast %cst_112 : f32 to vector<4x1xf32>
    %287 = arith.addf %285, %286 : vector<4x1xf32>
    %cst_113 = arith.constant 1.000000e+00 : f32
    %288 = vector.broadcast %cst_113 : f32 to vector<4x1xf32>
    %289 = arith.divf %288, %287 : vector<4x1xf32>
    %290 = vector.broadcast %289 : vector<4x1xf32> to vector<4x4xf32>
    %291 = arith.mulf %244, %290 : vector<4x4xf32>
    %cst_114 = arith.constant dense<0.000000e+00> : vector<4xf32>
    %292 = vector.multi_reduction <add>, %291, %cst_114 [0] : vector<4x4xf32> to vector<4xf32>
    %293 = vector.shape_cast %292 : vector<4xf32> to vector<1x4xf32>
    %294 = vector.broadcast %289 : vector<4x1xf32> to vector<4x4xf32>
    %295 = arith.mulf %282, %294 : vector<4x4xf32>
    %296 = vector.broadcast %293 : vector<1x4xf32> to vector<4x4xf32>
    %297 = arith.mulf %295, %296 : vector<4x4xf32>
    %cst_115 = arith.constant dense<0.000000e+00> : vector<4xf32>
    %298 = vector.multi_reduction <add>, %297, %cst_115 [1] : vector<4x4xf32> to vector<4xf32>
    %299 = vector.shape_cast %298 : vector<4xf32> to vector<4x1xf32>
    %cst_116 = arith.constant 1.000000e+00 : f32
    %300 = vector.broadcast %cst_116 : f32 to vector<4x1xf32>
    %301 = arith.maximumf %299, %300 : vector<4x1xf32>
    %cst_117 = arith.constant 1.000000e+00 : f32
    %302 = vector.broadcast %cst_117 : f32 to vector<4x1xf32>
    %303 = arith.divf %302, %301 : vector<4x1xf32>
    %304 = arith.truncf %297 : vector<4x4xf32> to vector<4x4xbf16>
    %c0_118 = arith.constant 0 : index
    %c0_119 = arith.constant 0 : index
    %305 = vector.load %arg7[%c0_118, %c0_119] : memref<320x32xbf16, #tpu.memory_space<vmem>>, vector<192x32xbf16>
    %c0_120 = arith.constant 0 : index
    %c0_121 = arith.constant 0 : index
    %306 = vector.load %arg8[%c0_120, %c0_121] : memref<9x32xf32, #tpu.memory_space<vmem>>, vector<1x32xf32>
    %c1_122 = arith.constant 1 : index
    %c0_123 = arith.constant 0 : index
    %307 = vector.load %arg8[%c1_122, %c0_123] : memref<9x32xf32, #tpu.memory_space<vmem>>, vector<1x32xf32>
    %c2_124 = arith.constant 2 : index
    %c0_125 = arith.constant 0 : index
    %308 = vector.load %arg8[%c2_124, %c0_125] : memref<9x32xf32, #tpu.memory_space<vmem>>, vector<1x32xf32>
    %309 = arith.truncf %235 : vector<4x96xf32> to vector<4x96xbf16>
    %cst_126 = arith.constant dense<0.000000e+00> : vector<4x96xf32>
    %310 = tpu.matmul %304, %309, %cst_126 {dimension_numbers = #tpu.dot_dimension_numbers<[1], [0], [0], [1], [0, 0, 1, 1], [], []>} : vector<4x4xbf16>, vector<4x96xbf16>, vector<4x96xf32> -> vector<4x96xf32>
    %311 = vector.broadcast %303 : vector<4x1xf32> to vector<4x96xf32>
    %312 = arith.mulf %310, %311 : vector<4x96xf32>
    %313 = tpu.concatenate %312, %235 in 1 : vector<4x96xf32>, vector<4x96xf32> -> vector<4x192xf32>
    %314 = arith.truncf %313 : vector<4x192xf32> to vector<4x192xbf16>
    %cst_127 = arith.constant dense<0.000000e+00> : vector<4x32xf32>
    %315 = tpu.matmul %314, %305, %cst_127 {dimension_numbers = #tpu.dot_dimension_numbers<[1], [0], [0], [1], [0, 0, 1, 1], [], []>} : vector<4x192xbf16>, vector<192x32xbf16>, vector<4x32xf32> -> vector<4x32xf32>
    %316 = vector.broadcast %306 : vector<1x32xf32> to vector<4x32xf32>
    %317 = arith.addf %315, %316 : vector<4x32xf32>
    %cst_128 = arith.constant 0.000000e+00 : f32
    %318 = vector.broadcast %cst_128 : f32 to vector<4x32xf32>
    %319 = arith.maximumf %317, %318 : vector<4x32xf32>
    %320 = vector.broadcast %307 : vector<1x32xf32> to vector<4x32xf32>
    %321 = arith.mulf %319, %320 : vector<4x32xf32>
    %322 = vector.broadcast %308 : vector<1x32xf32> to vector<4x32xf32>
    %323 = arith.addf %321, %322 : vector<4x32xf32>
    %c192_129 = arith.constant 192 : index
    %c0_130 = arith.constant 0 : index
    %324 = vector.load %arg7[%c192_129, %c0_130] : memref<320x32xbf16, #tpu.memory_space<vmem>>, vector<64x32xbf16>
    %c3_131 = arith.constant 3 : index
    %c0_132 = arith.constant 0 : index
    %325 = vector.load %arg8[%c3_131, %c0_132] : memref<9x32xf32, #tpu.memory_space<vmem>>, vector<1x32xf32>
    %c4_133 = arith.constant 4 : index
    %c0_134 = arith.constant 0 : index
    %326 = vector.load %arg8[%c4_133, %c0_134] : memref<9x32xf32, #tpu.memory_space<vmem>>, vector<1x32xf32>
    %c5_135 = arith.constant 5 : index
    %c0_136 = arith.constant 0 : index
    %327 = vector.load %arg8[%c5_135, %c0_136] : memref<9x32xf32, #tpu.memory_space<vmem>>, vector<1x32xf32>
    %328 = arith.truncf %323 : vector<4x32xf32> to vector<4x32xbf16>
    %cst_137 = arith.constant dense<0.000000e+00> : vector<4x32xf32>
    %329 = tpu.matmul %304, %328, %cst_137 {dimension_numbers = #tpu.dot_dimension_numbers<[1], [0], [0], [1], [0, 0, 1, 1], [], []>} : vector<4x4xbf16>, vector<4x32xbf16>, vector<4x32xf32> -> vector<4x32xf32>
    %330 = vector.broadcast %303 : vector<4x1xf32> to vector<4x32xf32>
    %331 = arith.mulf %329, %330 : vector<4x32xf32>
    %332 = tpu.concatenate %331, %323 in 1 : vector<4x32xf32>, vector<4x32xf32> -> vector<4x64xf32>
    %333 = arith.truncf %332 : vector<4x64xf32> to vector<4x64xbf16>
    %cst_138 = arith.constant dense<0.000000e+00> : vector<4x32xf32>
    %334 = tpu.matmul %333, %324, %cst_138 {dimension_numbers = #tpu.dot_dimension_numbers<[1], [0], [0], [1], [0, 0, 1, 1], [], []>} : vector<4x64xbf16>, vector<64x32xbf16>, vector<4x32xf32> -> vector<4x32xf32>
    %335 = vector.broadcast %325 : vector<1x32xf32> to vector<4x32xf32>
    %336 = arith.addf %334, %335 : vector<4x32xf32>
    %cst_139 = arith.constant 0.000000e+00 : f32
    %337 = vector.broadcast %cst_139 : f32 to vector<4x32xf32>
    %338 = arith.maximumf %336, %337 : vector<4x32xf32>
    %339 = vector.broadcast %326 : vector<1x32xf32> to vector<4x32xf32>
    %340 = arith.mulf %338, %339 : vector<4x32xf32>
    %341 = vector.broadcast %327 : vector<1x32xf32> to vector<4x32xf32>
    %342 = arith.addf %340, %341 : vector<4x32xf32>
    %c256_140 = arith.constant 256 : index
    %c0_141 = arith.constant 0 : index
    %343 = vector.load %arg7[%c256_140, %c0_141] : memref<320x32xbf16, #tpu.memory_space<vmem>>, vector<64x32xbf16>
    %c6_142 = arith.constant 6 : index
    %c0_143 = arith.constant 0 : index
    %344 = vector.load %arg8[%c6_142, %c0_143] : memref<9x32xf32, #tpu.memory_space<vmem>>, vector<1x32xf32>
    %c7_144 = arith.constant 7 : index
    %c0_145 = arith.constant 0 : index
    %345 = vector.load %arg8[%c7_144, %c0_145] : memref<9x32xf32, #tpu.memory_space<vmem>>, vector<1x32xf32>
    %c8_146 = arith.constant 8 : index
    %c0_147 = arith.constant 0 : index
    %346 = vector.load %arg8[%c8_146, %c0_147] : memref<9x32xf32, #tpu.memory_space<vmem>>, vector<1x32xf32>
    %347 = arith.truncf %342 : vector<4x32xf32> to vector<4x32xbf16>
    %cst_148 = arith.constant dense<0.000000e+00> : vector<4x32xf32>
    %348 = tpu.matmul %304, %347, %cst_148 {dimension_numbers = #tpu.dot_dimension_numbers<[1], [0], [0], [1], [0, 0, 1, 1], [], []>} : vector<4x4xbf16>, vector<4x32xbf16>, vector<4x32xf32> -> vector<4x32xf32>
    %349 = vector.broadcast %303 : vector<4x1xf32> to vector<4x32xf32>
    %350 = arith.mulf %348, %349 : vector<4x32xf32>
    %351 = tpu.concatenate %350, %342 in 1 : vector<4x32xf32>, vector<4x32xf32> -> vector<4x64xf32>
    %352 = arith.truncf %351 : vector<4x64xf32> to vector<4x64xbf16>
    %cst_149 = arith.constant dense<0.000000e+00> : vector<4x32xf32>
    %353 = tpu.matmul %352, %343, %cst_149 {dimension_numbers = #tpu.dot_dimension_numbers<[1], [0], [0], [1], [0, 0, 1, 1], [], []>} : vector<4x64xbf16>, vector<64x32xbf16>, vector<4x32xf32> -> vector<4x32xf32>
    %354 = vector.broadcast %344 : vector<1x32xf32> to vector<4x32xf32>
    %355 = arith.addf %353, %354 : vector<4x32xf32>
    %cst_150 = arith.constant 0.000000e+00 : f32
    %356 = vector.broadcast %cst_150 : f32 to vector<4x32xf32>
    %357 = arith.maximumf %355, %356 : vector<4x32xf32>
    %358 = vector.broadcast %345 : vector<1x32xf32> to vector<4x32xf32>
    %359 = arith.mulf %357, %358 : vector<4x32xf32>
    %360 = vector.broadcast %346 : vector<1x32xf32> to vector<4x32xf32>
    %361 = arith.addf %359, %360 : vector<4x32xf32>
    %362 = tpu.concatenate %323, %342, %361 in 1 : vector<4x32xf32>, vector<4x32xf32>, vector<4x32xf32> -> vector<4x96xf32>
    %cst_151 = arith.constant dense<0.000000e+00> : vector<96xf32>
    %363 = vector.multi_reduction <add>, %362, %cst_151 [0] : vector<4x96xf32> to vector<96xf32>
    %364 = vector.shape_cast %363 : vector<96xf32> to vector<1x96xf32>
    %cst_152 = arith.constant 4.000000e+00 : f32
    %365 = vector.broadcast %cst_152 : f32 to vector<1x96xf32>
    %366 = arith.divf %364, %365 : vector<1x96xf32>
    %367 = arith.truncf %366 : vector<1x96xf32> to vector<1x96xbf16>
    %c0_153 = arith.constant 0 : index
    %c0_154 = arith.constant 0 : index
    %368 = vector.load %arg13[%c0_153, %c0_154] : memref<96x32xbf16, #tpu.memory_space<vmem>>, vector<96x32xbf16>
    %cst_155 = arith.constant dense<0.000000e+00> : vector<1x32xf32>
    %369 = tpu.matmul %367, %368, %cst_155 {dimension_numbers = #tpu.dot_dimension_numbers<[1], [0], [0], [1], [0, 0, 1, 1], [], []>} : vector<1x96xbf16>, vector<96x32xbf16>, vector<1x32xf32> -> vector<1x32xf32>
    %c0_156 = arith.constant 0 : index
    %c0_157 = arith.constant 0 : index
    %370 = vector.load %arg14[%c0_156, %c0_157] : memref<1x32xf32, #tpu.memory_space<vmem>>, vector<1x32xf32>
    %371 = arith.addf %369, %370 : vector<1x32xf32>
    %cst_158 = arith.constant 0.000000e+00 : f32
    %372 = vector.broadcast %cst_158 : f32 to vector<1x32xf32>
    %373 = arith.maximumf %371, %372 : vector<1x32xf32>
    %374 = arith.truncf %373 : vector<1x32xf32> to vector<1x32xbf16>
    %c0_159 = arith.constant 0 : index
    %c0_160 = arith.constant 0 : index
    %375 = vector.load %arg15[%c0_159, %c0_160] : memref<32x128xbf16, #tpu.memory_space<vmem>>, vector<32x128xbf16>
    %cst_161 = arith.constant dense<0.000000e+00> : vector<1x128xf32>
    %376 = tpu.matmul %374, %375, %cst_161 {dimension_numbers = #tpu.dot_dimension_numbers<[1], [0], [0], [1], [0, 0, 1, 1], [], []>} : vector<1x32xbf16>, vector<32x128xbf16>, vector<1x128xf32> -> vector<1x128xf32>
    %c0_162 = arith.constant 0 : index
    %c0_163 = arith.constant 0 : index
    %377 = vector.load %arg16[%c0_162, %c0_163] : memref<1x128xf32, #tpu.memory_space<vmem>>, vector<1x128xf32>
    %378 = arith.addf %376, %377 : vector<1x128xf32>
    %cst_164 = arith.constant 0xFF800000 : f32
    %379 = vector.broadcast %cst_164 : f32 to vector<1x128xf32>
    %380 = arith.select %2, %378, %379 : vector<1x128xi1>, vector<1x128xf32>
    %cst_165 = arith.constant dense<0xFF800000> : vector<1xf32>
    %381 = vector.multi_reduction <maximumf>, %380, %cst_165 [1] : vector<1x128xf32> to vector<1xf32>
    %382 = vector.shape_cast %381 : vector<1xf32> to vector<1x1xf32>
    %383 = vector.broadcast %382 : vector<1x1xf32> to vector<1x128xf32>
    %384 = arith.subf %378, %383 : vector<1x128xf32>
    %385 = math.exp %384 : vector<1x128xf32>
    %cst_166 = arith.constant 0.000000e+00 : f32
    %386 = vector.broadcast %cst_166 : f32 to vector<1x128xf32>
    %387 = arith.select %2, %385, %386 : vector<1x128xi1>, vector<1x128xf32>
    %cst_167 = arith.constant dense<0.000000e+00> : vector<1xf32>
    %388 = vector.multi_reduction <add>, %387, %cst_167 [1] : vector<1x128xf32> to vector<1xf32>
    %389 = vector.shape_cast %388 : vector<1xf32> to vector<1x1xf32>
    %390 = math.log %389 : vector<1x1xf32>
    %391 = arith.addf %390, %382 : vector<1x1xf32>
    %392 = vector.broadcast %391 : vector<1x1xf32> to vector<1x128xf32>
    %393 = arith.subf %378, %392 : vector<1x128xf32>
    %cst_168 = arith.constant 0.000000e+00 : f32
    %394 = vector.broadcast %cst_168 : f32 to vector<1x128xf32>
    %395 = arith.select %2, %393, %394 : vector<1x128xi1>, vector<1x128xf32>
    %c4_i32_169 = arith.constant 4 : i32
    %396 = vector.broadcast %c4_i32_169 : i32 to vector<1x128xi32>
    %397 = arith.cmpi eq, %0, %396 : vector<1x128xi32>
    %398 = arith.addf %116, %261 : f32
    %399 = vector.broadcast %398 : f32 to vector<1x128xf32>
    %400 = arith.select %397, %399, %395 : vector<1x128xi1>, vector<1x128xf32>
    %c5_i32 = arith.constant 5 : i32
    %401 = vector.broadcast %c5_i32 : i32 to vector<1x128xi32>
    %402 = arith.cmpi eq, %0, %401 : vector<1x128xi32>
    %403 = arith.addf %134, %279 : f32
    %404 = vector.broadcast %403 : f32 to vector<1x128xf32>
    %405 = arith.select %402, %404, %400 : vector<1x128xi1>, vector<1x128xf32>
    %c0_170 = arith.constant 0 : index
    %c0_171 = arith.constant 0 : index
    %c0_172 = arith.constant 0 : index
    %406 = vector.load %arg17[%c0_170, %c0_171, %c0_172] : memref<1x1x128xf32, #tpu.memory_space<vmem>>, vector<1x1x128xf32>
    %407 = vector.shape_cast %406 : vector<1x1x128xf32> to vector<1x128xf32>
    %408 = vector.shape_cast %405 : vector<1x128xf32> to vector<1x1x128xf32>
    tpu.vector_store %arg17[%c0_170, %c0_171, %c0_172], %408 {strides = array<i32>} : memref<1x1x128xf32, #tpu.memory_space<vmem>>, vector<1x1x128xf32>,
    return
  }
  func.func @transform_0(%arg0: i32) -> (i32, i32, i32) {
    %c0_i32 = arith.constant 0 : i32
    %c0_i32_0 = arith.constant 0 : i32
    %c0_i32_1 = arith.constant 0 : i32
    return %arg0, %c0_i32, %c0_i32_0 : i32, i32, i32
  }
  func.func @transform_1(%arg0: i32) -> (i32, i32, i32) {
    %c0_i32 = arith.constant 0 : i32
    %c0_i32_0 = arith.constant 0 : i32
    %c0_i32_1 = arith.constant 0 : i32
    return %arg0, %c0_i32, %c0_i32_0 : i32, i32, i32
  }
  func.func @transform_2(%arg0: i32) -> (i32, i32) {
    %c0_i32 = arith.constant 0 : i32
    %c0_i32_0 = arith.constant 0 : i32
    %c0_i32_1 = arith.constant 0 : i32
    return %c0_i32, %c0_i32_0 : i32, i32
  }
  func.func @transform_3(%arg0: i32) -> (i32, i32) {
    %c0_i32 = arith.constant 0 : i32
    %c0_i32_0 = arith.constant 0 : i32
    %c0_i32_1 = arith.constant 0 : i32
    return %c0_i32, %c0_i32_0 : i32, i32
  }
  func.func @transform_4(%arg0: i32) -> (i32, i32) {
    %c0_i32 = arith.constant 0 : i32
    %c0_i32_0 = arith.constant 0 : i32
    %c0_i32_1 = arith.constant 0 : i32
    return %c0_i32, %c0_i32_0 : i32, i32
  }
  func.func @transform_5(%arg0: i32) -> (i32, i32) {
    %c0_i32 = arith.constant 0 : i32
    %c0_i32_0 = arith.constant 0 : i32
    %c0_i32_1 = arith.constant 0 : i32
    return %c0_i32, %c0_i32_0 : i32, i32
  }
  func.func @transform_6(%arg0: i32) -> (i32, i32) {
    %c0_i32 = arith.constant 0 : i32
    %c0_i32_0 = arith.constant 0 : i32
    %c0_i32_1 = arith.constant 0 : i32
    return %c0_i32, %c0_i32_0 : i32, i32
  }
  func.func @transform_7(%arg0: i32) -> (i32, i32) {
    %c0_i32 = arith.constant 0 : i32
    %c0_i32_0 = arith.constant 0 : i32
    %c0_i32_1 = arith.constant 0 : i32
    return %c0_i32, %c0_i32_0 : i32, i32
  }
  func.func @transform_8(%arg0: i32) -> (i32, i32) {
    %c0_i32 = arith.constant 0 : i32
    %c0_i32_0 = arith.constant 0 : i32
    %c0_i32_1 = arith.constant 0 : i32
    return %c0_i32, %c0_i32_0 : i32, i32
  }
  func.func @transform_9(%arg0: i32) -> (i32, i32) {
    %c0_i32 = arith.constant 0 : i32
    %c0_i32_0 = arith.constant 0 : i32
    %c0_i32_1 = arith.constant 0 : i32
    return %c0_i32, %c0_i32_0 : i32, i32
  }
  func.func @transform_10(%arg0: i32) -> (i32, i32) {
    %c0_i32 = arith.constant 0 : i32
    %c0_i32_0 = arith.constant 0 : i32
    %c0_i32_1 = arith.constant 0 : i32
    return %c0_i32, %c0_i32_0 : i32, i32
  }
  func.func @transform_11(%arg0: i32) -> (i32, i32) {
    %c0_i32 = arith.constant 0 : i32
    %c0_i32_0 = arith.constant 0 : i32
    %c0_i32_1 = arith.constant 0 : i32
    return %c0_i32, %c0_i32_0 : i32, i32
  }
  func.func @transform_12(%arg0: i32) -> (i32, i32) {
    %c0_i32 = arith.constant 0 : i32
    %c0_i32_0 = arith.constant 0 : i32
    %c0_i32_1 = arith.constant 0 : i32
    return %c0_i32, %c0_i32_0 : i32, i32
  }
  func.func @transform_13(%arg0: i32) -> (i32, i32) {
    %c0_i32 = arith.constant 0 : i32
    %c0_i32_0 = arith.constant 0 : i32
    %c0_i32_1 = arith.constant 0 : i32
    return %c0_i32, %c0_i32_0 : i32, i32
  }
  func.func @transform_14(%arg0: i32) -> (i32, i32) {
    %c0_i32 = arith.constant 0 : i32
    %c0_i32_0 = arith.constant 0 : i32
    %c0_i32_1 = arith.constant 0 : i32
    return %c0_i32, %c0_i32_0 : i32, i32
  }
  func.func @transform_15(%arg0: i32) -> (i32, i32) {
    %c0_i32 = arith.constant 0 : i32
    %c0_i32_0 = arith.constant 0 : i32
    %c0_i32_1 = arith.constant 0 : i32
    return %c0_i32, %c0_i32_0 : i32, i32
  }
  func.func @transform_16(%arg0: i32) -> (i32, i32, i32) {
    %c0_i32 = arith.constant 0 : i32
    %c0_i32_0 = arith.constant 0 : i32
    %c0_i32_1 = arith.constant 0 : i32
    return %arg0, %c0_i32, %c0_i32_0 : i32, i32, i32
  }
}

</mosaic_0001>

<llo_original>
// kernel: mincut_pool_net_forward.1
$region0: #{mincut_pool_net_forward.1}
  #allocation0 [shape = 'u32[]', space=smem, size = 0x4, offset = 0x4, fixed_abs, tag = 'smem constant byte address 0x4 - core index']
  #allocation1 [shape = 'u32[144,128]{1,0:T(1,128)}', space=vmem, size = 0x12000, scoped, tag = 'internal scratch']
  %s0 = inlined_call_operand.vmem [shape: bf16[2,16,16], index: 0, kind: input, shape index: {}]
  %s1 = inlined_call_operand.vmem [shape: bf16[2,16,16], index: 1, kind: input, shape index: {}]
  %s2 = inlined_call_operand.vmem [shape: bf16[160,32], index: 2, kind: input, shape index: {}]
  %s3 = inlined_call_operand.vmem [shape: f32[9,32], index: 3, kind: input, shape index: {}]
  %s4 = inlined_call_operand.vmem [shape: bf16[320,32], index: 4, kind: input, shape index: {}]
  %s5 = inlined_call_operand.vmem [shape: f32[9,32], index: 5, kind: input, shape index: {}]
  %s6 = inlined_call_operand.vmem [shape: bf16[320,32], index: 6, kind: input, shape index: {}]
  %s7 = inlined_call_operand.vmem [shape: f32[9,32], index: 7, kind: input, shape index: {}]
  %s8 = inlined_call_operand.vmem [shape: bf16[96,8], index: 8, kind: input, shape index: {}]
  %s9 = inlined_call_operand.vmem [shape: f32[1,8], index: 9, kind: input, shape index: {}]
  %s10 = inlined_call_operand.vmem [shape: bf16[96,4], index: 10, kind: input, shape index: {}]
  %s11 = inlined_call_operand.vmem [shape: f32[1,4], index: 11, kind: input, shape index: {}]
  %s12 = inlined_call_operand.vmem [shape: bf16[96,32], index: 12, kind: input, shape index: {}]
  %s13 = inlined_call_operand.vmem [shape: f32[1,32], index: 13, kind: input, shape index: {}]
  %s14 = inlined_call_operand.vmem [shape: bf16[32,128], index: 14, kind: input, shape index: {}]
  %s15 = inlined_call_operand.vmem [shape: f32[1,128], index: 15, kind: input, shape index: {}]
  %s16 = inlined_call_operand.vmem [shape: f32[2,1,128], index: 16, kind: output, shape index: {}]
  %s17 = sld [smem:[#allocation0]]
  $region97: #{mincut_pool_net_forward.1} parent=0
    _
  %s19 = ssub.s32 1, %s17
  %s20 = scalar_select 0, %s19, %s17
  loop: start=0, step=1, limit=4
  $region2: #{mincut_pool_net_forward.1} parent=0 // loop_pre_header
    _
  $region3: #{mincut_pool_net_forward.1} parent=0 // loop_header
    %s22 = sphi 0, %s26
    %p23 = scmp.ge.s32.totalorder %s22, 4
    %s32 = sphi 0, %s34
    %s35 = sphi 0, %s32
    %s36 = sphi 0, %s35
    %s52 = sphi 0, %s36
    %s58 = sphi 0, %s60
    %s61 = sphi 0, %s58
    %s62 = sphi 0, %s61
    %s78 = sphi 0, %s62
    %s82 = sphi 0, %s82
    %s84 = sphi 0, %s82
    %s85 = sphi 0, %s84
    %s99 = sphi 0, %s85
    %s103 = sphi 0, %s103
    %s105 = sphi 0, %s103
    %s106 = sphi 0, %s105
    %s120 = sphi 0, %s106
    %s124 = sphi 0, %s124
    %s126 = sphi 0, %s124
    %s127 = sphi 0, %s126
    %s141 = sphi 0, %s127
    %s145 = sphi 0, %s145
    %s147 = sphi 0, %s145
    %s148 = sphi 0, %s147
    %s162 = sphi 0, %s148
    %s166 = sphi 0, %s166
    %s168 = sphi 0, %s166
    %s169 = sphi 0, %s168
    %s183 = sphi 0, %s169
    %s187 = sphi 0, %s187
    %s189 = sphi 0, %s187
    %s190 = sphi 0, %s189
    %s204 = sphi 0, %s190
    %s208 = sphi 0, %s208
    %s210 = sphi 0, %s208
    %s211 = sphi 0, %s210
    %s225 = sphi 0, %s211
    %s229 = sphi 0, %s229
    %s231 = sphi 0, %s229
    %s232 = sphi 0, %s231
    %s246 = sphi 0, %s232
    %s250 = sphi 0, %s250
    %s252 = sphi 0, %s250
    %s253 = sphi 0, %s252
    %s267 = sphi 0, %s253
    %s271 = sphi 0, %s271
    %s273 = sphi 0, %s271
    %s274 = sphi 0, %s273
    %s288 = sphi 0, %s274
    %s292 = sphi 0, %s292
    %s294 = sphi 0, %s292
    %s295 = sphi 0, %s294
    %s309 = sphi 0, %s295
    %s313 = sphi 0, %s313
    %s315 = sphi 0, %s313
    %s316 = sphi 0, %s315
    %s330 = sphi 0, %s316
    %s334 = sphi 0, %s334
    %s336 = sphi 0, %s334
    %s337 = sphi 0, %s336
    %s351 = sphi 0, %s337
    %s355 = sphi 0, %s355
    %s357 = sphi 0, %s355
    %s358 = sphi 0, %s357
    %s372 = sphi 0, %s358
    %s378 = sphi 0, %s380
    %s381 = sphi 0, %s378
    %s382 = sphi 0, %s381
    %s398 = sphi 0, %s382
  $region4: #{mincut_pool_net_forward.1} parent=0 // loop_header_branch
    %25 = sbr.rel (%p23) target = $region8
  $region5: #{mincut_pool_net_forward.1} parent=0 // loop_body
    %s27 = ssub.s32 %s22, 1
    %s28 = ssub.s32 %s22, 2
    %s29 = sadd.s32 %s22, 1
    %s30 = ssub.s32 %s22, %s29
    %p31 = scmp.eq.s32.totalorder %s30, 0
    %s33 = sadd.s32 %s32, 1
    %s34 = scalar_select %p31, %s32, %s33
    %p37 = pneg %p31
    %p38 = scmp.eq.s32.totalorder %s22, 1
    %p39 = por %p37, %p38
    %p40 = scmp.ne.s32.totalorder %s32, %s35
    %p41 = scmp.eq.s32.totalorder %s22, 0
    %p42 = por %p40, %p41
    %p43 = scmp.ne.s32.totalorder %s32, %s35
    %p44 = scmp.eq.s32.totalorder %s27, 1
    %p45 = por %p43, %p44
    %p46 = scmp.ne.s32.totalorder %s35, %s36
    %p47 = scmp.eq.s32.totalorder %s27, 0
    %p48 = por %p46, %p47
    %p49 = scmp.ne.s32.totalorder %s35, %s36
    %p50 = scmp.eq.s32.totalorder %s28, 1
    %p51 = por %p49, %p50
    %p53 = scmp.ne.s32.totalorder %s36, %s52
    %p54 = scmp.eq.s32.totalorder %s28, 0
    %p55 = por %p53, %p54
    %s56 = ssub.s32 %s22, %s29
    %p57 = scmp.eq.s32.totalorder %s56, 0
    %s59 = sadd.s32 %s58, 1
    %s60 = scalar_select %p57, %s58, %s59
    %p63 = pneg %p57
    %p64 = scmp.eq.s32.totalorder %s22, 1
    %p65 = por %p63, %p64
    %p66 = scmp.ne.s32.totalorder %s58, %s61
    %p67 = scmp.eq.s32.totalorder %s22, 0
    %p68 = por %p66, %p67
    %p69 = scmp.ne.s32.totalorder %s58, %s61
    %p70 = scmp.eq.s32.totalorder %s27, 1
    %p71 = por %p69, %p70
    %p72 = scmp.ne.s32.totalorder %s61, %s62
    %p73 = scmp.eq.s32.totalorder %s27, 0
    %p74 = por %p72, %p73
    %p75 = scmp.ne.s32.totalorder %s61, %s62
    %p76 = scmp.eq.s32.totalorder %s28, 1
    %p77 = por %p75, %p76
    %p79 = scmp.ne.s32.totalorder %s62, %s78
    %p80 = scmp.eq.s32.totalorder %s28, 0
    %p81 = por %p79, %p80
    %s83 = sadd.s32 %s82, 1
    %p86 = scmp.eq.s32.totalorder %s22, 1
    %p87 = scmp.ne.s32.totalorder %s82, %s84
    %p88 = scmp.eq.s32.totalorder %s22, 0
    %p89 = por %p87, %p88
    %p90 = scmp.ne.s32.totalorder %s82, %s84
    %p91 = scmp.eq.s32.totalorder %s27, 1
    %p92 = por %p90, %p91
    %p93 = scmp.ne.s32.totalorder %s84, %s85
    %p94 = scmp.eq.s32.totalorder %s27, 0
    %p95 = por %p93, %p94
    %p96 = scmp.ne.s32.totalorder %s84, %s85
    %p97 = scmp.eq.s32.totalorder %s28, 1
    %p98 = por %p96, %p97
    %p100 = scmp.ne.s32.totalorder %s85, %s99
    %p101 = scmp.eq.s32.totalorder %s28, 0
    %p102 = por %p100, %p101
    %s104 = sadd.s32 %s103, 1
    %p107 = scmp.eq.s32.totalorder %s22, 1
    %p108 = scmp.ne.s32.totalorder %s103, %s105
    %p109 = scmp.eq.s32.totalorder %s22, 0
    %p110 = por %p108, %p109
    %p111 = scmp.ne.s32.totalorder %s103, %s105
    %p112 = scmp.eq.s32.totalorder %s27, 1
    %p113 = por %p111, %p112
    %p114 = scmp.ne.s32.totalorder %s105, %s106
    %p115 = scmp.eq.s32.totalorder %s27, 0
    %p116 = por %p114, %p115
    %p117 = scmp.ne.s32.totalorder %s105, %s106
    %p118 = scmp.eq.s32.totalorder %s28, 1
    %p119 = por %p117, %p118
    %p121 = scmp.ne.s32.totalorder %s106, %s120
    %p122 = scmp.eq.s32.totalorder %s28, 0
    %p123 = por %p121, %p122
    %s125 = sadd.s32 %s124, 1
    %p128 = scmp.eq.s32.totalorder %s22, 1
    %p129 = scmp.ne.s32.totalorder %s124, %s126
    %p130 = scmp.eq.s32.totalorder %s22, 0
    %p131 = por %p129, %p130
    %p132 = scmp.ne.s32.totalorder %s124, %s126
    %p133 = scmp.eq.s32.totalorder %s27, 1
    %p134 = por %p132, %p133
    %p135 = scmp.ne.s32.totalorder %s126, %s127
    %p136 = scmp.eq.s32.totalorder %s27, 0
    %p137 = por %p135, %p136
    %p138 = scmp.ne.s32.totalorder %s126, %s127
    %p139 = scmp.eq.s32.totalorder %s28, 1
    %p140 = por %p138, %p139
    %p142 = scmp.ne.s32.totalorder %s127, %s141
    %p143 = scmp.eq.s32.totalorder %s28, 0
    %p144 = por %p142, %p143
    %s146 = sadd.s32 %s145, 1
    %p149 = scmp.eq.s32.totalorder %s22, 1
    %p150 = scmp.ne.s32.totalorder %s145, %s147
    %p151 = scmp.eq.s32.totalorder %s22, 0
    %p152 = por %p150, %p151
    %p153 = scmp.ne.s32.totalorder %s145, %s147
    %p154 = scmp.eq.s32.totalorder %s27, 1
    %p155 = por %p153, %p154
    %p156 = scmp.ne.s32.totalorder %s147, %s148
    %p157 = scmp.eq.s32.totalorder %s27, 0
    %p158 = por %p156, %p157
    %p159 = scmp.ne.s32.totalorder %s147, %s148
    %p160 = scmp.eq.s32.totalorder %s28, 1
    %p161 = por %p159, %p160
    %p163 = scmp.ne.s32.totalorder %s148, %s162
    %p164 = scmp.eq.s32.totalorder %s28, 0
    %p165 = por %p163, %p164
    %s167 = sadd.s32 %s166, 1
    %p170 = scmp.eq.s32.totalorder %s22, 1
    %p171 = scmp.ne.s32.totalorder %s166, %s168
    %p172 = scmp.eq.s32.totalorder %s22, 0
    %p173 = por %p171, %p172
    %p174 = scmp.ne.s32.totalorder %s166, %s168
    %p175 = scmp.eq.s32.totalorder %s27, 1
    %p176 = por %p174, %p175
    %p177 = scmp.ne.s32.totalorder %s168, %s169
    %p178 = scmp.eq.s32.totalorder %s27, 0
    %p179 = por %p177, %p178
    %p180 = scmp.ne.s32.totalorder %s168, %s169
    %p181 = scmp.eq.s32.totalorder %s28, 1
    %p182 = por %p180, %p181
    %p184 = scmp.ne.s32.totalorder %s169, %s183
    %p185 = scmp.eq.s32.totalorder %s28, 0
    %p186 = por %p184, %p185
    %s188 = sadd.s32 %s187, 1
    %p191 = scmp.eq.s32.totalorder %s22, 1
    %p192 = scmp.ne.s32.totalorder %s187, %s189
    %p193 = scmp.eq.s32.totalorder %s22, 0
    %p194 = por %p192, %p193
    %p195 = scmp.ne.s32.totalorder %s187, %s189
    %p196 = scmp.eq.s32.totalorder %s27, 1
    %p197 = por %p195, %p196
    %p198 = scmp.ne.s32.totalorder %s189, %s190
    %p199 = scmp.eq.s32.totalorder %s27, 0
    %p200 = por %p198, %p199
    %p201 = scmp.ne.s32.totalorder %s189, %s190
    %p202 = scmp.eq.s32.totalorder %s28, 1
    %p203 = por %p201, %p202
    %p205 = scmp.ne.s32.totalorder %s190, %s204
    %p206 = scmp.eq.s32.totalorder %s28, 0
    %p207 = por %p205, %p206
    %s209 = sadd.s32 %s208, 1
    %p212 = scmp.eq.s32.totalorder %s22, 1
    %p213 = scmp.ne.s32.totalorder %s208, %s210
    %p214 = scmp.eq.s32.totalorder %s22, 0
    %p215 = por %p213, %p214
    %p216 = scmp.ne.s32.totalorder %s208, %s210
    %p217 = scmp.eq.s32.totalorder %s27, 1
    %p218 = por %p216, %p217
    %p219 = scmp.ne.s32.totalorder %s210, %s211
    %p220 = scmp.eq.s32.totalorder %s27, 0
    %p221 = por %p219, %p220
    %p222 = scmp.ne.s32.totalorder %s210, %s211
    %p223 = scmp.eq.s32.totalorder %s28, 1
    %p224 = por %p222, %p223
    %p226 = scmp.ne.s32.totalorder %s211, %s225
    %p227 = scmp.eq.s32.totalorder %s28, 0
    %p228 = por %p226, %p227
    %s230 = sadd.s32 %s229, 1
    %p233 = scmp.eq.s32.totalorder %s22, 1
    %p234 = scmp.ne.s32.totalorder %s229, %s231
    %p235 = scmp.eq.s32.totalorder %s22, 0
    %p236 = por %p234, %p235
    %p237 = scmp.ne.s32.totalorder %s229, %s231
    %p238 = scmp.eq.s32.totalorder %s27, 1
    %p239 = por %p237, %p238
    %p240 = scmp.ne.s32.totalorder %s231, %s232
    %p241 = scmp.eq.s32.totalorder %s27, 0
    %p242 = por %p240, %p241
    %p243 = scmp.ne.s32.totalorder %s231, %s232
    %p244 = scmp.eq.s32.totalorder %s28, 1
    %p245 = por %p243, %p244
    %p247 = scmp.ne.s32.totalorder %s232, %s246
    %p248 = scmp.eq.s32.totalorder %s28, 0
    %p249 = por %p247, %p248
    %s251 = sadd.s32 %s250, 1
    %p254 = scmp.eq.s32.totalorder %s22, 1
    %p255 = scmp.ne.s32.totalorder %s250, %s252
    %p256 = scmp.eq.s32.totalorder %s22, 0
    %p257 = por %p255, %p256
    %p258 = scmp.ne.s32.totalorder %s250, %s252
    %p259 = scmp.eq.s32.totalorder %s27, 1
    %p260 = por %p258, %p259
    %p261 = scmp.ne.s32.totalorder %s252, %s253
    %p262 = scmp.eq.s32.totalorder %s27, 0
    %p263 = por %p261, %p262
    %p264 = scmp.ne.s32.totalorder %s252, %s253
    %p265 = scmp.eq.s32.totalorder %s28, 1
    %p266 = por %p264, %p265
    %p268 = scmp.ne.s32.totalorder %s253, %s267
    %p269 = scmp.eq.s32.totalorder %s28, 0
    %p270 = por %p268, %p269
    %s272 = sadd.s32 %s271, 1
    %p275 = scmp.eq.s32.totalorder %s22, 1
    %p276 = scmp.ne.s32.totalorder %s271, %s273
    %p277 = scmp.eq.s32.totalorder %s22, 0
    %p278 = por %p276, %p277
    %p279 = scmp.ne.s32.totalorder %s271, %s273
    %p280 = scmp.eq.s32.totalorder %s27, 1
    %p281 = por %p279, %p280
    %p282 = scmp.ne.s32.totalorder %s273, %s274
    %p283 = scmp.eq.s32.totalorder %s27, 0
    %p284 = por %p282, %p283
    %p285 = scmp.ne.s32.totalorder %s273, %s274
    %p286 = scmp.eq.s32.totalorder %s28, 1
    %p287 = por %p285, %p286
    %p289 = scmp.ne.s32.totalorder %s274, %s288
    %p290 = scmp.eq.s32.totalorder %s28, 0
    %p291 = por %p289, %p290
    %s293 = sadd.s32 %s292, 1
    %p296 = scmp.eq.s32.totalorder %s22, 1
    %p297 = scmp.ne.s32.totalorder %s292, %s294
    %p298 = scmp.eq.s32.totalorder %s22, 0
    %p299 = por %p297, %p298
    %p300 = scmp.ne.s32.totalorder %s292, %s294
    %p301 = scmp.eq.s32.totalorder %s27, 1
    %p302 = por %p300, %p301
    %p303 = scmp.ne.s32.totalorder %s294, %s295
    %p304 = scmp.eq.s32.totalorder %s27, 0
    %p305 = por %p303, %p304
    %p306 = scmp.ne.s32.totalorder %s294, %s295
    %p307 = scmp.eq.s32.totalorder %s28, 1
    %p308 = por %p306, %p307
    %p310 = scmp.ne.s32.totalorder %s295, %s309
    %p311 = scmp.eq.s32.totalorder %s28, 0
    %p312 = por %p310, %p311
    %s314 = sadd.s32 %s313, 1
    %p317 = scmp.eq.s32.totalorder %s22, 1
    %p318 = scmp.ne.s32.totalorder %s313, %s315
    %p319 = scmp.eq.s32.totalorder %s22, 0
    %p320 = por %p318, %p319
    %p321 = scmp.ne.s32.totalorder %s313, %s315
    %p322 = scmp.eq.s32.totalorder %s27, 1
    %p323 = por %p321, %p322
    %p324 = scmp.ne.s32.totalorder %s315, %s316
    %p325 = scmp.eq.s32.totalorder %s27, 0
    %p326 = por %p324, %p325
    %p327 = scmp.ne.s32.totalorder %s315, %s316
    %p328 = scmp.eq.s32.totalorder %s28, 1
    %p329 = por %p327, %p328
    %p331 = scmp.ne.s32.totalorder %s316, %s330
    %p332 = scmp.eq.s32.totalorder %s28, 0
    %p333 = por %p331, %p332
    %s335 = sadd.s32 %s334, 1
    %p338 = scmp.eq.s32.totalorder %s22, 1
    %p339 = scmp.ne.s32.totalorder %s334, %s336
    %p340 = scmp.eq.s32.totalorder %s22, 0
    %p341 = por %p339, %p340
    %p342 = scmp.ne.s32.totalorder %s334, %s336
    %p343 = scmp.eq.s32.totalorder %s27, 1
    %p344 = por %p342, %p343
    %p345 = scmp.ne.s32.totalorder %s336, %s337
    %p346 = scmp.eq.s32.totalorder %s27, 0
    %p347 = por %p345, %p346
    %p348 = scmp.ne.s32.totalorder %s336, %s337
    %p349 = scmp.eq.s32.totalorder %s28, 1
    %p350 = por %p348, %p349
    %p352 = scmp.ne.s32.totalorder %s337, %s351
    %p353 = scmp.eq.s32.totalorder %s28, 0
    %p354 = por %p352, %p353
    %s356 = sadd.s32 %s355, 1
    %p359 = scmp.eq.s32.totalorder %s22, 1
    %p360 = scmp.ne.s32.totalorder %s355, %s357
    %p361 = scmp.eq.s32.totalorder %s22, 0
    %p362 = por %p360, %p361
    %p363 = scmp.ne.s32.totalorder %s355, %s357
    %p364 = scmp.eq.s32.totalorder %s27, 1
    %p365 = por %p363, %p364
    %p366 = scmp.ne.s32.totalorder %s357, %s358
    %p367 = scmp.eq.s32.totalorder %s27, 0
    %p368 = por %p366, %p367
    %p369 = scmp.ne.s32.totalorder %s357, %s358
    %p370 = scmp.eq.s32.totalorder %s28, 1
    %p371 = por %p369, %p370
    %p373 = scmp.ne.s32.totalorder %s358, %s372
    %p374 = scmp.eq.s32.totalorder %s28, 0
    %p375 = por %p373, %p374
    %s376 = ssub.s32 %s22, %s29
    %p377 = scmp.eq.s32.totalorder %s376, 0
    %s379 = sadd.s32 %s378, 1
    %s380 = scalar_select %p377, %s378, %s379
    %p383 = pneg %p377
    %p384 = scmp.eq.s32.totalorder %s22, 1
    %p385 = por %p383, %p384
    %p386 = scmp.ne.s32.totalorder %s378, %s381
    %p387 = scmp.eq.s32.totalorder %s22, 0
    %p388 = por %p386, %p387
    %p389 = scmp.ne.s32.totalorder %s378, %s381
    %p390 = scmp.eq.s32.totalorder %s27, 1
    %p391 = por %p389, %p390
    %p392 = scmp.ne.s32.totalorder %s381, %s382
    %p393 = scmp.eq.s32.totalorder %s27, 0
    %p394 = por %p392, %p393
    %p395 = scmp.ne.s32.totalorder %s381, %s382
    %p396 = scmp.eq.s32.totalorder %s28, 1
    %p397 = por %p395, %p396
    %p399 = scmp.ne.s32.totalorder %s382, %s398
    %p400 = scmp.eq.s32.totalorder %s28, 0
    %p401 = por %p399, %p400
    %p402 = scmp.le.s32.totalorder 1, %s22
    %p403 = scmp.lt.s32.totalorder %s22, 3
    %p404 = pnand %p402, %p403
    %p405 = pneg %p404
    // Predicated region
    $region9: #{mincut_pool_net_forward.1} parent=5 // pred_check
      _
    $region10: #{mincut_pool_net_forward.1} parent=5 // pred_check_branch
      %407 = sbr.rel (%p404) target = $region12
    $region11: #{mincut_pool_net_forward.1} parent=5 // pred_region
      %s408 = ssub.s32 %s22, 1
      // Predicated region
      $region13: #{mincut_pool_net_forward.1} parent=11 // pred_check
        %p409 = pneg %p95
      $region14: #{mincut_pool_net_forward.1} parent=11 // pred_check_branch
        %411 = sbr.rel (%p409) target = $region16
      $region15: #{mincut_pool_net_forward.1} parent=11 // pred_region
        _
      $region16: #{mincut_pool_net_forward.1} parent=11 // pred_fallthru
        _
      // Predicated region
      $region17: #{mincut_pool_net_forward.1} parent=11 // pred_check
        %p412 = pneg %p116
      $region18: #{mincut_pool_net_forward.1} parent=11 // pred_check_branch
        %414 = sbr.rel (%p412) target = $region20
      $region19: #{mincut_pool_net_forward.1} parent=11 // pred_region
        _
      $region20: #{mincut_pool_net_forward.1} parent=11 // pred_fallthru
        _
      // Predicated region
      $region21: #{mincut_pool_net_forward.1} parent=11 // pred_check
        %p415 = pneg %p137
      $region22: #{mincut_pool_net_forward.1} parent=11 // pred_check_branch
        %417 = sbr.rel (%p415) target = $region24
      $region23: #{mincut_pool_net_forward.1} parent=11 // pred_region
        _
      $region24: #{mincut_pool_net_forward.1} parent=11 // pred_fallthru
        _
      // Predicated region
      $region25: #{mincut_pool_net_forward.1} parent=11 // pred_check
        %p418 = pneg %p158
      $region26: #{mincut_pool_net_forward.1} parent=11 // pred_check_branch
        %420 = sbr.rel (%p418) target = $region28
      $region27: #{mincut_pool_net_forward.1} parent=11 // pred_region
        _
      $region28: #{mincut_pool_net_forward.1} parent=11 // pred_fallthru
        _
      // Predicated region
      $region29: #{mincut_pool_net_forward.1} parent=11 // pred_check
        %p421 = pneg %p179
      $region30: #{mincut_pool_net_forward.1} parent=11 // pred_check_branch
        %423 = sbr.rel (%p421) target = $region32
      $region31: #{mincut_pool_net_forward.1} parent=11 // pred_region
        _
      $region32: #{mincut_pool_net_forward.1} parent=11 // pred_fallthru
        _
      // Predicated region
      $region33: #{mincut_pool_net_forward.1} parent=11 // pred_check
        %p424 = pneg %p200
      $region34: #{mincut_pool_net_forward.1} parent=11 // pred_check_branch
        %426 = sbr.rel (%p424) target = $region36
      $region35: #{mincut_pool_net_forward.1} parent=11 // pred_region
        _
      $region36: #{mincut_pool_net_forward.1} parent=11 // pred_fallthru
        _
      // Predicated region
      $region37: #{mincut_pool_net_forward.1} parent=11 // pred_check
        %p427 = pneg %p221
      $region38: #{mincut_pool_net_forward.1} parent=11 // pred_check_branch
        %429 = sbr.rel (%p427) target = $region40
      $region39: #{mincut_pool_net_forward.1} parent=11 // pred_region
        _
      $region40: #{mincut_pool_net_forward.1} parent=11 // pred_fallthru
        _
      // Predicated region
      $region41: #{mincut_pool_net_forward.1} parent=11 // pred_check
        %p430 = pneg %p242
      $region42: #{mincut_pool_net_forward.1} parent=11 // pred_check_branch
        %432 = sbr.rel (%p430) target = $region44
      $region43: #{mincut_pool_net_forward.1} parent=11 // pred_region
        _
      $region44: #{mincut_pool_net_forward.1} parent=11 // pred_fallthru
        _
      // Predicated region
      $region45: #{mincut_pool_net_forward.1} parent=11 // pred_check
        %p433 = pneg %p263
      $region46: #{mincut_pool_net_forward.1} parent=11 // pred_check_branch
        %435 = sbr.rel (%p433) target = $region48
      $region47: #{mincut_pool_net_forward.1} parent=11 // pred_region
        _
      $region48: #{mincut_pool_net_forward.1} parent=11 // pred_fallthru
        _
      // Predicated region
      $region49: #{mincut_pool_net_forward.1} parent=11 // pred_check
        %p436 = pneg %p284
      $region50: #{mincut_pool_net_forward.1} parent=11 // pred_check_branch
        %438 = sbr.rel (%p436) target = $region52
      $region51: #{mincut_pool_net_forward.1} parent=11 // pred_region
        _
      $region52: #{mincut_pool_net_forward.1} parent=11 // pred_fallthru
        _
      // Predicated region
      $region53: #{mincut_pool_net_forward.1} parent=11 // pred_check
        %p439 = pneg %p305
      $region54: #{mincut_pool_net_forward.1} parent=11 // pred_check_branch
        %441 = sbr.rel (%p439) target = $region56
      $region55: #{mincut_pool_net_forward.1} parent=11 // pred_region
        _
      $region56: #{mincut_pool_net_forward.1} parent=11 // pred_fallthru
        _
      // Predicated region
      $region57: #{mincut_pool_net_forward.1} parent=11 // pred_check
        %p442 = pneg %p326
      $region58: #{mincut_pool_net_forward.1} parent=11 // pred_check_branch
        %444 = sbr.rel (%p442) target = $region60
      $region59: #{mincut_pool_net_forward.1} parent=11 // pred_region
        _
      $region60: #{mincut_pool_net_forward.1} parent=11 // pred_fallthru
        _
      // Predicated region
      $region61: #{mincut_pool_net_forward.1} parent=11 // pred_check
        %p445 = pneg %p347
      $region62: #{mincut_pool_net_forward.1} parent=11 // pred_check_branch
        %447 = sbr.rel (%p445) target = $region64
      $region63: #{mincut_pool_net_forward.1} parent=11 // pred_region
        _
      $region64: #{mincut_pool_net_forward.1} parent=11 // pred_fallthru
        _
      // Predicated region
      $region65: #{mincut_pool_net_forward.1} parent=11 // pred_check
        %p448 = pneg %p368
      $region66: #{mincut_pool_net_forward.1} parent=11 // pred_check_branch
        %450 = sbr.rel (%p448) target = $region68
      $region67: #{mincut_pool_net_forward.1} parent=11 // pred_region
        _
      $region68: #{mincut_pool_net_forward.1} parent=11 // pred_fallthru
        _
    $region12: #{mincut_pool_net_forward.1} parent=5 // pred_fallthru
      _
    %p451 = scmp.lt.s32.totalorder %s22, 2
    // Predicated region
    $region69: #{mincut_pool_net_forward.1} parent=5 // pred_check
      %p452 = pneg %p451
    $region70: #{mincut_pool_net_forward.1} parent=5 // pred_check_branch
      %454 = sbr.rel (%p452) target = $region72
    $region71: #{mincut_pool_net_forward.1} parent=5 // pred_region
      // Predicated region
      $region73: #{mincut_pool_net_forward.1} parent=71 // pred_check
        %p455 = pneg %p42
      $region74: #{mincut_pool_net_forward.1} parent=71 // pred_check_branch
        %457 = sbr.rel (%p455) target = $region76
      $region75: #{mincut_pool_net_forward.1} parent=71 // pred_region
        %p458 = scmp.lt.s32.totalorder %s22, 1
        %s459 = scalar_select %p458, %s22, 1
        %s460 = smul.addr %s459, 2
        %s461 = smul.addr %s460, 4
        %s462 = scalar_lea.vmem %s0, %s461
      $region76: #{mincut_pool_net_forward.1} parent=71 // pred_fallthru
        _
      // Predicated region
      $region77: #{mincut_pool_net_forward.1} parent=71 // pred_check
        %p463 = pneg %p68
      $region78: #{mincut_pool_net_forward.1} parent=71 // pred_check_branch
        %465 = sbr.rel (%p463) target = $region80
      $region79: #{mincut_pool_net_forward.1} parent=71 // pred_region
        %p466 = scmp.lt.s32.totalorder %s22, 1
        %s467 = scalar_select %p466, %s22, 1
        %s468 = smul.addr %s467, 2
        %s469 = smul.addr %s468, 4
        %s470 = scalar_lea.vmem %s1, %s469
      $region80: #{mincut_pool_net_forward.1} parent=71 // pred_fallthru
        _
    $region72: #{mincut_pool_net_forward.1} parent=5 // pred_fallthru
      _
    %p471 = scmp.le.s32.totalorder 1, %s22
    %p472 = scmp.lt.s32.totalorder %s22, 3
    %p473 = pnand %p471, %p472
    %p474 = pneg %p473
    // Predicated region
    $region81: #{mincut_pool_net_forward.1} parent=5 // pred_check
      _
    $region82: #{mincut_pool_net_forward.1} parent=5 // pred_check_branch
      %476 = sbr.rel (%p473) target = $region84
    $region83: #{mincut_pool_net_forward.1} parent=5 // pred_region
      %s477 = ssub.s32 %s22, 1
      %p478 = scmp.lt.s32.totalorder %s27, 1
      %s479 = scalar_select %p478, %s27, 1
      %s480 = smul.addr %s479, 2
      %s481 = smul.addr %s480, 4
      %s482 = scalar_lea.vmem %s0, %s481
      %p483 = pneg %p48
      %p484 = pneg %p45
      %p485 = scmp.lt.s32.totalorder %s27, 1
      %s486 = scalar_select %p485, %s27, 1
      %s487 = smul.addr %s486, 2
      %s488 = smul.addr %s487, 4
      %s489 = scalar_lea.vmem %s1, %s488
      %p490 = pneg %p74
      %p491 = pneg %p71
      %p492 = pneg %p95
      %p493 = pneg %p92
      %p494 = pneg %p116
      %p495 = pneg %p113
      %p496 = pneg %p137
      %p497 = pneg %p134
      %p498 = pneg %p158
      %p499 = pneg %p155
      %p500 = pneg %p179
      %p501 = pneg %p176
      %p502 = pneg %p200
      %p503 = pneg %p197
      %p504 = pneg %p221
      %p505 = pneg %p218
      %p506 = pneg %p242
      %p507 = pneg %p239
      %p508 = pneg %p263
      %p509 = pneg %p260
      %p510 = pneg %p284
      %p511 = pneg %p281
      %p512 = pneg %p305
      %p513 = pneg %p302
      %p514 = pneg %p326
      %p515 = pneg %p323
      %p516 = pneg %p347
      %p517 = pneg %p344
      %p518 = pneg %p368
      %p519 = pneg %p365
      %p520 = pneg %p394
      %p521 = pneg %p391
      %p522 = scmp.lt.s32.totalorder %s27, 1
      %s523 = scalar_select %p522, %s27, 1
      %s524 = scalar_lea.vmem %s16, %s523
      %p525 = scmp.lt.s32.totalorder %s27, 1
      %s526 = scalar_select %p525, %s27, 1
      %s527 = smul.addr %s526, 2
      %s528 = smul.addr %s527, 4
      %s529 = scalar_lea.vmem %s0, %s528
      %p530 = scmp.lt.s32.totalorder %s27, 1
      %s531 = scalar_select %p530, %s27, 1
      %s532 = smul.addr %s531, 2
      %s533 = smul.addr %s532, 4
      %s534 = scalar_lea.vmem %s1, %s533
      %p535 = scmp.lt.s32.totalorder %s27, 1
      %s536 = scalar_select %p535, %s27, 1
      %s537 = scalar_lea.vmem %s16, %s536
      %v539 = vlaneseq
      %v540 = vand.u32 %v539, 127
      %vm541 = vcmp.lt.s32.totalorder %v540, 4
      %v542 = vld [vmem:[%s529] sm:$0xf]
      %v543 = vld [vmem:[%s529 + $0x4] sm:$0xf]
      %v544 = vld [vmem:[%s534] sm:$0xf]
      %v545 = vld [vmem:[%s534 + $0x4] sm:$0xf]
      %v546 = vunpack.c.l.bf16 %v544
      %v547 = vunpack.c.l.bf16 %v545
      %vm548 = vcmask 130048
      %v549 = vsel %vm548, %v546, 0.0
      %550 = vadd.xlane.f32.xlu0 %v549
      %v551 = vpop.xlane.xlu0 %550
      %v552 = vsel %vm548, %v547, 0.0
      %553 = vadd.xlane.f32.xlu0 %v552
      %v554 = vpop.xlane.xlu0 %553
      %v555 = vmax.f32 %v551, 1.0
      %v556 = vmax.f32 %v554, 1.0
      %v557 = vrcp.pop %v555
      %v558 = vmul.f32 1.0, %v557
      %v559 = vrcp.pop %v556
      %v560 = vmul.f32 1.0, %v559
      %v561 = vld [vmem:[%s2] sm:$0xf]
      %v562 = vld [vmem:[%s2 + $0x4] sm:$0xf]
      %v563 = vld [vmem:[%s2 + $0x8] sm:$0xf]
      %v564 = vld [vmem:[%s2 + $0xc] sm:$0xf]
      %v565 = vld [vmem:[%s3] sm:$0x1]
      %v566 = vld [vmem:[%s3 + $0x1] sm:$0x1]
      %v567 = vld [vmem:[%s3 + $0x2] sm:$0x1]
      %v570 = vunpack.c.l.b16 %v544
      %v571 = vunpack.c.l.b16 %v545
      %v572 = vpack.c.b16 %v571, %v570
      %v575 = vunpack.c.l.b16 %v542
      %v576 = vunpack.c.l.b16 %v543
      %v577 = vpack.c.b16 %v576, %v575
      %v580 = vsel %vm548, %v572, 0
      %582 = vmatprep.subr.bf16.mxu0 0
      %583 = vmatpush1.bf16.msra.mxu0 0
      %584 = vmatprep.subr.bf16.mxu0 0
      %585 = vmatpush1.bf16.msra.mxu0 0
      %586 = vmatprep.subr.bf16.mxu0 0
      %587 = vmatpush1.bf16.msra.mxu0 0
      %588 = vmatprep.subr.bf16.mxu0 0
      %589 = vmatpush1.bf16.msra.mxu0 0
      %590 = vmatprep.subr.bf16.mxu0 0
      %591 = vmatpush1.bf16.msra.mxu0 0
      %592 = vmatprep.subr.bf16.mxu0 0
      %593 = vmatpush1.bf16.msra.mxu0 0
      %594 = vmatprep.subr.bf16.mxu0 0
      %595 = vmatpush1.bf16.msra.mxu0 0
      %596 = vmatprep.subr.bf16.mxu0 0
      %597 = vmatpush1.bf16.msra.mxu0 %v577
      %598 = vmatprep.subr.bf16.mxu0 0
      %599 = vmatpush2.bf16.msra.mxu0 0
      %600 = vmatprep.subr.bf16.mxu0 0
      %601 = vmatpush2.bf16.msra.mxu0 0
      %602 = vmatprep.subr.bf16.mxu0 0
      %603 = vmatpush2.bf16.msra.mxu0 0
      %604 = vmatprep.subr.bf16.mxu0 0
      %605 = vmatpush2.bf16.msra.mxu0 0
      %606 = vmatprep.subr.bf16.mxu0 0
      %607 = vmatpush2.bf16.msra.mxu0 0
      %608 = vmatprep.subr.bf16.mxu0 0
      %609 = vmatpush2.bf16.msra.mxu0 0
      %610 = vmatprep.subr.bf16.mxu0 0
      %611 = vmatpush2.bf16.msra.mxu0 0
      %612 = vmatprep.subr.bf16.mxu0 0
      %613 = vmatpush2.bf16.msra.mxu0 0
      %614 = vmatprep.mubr.bf16.mxu0 0
      %615 = vmatmul.mubr.bf16.gmra.mxu0 %v580
      %v616 = vpop.f32.mrf.mxu0
      %v617 = vadd.f32 0.0, %v616
      %v618 = vpop.f32.mrf.mxu0
      %v619 = vpop.f32.mrf.mxu0
      %v620 = vadd.f32 0.0, %v619
      %v621 = vpop.f32.mrf.mxu0
      %622 = vdwg.mxu0
      %v623 = vmul.f32 %v617, %v558
      %v624 = vmul.f32 %v620, %v560
      %v625 = vunpack.c.l.bf16 %v542
      %v626 = vunpack.c.l.bf16 %v543
      %629 = vrot.lane.b32.xlu0 %v625, 16
      %v630 = vpop.permute.xlu0 %629
      %631 = vrot.lane.b32.xlu0 %v626, 16
      %v632 = vpop.permute.xlu0 %631
      %v635 = vsel %vm548, %v623, %v630
      %v636 = vsel %vm548, %v624, %v632
      %v637 = vpack.c.bf16 %v636, %v635
      %v638 = vlaneseq
      %v639 = vshrl.u32 %v638, 7
      %v640 = vsub.s32 0, %v639
      %v641 = vrot.slane %v565, %v640
      %v646 = vunpack.c.l.b16 %v561
      %v647 = vunpack.c.l.b16 %v562
      %v648 = vunpack.c.l.b16 %v563
      %v649 = vunpack.c.l.b16 %v564
      %v650 = vpack.c.b16 %v647, %v646
      %v651 = vpack.c.b16 %v649, %v648
      %vm654 = vcmask 261120
      %v656 = vsel %vm654, %v637, 0
      %658 = vmatprep.subr.bf16.mxu0 0
      %659 = vmatpush1.bf16.msra.mxu0 0
      %660 = vmatprep.subr.bf16.mxu0 0
      %661 = vmatpush1.bf16.msra.mxu0 0
      %662 = vmatprep.subr.bf16.mxu0 0
      %663 = vmatpush1.bf16.msra.mxu0 0
      %664 = vmatprep.subr.bf16.mxu0 0
      %665 = vmatpush1.bf16.msra.mxu0 0
      %666 = vmatprep.subr.bf16.mxu0 0
      %667 = vmatpush1.bf16.msra.mxu0 0
      %668 = vmatprep.subr.bf16.mxu0 0
      %669 = vmatpush1.bf16.msra.mxu0 0
      %670 = vmatprep.subr.bf16.mxu0 0
      %671 = vmatpush1.bf16.msra.mxu0 %v651
      %672 = vmatprep.subr.bf16.mxu0 0
      %673 = vmatpush1.bf16.msra.mxu0 %v650
      %674 = vmatprep.subr.bf16.mxu0 0
      %675 = vmatpush2.bf16.msra.mxu0 0
      %676 = vmatprep.subr.bf16.mxu0 0
      %677 = vmatpush2.bf16.msra.mxu0 0
      %678 = vmatprep.subr.bf16.mxu0 0
      %679 = vmatpush2.bf16.msra.mxu0 0
      %680 = vmatprep.subr.bf16.mxu0 0
      %681 = vmatpush2.bf16.msra.mxu0 0
      %682 = vmatprep.subr.bf16.mxu0 0
      %683 = vmatpush2.bf16.msra.mxu0 0
      %684 = vmatprep.subr.bf16.mxu0 0
      %685 = vmatpush2.bf16.msra.mxu0 0
      %686 = vmatprep.subr.bf16.mxu0 0
      %687 = vmatpush2.bf16.msra.mxu0 0
      %688 = vmatprep.subr.bf16.mxu0 0
      %689 = vmatpush2.bf16.msra.mxu0 0
      %690 = vmatprep.mubr.bf16.mxu0 0
      %691 = vmatmul.mubr.bf16.gmra.mxu0 %v656
      %v692 = vpop.f32.mrf.mxu0
      %v693 = vadd.f32 %v641, %v692
      %v694 = vpop.f32.mrf.mxu0
      %v695 = vpop.f32.mrf.mxu0
      %v696 = vadd.f32 %v641, %v695
      %v697 = vpop.f32.mrf.mxu0
      %698 = vdwg.mxu0
      %v699 = vmax.f32 %v693, 0.0
      %v700 = vmax.f32 %v696, 0.0
      %v701 = vlaneseq
      %v702 = vshrl.u32 %v701, 7
      %v703 = vsub.s32 0, %v702
      %v704 = vrot.slane %v566, %v703
      %v705 = vmul.f32 %v699, %v704
      %v706 = vmul.f32 %v700, %v704
      %v707 = vlaneseq
      %v708 = vshrl.u32 %v707, 7
      %v709 = vsub.s32 0, %v708
      %v710 = vrot.slane %v567, %v709
      %v711 = vadd.f32 %v705, %v710
      %v712 = vadd.f32 %v706, %v710
      %v713 = vld [vmem:[%s2 + $0x10] sm:$0xf]
      %v714 = vld [vmem:[%s2 + $0x14] sm:$0xf]
      %v715 = vld [vmem:[%s2 + $0x18] sm:$0xf]
      %v716 = vld [vmem:[%s2 + $0x1c] sm:$0xf]
      %v717 = vld [vmem:[%s2 + $0x20] sm:$0xf]
      %v718 = vld [vmem:[%s2 + $0x24] sm:$0xf]
      %v719 = vld [vmem:[%s2 + $0x28] sm:$0xf]
      %v720 = vld [vmem:[%s2 + $0x2c] sm:$0xf]
      %v721 = vld [vmem:[%s3 + $0x3] sm:$0x1]
      %v722 = vld [vmem:[%s3 + $0x4] sm:$0x1]
      %v723 = vld [vmem:[%s3 + $0x5] sm:$0x1]
      %v724 = vpack.c.bf16 %v712, %v711
      %725 = vmatprep.subr.bf16.mxu0 0
      %726 = vmatpush1.bf16.msra.mxu0 0
      %727 = vmatprep.subr.bf16.mxu0 0
      %728 = vmatpush1.bf16.msra.mxu0 0
      %729 = vmatprep.subr.bf16.mxu0 0
      %730 = vmatpush1.bf16.msra.mxu0 0
      %731 = vmatprep.subr.bf16.mxu0 0
      %732 = vmatpush1.bf16.msra.mxu0 0
      %733 = vmatprep.subr.bf16.mxu0 0
      %734 = vmatpush1.bf16.msra.mxu0 0
      %735 = vmatprep.subr.bf16.mxu0 0
      %736 = vmatpush1.bf16.msra.mxu0 0
      %737 = vmatprep.subr.bf16.mxu0 0
      %738 = vmatpush1.bf16.msra.mxu0 0
      %739 = vmatprep.subr.bf16.mxu0 0
      %740 = vmatpush1.bf16.msra.mxu0 %v724
      %741 = vmatprep.subr.bf16.mxu0 0
      %742 = vmatpush2.bf16.msra.mxu0 0
      %743 = vmatprep.subr.bf16.mxu0 0
      %744 = vmatpush2.bf16.msra.mxu0 0
      %745 = vmatprep.subr.bf16.mxu0 0
      %746 = vmatpush2.bf16.msra.mxu0 0
      %747 = vmatprep.subr.bf16.mxu0 0
      %748 = vmatpush2.bf16.msra.mxu0 0
      %749 = vmatprep.subr.bf16.mxu0 0
      %750 = vmatpush2.bf16.msra.mxu0 0
      %751 = vmatprep.subr.bf16.mxu0 0
      %752 = vmatpush2.bf16.msra.mxu0 0
      %753 = vmatprep.subr.bf16.mxu0 0
      %754 = vmatpush2.bf16.msra.mxu0 0
      %755 = vmatprep.subr.bf16.mxu0 0
      %756 = vmatpush2.bf16.msra.mxu0 0
      %757 = vmatprep.mubr.bf16.mxu0 0
      %758 = vmatmul.mubr.bf16.gmra.mxu0 %v580
      %v759 = vpop.f32.mrf.mxu0
      %v760 = vadd.f32 0.0, %v759
      %v761 = vpop.f32.mrf.mxu0
      %v762 = vpop.f32.mrf.mxu0
      %v763 = vadd.f32 0.0, %v762
      %v764 = vpop.f32.mrf.mxu0
      %765 = vdwg.mxu0
      %v766 = vmul.f32 %v760, %v558
      %v767 = vmul.f32 %v763, %v560
      %770 = vrot.lane.b32.xlu0 %v711, 32
      %v771 = vpop.permute.xlu0 %770
      %772 = vrot.lane.b32.xlu0 %v712, 32
      %v773 = vpop.permute.xlu0 %772
      %v776 = vsel %vm654, %v766, %v771
      %v777 = vsel %vm654, %v767, %v773
      %v778 = vpack.c.bf16 %v777, %v776
      %v779 = vlaneseq
      %v780 = vshrl.u32 %v779, 7
      %v781 = vsub.s32 0, %v780
      %v782 = vrot.slane %v721, %v781
      %v791 = vunpack.c.l.b16 %v713
      %v792 = vunpack.c.l.b16 %v714
      %v793 = vunpack.c.l.b16 %v715
      %v794 = vunpack.c.l.b16 %v716
      %v795 = vunpack.c.l.b16 %v717
      %v796 = vunpack.c.l.b16 %v718
      %v797 = vunpack.c.l.b16 %v719
      %v798 = vunpack.c.l.b16 %v720
      %v799 = vpack.c.b16 %v792, %v791
      %v800 = vpack.c.b16 %v794, %v793
      %v801 = vpack.c.b16 %v796, %v795
      %v802 = vpack.c.b16 %v798, %v797
      %vm807 = vcmask 523264
      %v809 = vsel %vm807, %v778, 0
      %811 = vmatprep.subr.bf16.mxu0 0
      %812 = vmatpush1.bf16.msra.mxu0 0
      %813 = vmatprep.subr.bf16.mxu0 0
      %814 = vmatpush1.bf16.msra.mxu0 0
      %815 = vmatprep.subr.bf16.mxu0 0
      %816 = vmatpush1.bf16.msra.mxu0 0
      %817 = vmatprep.subr.bf16.mxu0 0
      %818 = vmatpush1.bf16.msra.mxu0 0
      %819 = vmatprep.subr.bf16.mxu0 0
      %820 = vmatpush1.bf16.msra.mxu0 %v802
      %821 = vmatprep.subr.bf16.mxu0 0
      %822 = vmatpush1.bf16.msra.mxu0 %v801
      %823 = vmatprep.subr.bf16.mxu0 0
      %824 = vmatpush1.bf16.msra.mxu0 %v800
      %825 = vmatprep.subr.bf16.mxu0 0
      %826 = vmatpush1.bf16.msra.mxu0 %v799
      %827 = vmatprep.subr.bf16.mxu0 0
      %828 = vmatpush2.bf16.msra.mxu0 0
      %829 = vmatprep.subr.bf16.mxu0 0
      %830 = vmatpush2.bf16.msra.mxu0 0
      %831 = vmatprep.subr.bf16.mxu0 0
      %832 = vmatpush2.bf16.msra.mxu0 0
      %833 = vmatprep.subr.bf16.mxu0 0
      %834 = vmatpush2.bf16.msra.mxu0 0
      %835 = vmatprep.subr.bf16.mxu0 0
      %836 = vmatpush2.bf16.msra.mxu0 0
      %837 = vmatprep.subr.bf16.mxu0 0
      %838 = vmatpush2.bf16.msra.mxu0 0
      %839 = vmatprep.subr.bf16.mxu0 0
      %840 = vmatpush2.bf16.msra.mxu0 0
      %841 = vmatprep.subr.bf16.mxu0 0
      %842 = vmatpush2.bf16.msra.mxu0 0
      %843 = vmatprep.mubr.bf16.mxu0 0
      %844 = vmatmul.mubr.bf16.gmra.mxu0 %v809
      %v845 = vpop.f32.mrf.mxu0
      %v846 = vadd.f32 %v782, %v845
      %v847 = vpop.f32.mrf.mxu0
      %v848 = vpop.f32.mrf.mxu0
      %v849 = vadd.f32 %v782, %v848
      %v850 = vpop.f32.mrf.mxu0
      %851 = vdwg.mxu0
      %v852 = vmax.f32 %v846, 0.0
      %v853 = vmax.f32 %v849, 0.0
      %v854 = vlaneseq
      %v855 = vshrl.u32 %v854, 7
      %v856 = vsub.s32 0, %v855
      %v857 = vrot.slane %v722, %v856
      %v858 = vmul.f32 %v852, %v857
      %v859 = vmul.f32 %v853, %v857
      %v860 = vlaneseq
      %v861 = vshrl.u32 %v860, 7
      %v862 = vsub.s32 0, %v861
      %v863 = vrot.slane %v723, %v862
      %v864 = vadd.f32 %v858, %v863
      %v865 = vadd.f32 %v859, %v863
      %v866 = vld [vmem:[%s2 + $0x30] sm:$0xf]
      %v867 = vld [vmem:[%s2 + $0x34] sm:$0xf]
      %v868 = vld [vmem:[%s2 + $0x38] sm:$0xf]
      %v869 = vld [vmem:[%s2 + $0x3c] sm:$0xf]
      %v870 = vld [vmem:[%s2 + $0x40] sm:$0xf]
      %v871 = vld [vmem:[%s2 + $0x44] sm:$0xf]
      %v872 = vld [vmem:[%s2 + $0x48] sm:$0xf]
      %v873 = vld [vmem:[%s2 + $0x4c] sm:$0xf]
      %v874 = vld [vmem:[%s3 + $0x6] sm:$0x1]
      %v875 = vld [vmem:[%s3 + $0x7] sm:$0x1]
      %v876 = vld [vmem:[%s3 + $0x8] sm:$0x1]
      %v877 = vpack.c.bf16 %v865, %v864
      %878 = vmatprep.subr.bf16.mxu0 0
      %879 = vmatpush1.bf16.msra.mxu0 0
      %880 = vmatprep.subr.bf16.mxu0 0
      %881 = vmatpush1.bf16.msra.mxu0 0
      %882 = vmatprep.subr.bf16.mxu0 0
      %883 = vmatpush1.bf16.msra.mxu0 0
      %884 = vmatprep.subr.bf16.mxu0 0
      %885 = vmatpush1.bf16.msra.mxu0 0
      %886 = vmatprep.subr.bf16.mxu0 0
      %887 = vmatpush1.bf16.msra.mxu0 0
      %888 = vmatprep.subr.bf16.mxu0 0
      %889 = vmatpush1.bf16.msra.mxu0 0
      %890 = vmatprep.subr.bf16.mxu0 0
      %891 = vmatpush1.bf16.msra.mxu0 0
      %892 = vmatprep.subr.bf16.mxu0 0
      %893 = vmatpush1.bf16.msra.mxu0 %v877
      %894 = vmatprep.subr.bf16.mxu0 0
      %895 = vmatpush2.bf16.msra.mxu0 0
      %896 = vmatprep.subr.bf16.mxu0 0
      %897 = vmatpush2.bf16.msra.mxu0 0
      %898 = vmatprep.subr.bf16.mxu0 0
      %899 = vmatpush2.bf16.msra.mxu0 0
      %900 = vmatprep.subr.bf16.mxu0 0
      %901 = vmatpush2.bf16.msra.mxu0 0
      %902 = vmatprep.subr.bf16.mxu0 0
      %903 = vmatpush2.bf16.msra.mxu0 0
      %904 = vmatprep.subr.bf16.mxu0 0
      %905 = vmatpush2.bf16.msra.mxu0 0
      %906 = vmatprep.subr.bf16.mxu0 0
      %907 = vmatpush2.bf16.msra.mxu0 0
      %908 = vmatprep.subr.bf16.mxu0 0
      %909 = vmatpush2.bf16.msra.mxu0 0
      %910 = vmatprep.mubr.bf16.mxu0 0
      %911 = vmatmul.mubr.bf16.gmra.mxu0 %v580
      %v912 = vpop.f32.mrf.mxu0
      %v913 = vadd.f32 0.0, %v912
      %v914 = vpop.f32.mrf.mxu0
      %v915 = vpop.f32.mrf.mxu0
      %v916 = vadd.f32 0.0, %v915
      %v917 = vpop.f32.mrf.mxu0
      %918 = vdwg.mxu0
      %v919 = vmul.f32 %v913, %v558
      %v920 = vmul.f32 %v916, %v560
      %923 = vrot.lane.b32.xlu0 %v864, 32
      %v924 = vpop.permute.xlu0 %923
      %925 = vrot.lane.b32.xlu0 %v865, 32
      %v926 = vpop.permute.xlu0 %925
      %v929 = vsel %vm654, %v919, %v924
      %v930 = vsel %vm654, %v920, %v926
      %v931 = vpack.c.bf16 %v930, %v929
      %v932 = vlaneseq
      %v933 = vshrl.u32 %v932, 7
      %v934 = vsub.s32 0, %v933
      %v935 = vrot.slane %v874, %v934
      %v944 = vunpack.c.l.b16 %v866
      %v945 = vunpack.c.l.b16 %v867
      %v946 = vunpack.c.l.b16 %v868
      %v947 = vunpack.c.l.b16 %v869
      %v948 = vunpack.c.l.b16 %v870
      %v949 = vunpack.c.l.b16 %v871
      %v950 = vunpack.c.l.b16 %v872
      %v951 = vunpack.c.l.b16 %v873
      %v952 = vpack.c.b16 %v945, %v944
      %v953 = vpack.c.b16 %v947, %v946
      %v954 = vpack.c.b16 %v949, %v948
      %v955 = vpack.c.b16 %v951, %v950
      %v961 = vsel %vm807, %v931, 0
      %963 = vmatprep.subr.bf16.mxu0 0
      %964 = vmatpush1.bf16.msra.mxu0 0
      %965 = vmatprep.subr.bf16.mxu0 0
      %966 = vmatpush1.bf16.msra.mxu0 0
      %967 = vmatprep.subr.bf16.mxu0 0
      %968 = vmatpush1.bf16.msra.mxu0 0
      %969 = vmatprep.subr.bf16.mxu0 0
      %970 = vmatpush1.bf16.msra.mxu0 0
      %971 = vmatprep.subr.bf16.mxu0 0
      %972 = vmatpush1.bf16.msra.mxu0 %v955
      %973 = vmatprep.subr.bf16.mxu0 0
      %974 = vmatpush1.bf16.msra.mxu0 %v954
      %975 = vmatprep.subr.bf16.mxu0 0
      %976 = vmatpush1.bf16.msra.mxu0 %v953
      %977 = vmatprep.subr.bf16.mxu0 0
      %978 = vmatpush1.bf16.msra.mxu0 %v952
      %979 = vmatprep.subr.bf16.mxu0 0
      %980 = vmatpush2.bf16.msra.mxu0 0
      %981 = vmatprep.subr.bf16.mxu0 0
      %982 = vmatpush2.bf16.msra.mxu0 0
      %983 = vmatprep.subr.bf16.mxu0 0
      %984 = vmatpush2.bf16.msra.mxu0 0
      %985 = vmatprep.subr.bf16.mxu0 0
      %986 = vmatpush2.bf16.msra.mxu0 0
      %987 = vmatprep.subr.bf16.mxu0 0
      %988 = vmatpush2.bf16.msra.mxu0 0
      %989 = vmatprep.subr.bf16.mxu0 0
      %990 = vmatpush2.bf16.msra.mxu0 0
      %991 = vmatprep.subr.bf16.mxu0 0
      %992 = vmatpush2.bf16.msra.mxu0 0
      %993 = vmatprep.subr.bf16.mxu0 0
      %994 = vmatpush2.bf16.msra.mxu0 0
      %995 = vmatprep.mubr.bf16.mxu0 0
      %996 = vmatmul.mubr.bf16.gmra.mxu0 %v961
      %v997 = vpop.f32.mrf.mxu0
      %v998 = vadd.f32 %v935, %v997
      %v999 = vpop.f32.mrf.mxu0
      %v1000 = vpop.f32.mrf.mxu0
      %v1001 = vadd.f32 %v935, %v1000
      %v1002 = vpop.f32.mrf.mxu0
      %1003 = vdwg.mxu0
      %v1004 = vmax.f32 %v998, 0.0
      %v1005 = vmax.f32 %v1001, 0.0
      %v1006 = vlaneseq
      %v1007 = vshrl.u32 %v1006, 7
      %v1008 = vsub.s32 0, %v1007
      %v1009 = vrot.slane %v875, %v1008
      %v1010 = vmul.f32 %v1004, %v1009
      %v1011 = vmul.f32 %v1005, %v1009
      %v1012 = vlaneseq
      %v1013 = vshrl.u32 %v1012, 7
      %v1014 = vsub.s32 0, %v1013
      %v1015 = vrot.slane %v876, %v1014
      %v1016 = vadd.f32 %v1010, %v1015
      %v1017 = vadd.f32 %v1011, %v1015
      %1020 = vrot.lane.b32.xlu0 %v1016, 64
      %v1021 = vpop.permute.xlu0 %1020
      %1022 = vrot.lane.b32.xlu0 %v1017, 64
      %v1023 = vpop.permute.xlu0 %1022
      %v1026 = vsel %vm654, %v711, %v924
      %v1027 = vsel %vm654, %v712, %v926
      %v1028 = vsel %vm807, %v1026, %v1021
      %v1029 = vsel %vm807, %v1027, %v1023
      %v1030 = vmax.f32 %v1028, 0.0
      %v1031 = vmax.f32 %v1029, 0.0
      %v1032 = vpack.c.bf16 %v1031, %v1030
      %v1033 = vld [vmem:[%s8] sm:$0xf]
      %v1034 = vld [vmem:[%s8 + $0x4] sm:$0xf]
      %v1035 = vld [vmem:[%s8 + $0x8] sm:$0xf]
      %v1036 = vld [vmem:[%s8 + $0xc] sm:$0xf]
      %v1037 = vld [vmem:[%s8 + $0x10] sm:$0xf]
      %v1038 = vld [vmem:[%s8 + $0x14] sm:$0xf]
      %v1039 = vld [vmem:[%s8 + $0x18] sm:$0xf]
      %v1040 = vld [vmem:[%s8 + $0x1c] sm:$0xf]
      %v1041 = vld [vmem:[%s8 + $0x20] sm:$0xf]
      %v1042 = vld [vmem:[%s8 + $0x24] sm:$0xf]
      %v1043 = vld [vmem:[%s8 + $0x28] sm:$0xf]
      %v1044 = vld [vmem:[%s8 + $0x2c] sm:$0xf]
      %v1045 = vld [vmem:[%s9] sm:$0x1]
      %v1047 = vlaneseq
      %v1048 = vshrl.u32 %v1047, 7
      %v1049 = vsub.s32 0, %v1048
      %v1050 = vrot.slane %v1045, %v1049
      %v1064 = vunpack.c.l.b16 %v1033
      %v1065 = vunpack.c.l.b16 %v1034
      %v1066 = vunpack.c.l.b16 %v1035
      %v1067 = vunpack.c.l.b16 %v1036
      %v1068 = vunpack.c.l.b16 %v1037
      %v1069 = vunpack.c.l.b16 %v1038
      %v1070 = vunpack.c.l.b16 %v1039
      %v1071 = vunpack.c.l.b16 %v1040
      %v1072 = vunpack.c.l.b16 %v1041
      %v1073 = vunpack.c.l.b16 %v1042
      %v1074 = vunpack.c.l.b16 %v1043
      %v1075 = vunpack.c.l.b16 %v1044
      %v1076 = vpack.c.b16 %v1065, %v1064
      %v1077 = vpack.c.b16 %v1067, %v1066
      %v1078 = vpack.c.b16 %v1069, %v1068
      %v1079 = vpack.c.b16 %v1071, %v1070
      %v1080 = vpack.c.b16 %v1073, %v1072
      %v1081 = vpack.c.b16 %v1075, %v1074
      %vm1088 = vcmask 785408
      %v1090 = vsel %vm1088, %v1032, 0
      %1092 = vmatprep.subr.bf16.mxu0 0
      %1093 = vmatpush1.bf16.msra.mxu0 0
      %1094 = vmatprep.subr.bf16.mxu0 0
      %1095 = vmatpush1.bf16.msra.mxu0 0
      %1096 = vmatprep.subr.bf16.mxu0 0
      %1097 = vmatpush1.bf16.msra.mxu0 %v1081
      %1098 = vmatprep.subr.bf16.mxu0 0
      %1099 = vmatpush1.bf16.msra.mxu0 %v1080
      %1100 = vmatprep.subr.bf16.mxu0 0
      %1101 = vmatpush1.bf16.msra.mxu0 %v1079
      %1102 = vmatprep.subr.bf16.mxu0 0
      %1103 = vmatpush1.bf16.msra.mxu0 %v1078
      %1104 = vmatprep.subr.bf16.mxu0 0
      %1105 = vmatpush1.bf16.msra.mxu0 %v1077
      %1106 = vmatprep.subr.bf16.mxu0 0
      %1107 = vmatpush1.bf16.msra.mxu0 %v1076
      %1108 = vmatprep.subr.bf16.mxu0 0
      %1109 = vmatpush2.bf16.msra.mxu0 0
      %1110 = vmatprep.subr.bf16.mxu0 0
      %1111 = vmatpush2.bf16.msra.mxu0 0
      %1112 = vmatprep.subr.bf16.mxu0 0
      %1113 = vmatpush2.bf16.msra.mxu0 0
      %1114 = vmatprep.subr.bf16.mxu0 0
      %1115 = vmatpush2.bf16.msra.mxu0 0
      %1116 = vmatprep.subr.bf16.mxu0 0
      %1117 = vmatpush2.bf16.msra.mxu0 0
      %1118 = vmatprep.subr.bf16.mxu0 0
      %1119 = vmatpush2.bf16.msra.mxu0 0
      %1120 = vmatprep.subr.bf16.mxu0 0
      %1121 = vmatpush2.bf16.msra.mxu0 0
      %1122 = vmatprep.subr.bf16.mxu0 0
      %1123 = vmatpush2.bf16.msra.mxu0 0
      %1124 = vmatprep.mubr.bf16.mxu0 0
      %1125 = vmatmul.mubr.bf16.gmra.mxu0 %v1090
      %v1126 = vpop.f32.mrf.mxu0
      %v1127 = vadd.f32 %v1050, %v1126
      %v1128 = vpop.f32.mrf.mxu0
      %v1129 = vpop.f32.mrf.mxu0
      %v1130 = vadd.f32 %v1050, %v1129
      %v1131 = vpop.f32.mrf.mxu0
      %1132 = vdwg.mxu0
      %vm1133 = vcmask 64512
      %v1134 = vsel %vm1133, %v1127, -inf
      %1135 = vmax.xlane.f32.xlu0 %v1134
      %v1136 = vpop.xlane.xlu0 %1135
      %v1137 = vsel %vm1133, %v1130, -inf
      %1138 = vmax.xlane.f32.xlu0 %v1137
      %v1139 = vpop.xlane.xlu0 %1138
      %v1140 = vsub.f32 %v1127, %v1136
      %v1141 = vsub.f32 %v1130, %v1139
      %v1142 = vmul.f32 %v1140, 1.442695
      %v1143 = vpow.pop %v1142
      %v1144 = vmul.f32 %v1141, 1.442695
      %v1145 = vpow.pop %v1144
      %v1146 = vsel %vm1133, %v1143, 0.0
      %1147 = vadd.xlane.f32.xlu0 %v1146
      %v1148 = vpop.xlane.xlu0 %1147
      %v1149 = vsel %vm1133, %v1145, 0.0
      %1150 = vadd.xlane.f32.xlu0 %v1149
      %v1151 = vpop.xlane.xlu0 %1150
      %v1152 = vrcp.pop %v1148
      %v1153 = vmul.f32 %v1143, %v1152
      %v1154 = vrcp.pop %v1151
      %v1155 = vmul.f32 %v1145, %v1154
      %1156 = vxpose.xlu0.b32.start [1/16] %v1153, 128
      %1157 = vxpose.xlu0.b32.cont [2/16] %v1155, 128
      %1158 = vxpose.xlu0.b32.cont [3/16] 0.0, 128
      %1159 = vxpose.xlu0.b32.cont [4/16] 0.0, 128
      %1160 = vxpose.xlu0.b32.cont [5/16] 0.0, 128
      %1161 = vxpose.xlu0.b32.cont [6/16] 0.0, 128
      %1162 = vxpose.xlu0.b32.cont [7/16] 0.0, 128
      %1163 = vxpose.xlu0.b32.cont [8/16] 0.0, 128
      %1164 = vxpose.xlu0.b32.cont [9/16] 0.0, 128
      %1165 = vxpose.xlu0.b32.cont [10/16] 0.0, 128
      %1166 = vxpose.xlu0.b32.cont [11/16] 0.0, 128
      %1167 = vxpose.xlu0.b32.cont [12/16] 0.0, 128
      %1168 = vxpose.xlu0.b32.cont [13/16] 0.0, 128
      %1169 = vxpose.xlu0.b32.cont [14/16] 0.0, 128
      %1170 = vxpose.xlu0.b32.cont [15/16] 0.0, 128
      %1171 = vxpose.xlu0.b32.end [16/16] 0.0, 128
      %v1172 = vpop.trf.xlu0
      %v1173 = vpop.trf.xlu0
      %v1174 = vpop.trf.xlu0
      %v1175 = vpop.trf.xlu0
      %v1176 = vpop.trf.xlu0
      %v1177 = vpop.trf.xlu0
      %v1178 = vpop.trf.xlu0
      %v1179 = vpop.trf.xlu0
      %v1180 = vpop.trf.xlu0
      %v1181 = vpop.trf.xlu0
      %v1182 = vpop.trf.xlu0
      %v1183 = vpop.trf.xlu0
      %v1184 = vpop.trf.xlu0
      %v1185 = vpop.trf.xlu0
      %v1186 = vpop.trf.xlu0
      %v1187 = vpop.trf.xlu0
      %v1189 = vsel %vm548, %v1172, 0
      %1191 = vmatprep.subr.mxu0 0.0
      %1192 = vmatpush1.msra.mxu0 0.0
      %1193 = vmatprep.subr.mxu0 0.0
      %1194 = vmatpush1.msra.mxu0 0.0
      %1195 = vmatprep.subr.mxu0 0.0
      %1196 = vmatpush1.msra.mxu0 0.0
      %1197 = vmatprep.subr.mxu0 0.0
      %1198 = vmatpush1.msra.mxu0 0.0
      %1199 = vmatprep.subr.mxu0 0.0
      %1200 = vmatpush1.msra.mxu0 0.0
      %1201 = vmatprep.subr.mxu0 0.0
      %1202 = vmatpush1.msra.mxu0 0.0
      %1203 = vmatprep.subr.mxu0 0.0
      %1204 = vmatpush1.msra.mxu0 0.0
      %1205 = vmatprep.subr.mxu0 0.0
      %1206 = vmatpush1.msra.mxu0 0.0
      %1207 = vmatprep.subr.mxu0 0.0
      %1208 = vmatpush1.msra.mxu0 0.0
      %1209 = vmatprep.subr.mxu0 0.0
      %1210 = vmatpush1.msra.mxu0 0.0
      %1211 = vmatprep.subr.mxu0 0.0
      %1212 = vmatpush1.msra.mxu0 0.0
      %1213 = vmatprep.subr.mxu0 0.0
      %1214 = vmatpush1.msra.mxu0 0.0
      %1215 = vmatprep.subr.mxu0 0.0
      %1216 = vmatpush1.msra.mxu0 0.0
      %1217 = vmatprep.subr.mxu0 0.0
      %1218 = vmatpush1.msra.mxu0 0.0
      %1219 = vmatprep.subr.mxu0 0.0
      %1220 = vmatpush1.msra.mxu0 %v1031
      %1221 = vmatprep.subr.mxu0 0.0
      %1222 = vmatpush1.msra.mxu0 %v1030
      %1223 = vmatprep.subr.mxu0 0.0
      %1224 = vmatpush2.msra.mxu0 0.0
      %1225 = vmatprep.subr.mxu0 0.0
      %1226 = vmatpush2.msra.mxu0 0.0
      %1227 = vmatprep.subr.mxu0 0.0
      %1228 = vmatpush2.msra.mxu0 0.0
      %1229 = vmatprep.subr.mxu0 0.0
      %1230 = vmatpush2.msra.mxu0 0.0
      %1231 = vmatprep.subr.mxu0 0.0
      %1232 = vmatpush2.msra.mxu0 0.0
      %1233 = vmatprep.subr.mxu0 0.0
      %1234 = vmatpush2.msra.mxu0 0.0
      %1235 = vmatprep.subr.mxu0 0.0
      %1236 = vmatpush2.msra.mxu0 0.0
      %1237 = vmatprep.subr.mxu0 0.0
      %1238 = vmatpush2.msra.mxu0 0.0
      %1239 = vmatprep.subr.mxu0 0.0
      %1240 = vmatpush2.msra.mxu0 0.0
      %1241 = vmatprep.subr.mxu0 0.0
      %1242 = vmatpush2.msra.mxu0 0.0
      %1243 = vmatprep.subr.mxu0 0.0
      %1244 = vmatpush2.msra.mxu0 0.0
      %1245 = vmatprep.subr.mxu0 0.0
      %1246 = vmatpush2.msra.mxu0 0.0
      %1247 = vmatprep.subr.mxu0 0.0
      %1248 = vmatpush2.msra.mxu0 0.0
      %1249 = vmatprep.subr.mxu0 0.0
      %1250 = vmatpush2.msra.mxu0 0.0
      %1251 = vmatprep.subr.mxu0 0.0
      %1252 = vmatpush2.msra.mxu0 0.0
      %1253 = vmatprep.subr.mxu0 0.0
      %1254 = vmatpush2.msra.mxu0 0.0
      %1255 = vmatprep.mubr.f32.mxu0 0.0
      %1256 = vmatmul.mubr.f32.gmra.mxu0 %v1189
      %v1257 = vpop.f32.mrf.mxu0
      %v1258 = vadd.f32 0.0, %v1257
      %v1259 = vpop.f32.mrf.mxu0
      %1260 = vdwg.mxu0
      %1261 = vmatprep.subr.mxu0 0.0
      %1262 = vmatpush1.msra.mxu0 0.0
      %1263 = vmatprep.subr.mxu0 0.0
      %1264 = vmatpush1.msra.mxu0 0.0
      %1265 = vmatprep.subr.mxu0 0.0
      %1266 = vmatpush1.msra.mxu0 0.0
      %1267 = vmatprep.subr.mxu0 0.0
      %1268 = vmatpush1.msra.mxu0 0.0
      %1269 = vmatprep.subr.mxu0 0.0
      %1270 = vmatpush1.msra.mxu0 0.0
      %1271 = vmatprep.subr.mxu0 0.0
      %1272 = vmatpush1.msra.mxu0 0.0
      %1273 = vmatprep.subr.mxu0 0.0
      %1274 = vmatpush1.msra.mxu0 0.0
      %1275 = vmatprep.subr.mxu0 0.0
      %1276 = vmatpush1.msra.mxu0 0.0
      %1277 = vmatprep.subr.mxu0 0.0
      %1278 = vmatpush1.msra.mxu0 0.0
      %1279 = vmatprep.subr.mxu0 0.0
      %1280 = vmatpush1.msra.mxu0 0.0
      %1281 = vmatprep.subr.mxu0 0.0
      %1282 = vmatpush1.msra.mxu0 0.0
      %1283 = vmatprep.subr.mxu0 0.0
      %1284 = vmatpush1.msra.mxu0 0.0
      %1285 = vmatprep.subr.mxu0 0.0
      %1286 = vmatpush1.msra.mxu0 0.0
      %1287 = vmatprep.subr.mxu0 0.0
      %1288 = vmatpush1.msra.mxu0 0.0
      %1289 = vmatprep.subr.mxu0 0.0
      %1290 = vmatpush1.msra.mxu0 %v547
      %1291 = vmatprep.subr.mxu0 0.0
      %1292 = vmatpush1.msra.mxu0 %v546
      %1293 = vmatprep.subr.mxu0 0.0
      %1294 = vmatpush2.msra.mxu0 0.0
      %1295 = vmatprep.subr.mxu0 0.0
      %1296 = vmatpush2.msra.mxu0 0.0
      %1297 = vmatprep.subr.mxu0 0.0
      %1298 = vmatpush2.msra.mxu0 0.0
      %1299 = vmatprep.subr.mxu0 0.0
      %1300 = vmatpush2.msra.mxu0 0.0
      %1301 = vmatprep.subr.mxu0 0.0
      %1302 = vmatpush2.msra.mxu0 0.0
      %1303 = vmatprep.subr.mxu0 0.0
      %1304 = vmatpush2.msra.mxu0 0.0
      %1305 = vmatprep.subr.mxu0 0.0
      %1306 = vmatpush2.msra.mxu0 0.0
      %1307 = vmatprep.subr.mxu0 0.0
      %1308 = vmatpush2.msra.mxu0 0.0
      %1309 = vmatprep.subr.mxu0 0.0
      %1310 = vmatpush2.msra.mxu0 0.0
      %1311 = vmatprep.subr.mxu0 0.0
      %1312 = vmatpush2.msra.mxu0 0.0
      %1313 = vmatprep.subr.mxu0 0.0
      %1314 = vmatpush2.msra.mxu0 0.0
      %1315 = vmatprep.subr.mxu0 0.0
      %1316 = vmatpush2.msra.mxu0 0.0
      %1317 = vmatprep.subr.mxu0 0.0
      %1318 = vmatpush2.msra.mxu0 0.0
      %1319 = vmatprep.subr.mxu0 0.0
      %1320 = vmatpush2.msra.mxu0 0.0
      %1321 = vmatprep.subr.mxu0 0.0
      %1322 = vmatpush2.msra.mxu0 0.0
      %1323 = vmatprep.subr.mxu0 0.0
      %1324 = vmatpush2.msra.mxu0 0.0
      %1325 = vmatprep.mubr.f32.mxu0 0.0
      %1326 = vmatmul.mubr.f32.gmra.mxu0 %v1189
      %v1327 = vpop.f32.mrf.mxu0
      %v1328 = vadd.f32 0.0, %v1327
      %v1329 = vpop.f32.mrf.mxu0
      %1330 = vdwg.mxu0
      %v1332 = vsel %vm548, %v1328, 0
      %1334 = vmatprep.subr.mxu0 0.0
      %1335 = vmatpush1.msra.mxu0 0.0
      %1336 = vmatprep.subr.mxu0 0.0
      %1337 = vmatpush1.msra.mxu0 0.0
      %1338 = vmatprep.subr.mxu0 0.0
      %1339 = vmatpush1.msra.mxu0 0.0
      %1340 = vmatprep.subr.mxu0 0.0
      %1341 = vmatpush1.msra.mxu0 0.0
      %1342 = vmatprep.subr.mxu0 0.0
      %1343 = vmatpush1.msra.mxu0 0.0
      %1344 = vmatprep.subr.mxu0 0.0
      %1345 = vmatpush1.msra.mxu0 0.0
      %1346 = vmatprep.subr.mxu0 0.0
      %1347 = vmatpush1.msra.mxu0 0.0
      %1348 = vmatprep.subr.mxu0 0.0
      %1349 = vmatpush1.msra.mxu0 0.0
      %1350 = vmatprep.subr.mxu0 0.0
      %1351 = vmatpush1.msra.mxu0 0.0
      %1352 = vmatprep.subr.mxu0 0.0
      %1353 = vmatpush1.msra.mxu0 0.0
      %1354 = vmatprep.subr.mxu0 0.0
      %1355 = vmatpush1.msra.mxu0 0.0
      %1356 = vmatprep.subr.mxu0 0.0
      %1357 = vmatpush1.msra.mxu0 0.0
      %1358 = vmatprep.subr.mxu0 0.0
      %1359 = vmatpush1.msra.mxu0 0.0
      %1360 = vmatprep.subr.mxu0 0.0
      %1361 = vmatpush1.msra.mxu0 0.0
      %1362 = vmatprep.subr.mxu0 0.0
      %1363 = vmatpush1.msra.mxu0 %v1155
      %1364 = vmatprep.subr.mxu0 0.0
      %1365 = vmatpush1.msra.mxu0 %v1153
      %1366 = vmatprep.subr.mxu0 0.0
      %1367 = vmatpush2.msra.mxu0 0.0
      %1368 = vmatprep.subr.mxu0 0.0
      %1369 = vmatpush2.msra.mxu0 0.0
      %1370 = vmatprep.subr.mxu0 0.0
      %1371 = vmatpush2.msra.mxu0 0.0
      %1372 = vmatprep.subr.mxu0 0.0
      %1373 = vmatpush2.msra.mxu0 0.0
      %1374 = vmatprep.subr.mxu0 0.0
      %1375 = vmatpush2.msra.mxu0 0.0
      %1376 = vmatprep.subr.mxu0 0.0
      %1377 = vmatpush2.msra.mxu0 0.0
      %1378 = vmatprep.subr.mxu0 0.0
      %1379 = vmatpush2.msra.mxu0 0.0
      %1380 = vmatprep.subr.mxu0 0.0
      %1381 = vmatpush2.msra.mxu0 0.0
      %1382 = vmatprep.subr.mxu0 0.0
      %1383 = vmatpush2.msra.mxu0 0.0
      %1384 = vmatprep.subr.mxu0 0.0
      %1385 = vmatpush2.msra.mxu0 0.0
      %1386 = vmatprep.subr.mxu0 0.0
      %1387 = vmatpush2.msra.mxu0 0.0
      %1388 = vmatprep.subr.mxu0 0.0
      %1389 = vmatpush2.msra.mxu0 0.0
      %1390 = vmatprep.subr.mxu0 0.0
      %1391 = vmatpush2.msra.mxu0 0.0
      %1392 = vmatprep.subr.mxu0 0.0
      %1393 = vmatpush2.msra.mxu0 0.0
      %1394 = vmatprep.subr.mxu0 0.0
      %1395 = vmatpush2.msra.mxu0 0.0
      %1396 = vmatprep.subr.mxu0 0.0
      %1397 = vmatpush2.msra.mxu0 0.0
      %1398 = vmatprep.mubr.f32.mxu0 0.0
      %1399 = vmatmul.mubr.f32.gmra.mxu0 %v1332
      %v1400 = vpop.f32.mrf.mxu0
      %v1401 = vadd.f32 0.0, %v1400
      %v1402 = vpop.f32.mrf.mxu0
      %1403 = vdwg.mxu0
      %v1404 = vlaneseq
      %v1405 = vshrl.u32 %v1404, 7
      %vm1406 = vcmp.eq.s32.totalorder %v1405, %v540
      %v1407 = vsel %vm1406, 1, 0
      %v1408 = vcvt.s32.f32 %v1407
      %v1409 = vmul.f32 %v1401, %v1408
      %v1410 = vsel %vm1133, %v1409, 0.0
      %1411 = vadd.xlane.f32.xlu0 %v1410
      %v1412 = vpop.xlane.xlu0 %1411
      %v1413 = vrot.slane %v1412, 4
      %v1414 = vadd.f32 %v1412, %v1413
      %v1415 = vrot.slane %v1414, 2
      %v1416 = vadd.f32 %v1414, %v1415
      %v1417 = vrot.slane %v1416, 1
      %v1418 = vadd.f32 %v1416, %v1417
      %s1419 = vtos %v1418
      %v1420 = vmul.f32 %v1153, %v1153
      %v1421 = vmul.f32 %v1155, %v1155
      %v1422 = vsel %vm1133, %v1420, 0.0
      %1423 = vadd.xlane.f32.xlu0 %v1422
      %v1424 = vpop.xlane.xlu0 %1423
      %v1425 = vsel %vm1133, %v1421, 0.0
      %1426 = vadd.xlane.f32.xlu0 %v1425
      %v1427 = vpop.xlane.xlu0 %1426
      %v1428 = vmul.f32 %v551, %v1424
      %v1429 = vmul.f32 %v554, %v1427
      %vm1430 = vcmask 7168
      %v1431 = vsel %vm1430, %v1428, 0.0
      %v1432 = vsel %vm1430, %v1429, 0.0
      %v1433 = vadd.f32 %v1431, %v1432
      %1434 = vadd.xlane.f32.xlu0 %v1433
      %v1435 = vpop.xlane.xlu0 %1434
      %v1436 = vrot.slane %v1435, 4
      %v1437 = vadd.f32 %v1435, %v1436
      %v1438 = vrot.slane %v1437, 2
      %v1439 = vadd.f32 %v1437, %v1438
      %v1440 = vrot.slane %v1439, 1
      %v1441 = vadd.f32 %v1439, %v1440
      %s1442 = vtos %v1441
      %v1443 = vstv %s1442
      %v1444 = vrcp.pop %v1443
      %s1445 = vtos %v1444
      %s1446 = smul.f32 %s1419, %s1445
      %s1447 = ssub.f32 0.0, %s1446
      %1448 = vmatprep.subr.mxu0 0.0
      %1449 = vmatpush1.msra.mxu0 0.0
      %1450 = vmatprep.subr.mxu0 0.0
      %1451 = vmatpush1.msra.mxu0 0.0
      %1452 = vmatprep.subr.mxu0 0.0
      %1453 = vmatpush1.msra.mxu0 0.0
      %1454 = vmatprep.subr.mxu0 0.0
      %1455 = vmatpush1.msra.mxu0 0.0
      %1456 = vmatprep.subr.mxu0 0.0
      %1457 = vmatpush1.msra.mxu0 0.0
      %1458 = vmatprep.subr.mxu0 0.0
      %1459 = vmatpush1.msra.mxu0 0.0
      %1460 = vmatprep.subr.mxu0 0.0
      %1461 = vmatpush1.msra.mxu0 0.0
      %1462 = vmatprep.subr.mxu0 0.0
      %1463 = vmatpush1.msra.mxu0 0.0
      %1464 = vmatprep.subr.mxu0 0.0
      %1465 = vmatpush1.msra.mxu0 0.0
      %1466 = vmatprep.subr.mxu0 0.0
      %1467 = vmatpush1.msra.mxu0 0.0
      %1468 = vmatprep.subr.mxu0 0.0
      %1469 = vmatpush1.msra.mxu0 0.0
      %1470 = vmatprep.subr.mxu0 0.0
      %1471 = vmatpush1.msra.mxu0 0.0
      %1472 = vmatprep.subr.mxu0 0.0
      %1473 = vmatpush1.msra.mxu0 0.0
      %1474 = vmatprep.subr.mxu0 0.0
      %1475 = vmatpush1.msra.mxu0 0.0
      %1476 = vmatprep.subr.mxu0 0.0
      %1477 = vmatpush1.msra.mxu0 %v1155
      %1478 = vmatprep.subr.mxu0 0.0
      %1479 = vmatpush1.msra.mxu0 %v1153
      %1480 = vmatprep.subr.mxu0 0.0
      %1481 = vmatpush2.msra.mxu0 0.0
      %1482 = vmatprep.subr.mxu0 0.0
      %1483 = vmatpush2.msra.mxu0 0.0
      %1484 = vmatprep.subr.mxu0 0.0
      %1485 = vmatpush2.msra.mxu0 0.0
      %1486 = vmatprep.subr.mxu0 0.0
      %1487 = vmatpush2.msra.mxu0 0.0
      %1488 = vmatprep.subr.mxu0 0.0
      %1489 = vmatpush2.msra.mxu0 0.0
      %1490 = vmatprep.subr.mxu0 0.0
      %1491 = vmatpush2.msra.mxu0 0.0
      %1492 = vmatprep.subr.mxu0 0.0
      %1493 = vmatpush2.msra.mxu0 0.0
      %1494 = vmatprep.subr.mxu0 0.0
      %1495 = vmatpush2.msra.mxu0 0.0
      %1496 = vmatprep.subr.mxu0 0.0
      %1497 = vmatpush2.msra.mxu0 0.0
      %1498 = vmatprep.subr.mxu0 0.0
      %1499 = vmatpush2.msra.mxu0 0.0
      %1500 = vmatprep.subr.mxu0 0.0
      %1501 = vmatpush2.msra.mxu0 0.0
      %1502 = vmatprep.subr.mxu0 0.0
      %1503 = vmatpush2.msra.mxu0 0.0
      %1504 = vmatprep.subr.mxu0 0.0
      %1505 = vmatpush2.msra.mxu0 0.0
      %1506 = vmatprep.subr.mxu0 0.0
      %1507 = vmatpush2.msra.mxu0 0.0
      %1508 = vmatprep.subr.mxu0 0.0
      %1509 = vmatpush2.msra.mxu0 0.0
      %1510 = vmatprep.subr.mxu0 0.0
      %1511 = vmatpush2.msra.mxu0 0.0
      %1512 = vmatprep.mubr.f32.mxu0 0.0
      %1513 = vmatmul.mubr.f32.gmra.mxu0 %v1189
      %v1514 = vpop.f32.mrf.mxu0
      %v1515 = vadd.f32 0.0, %v1514
      %v1516 = vpop.f32.mrf.mxu0
      %1517 = vdwg.mxu0
      %v1518 = vmul.f32 %v1515, %v1515
      %v1519 = vsel %vm1133, %v1518, 0.0
      %1520 = vadd.xlane.f32.xlu0 %v1519
      %v1521 = vpop.xlane.xlu0 %1520
      %v1522 = vrot.slane %v1521, 4
      %v1523 = vadd.f32 %v1521, %v1522
      %v1524 = vrot.slane %v1523, 2
      %v1525 = vadd.f32 %v1523, %v1524
      %v1526 = vrot.slane %v1525, 1
      %v1527 = vadd.f32 %v1525, %v1526
      %s1528 = vtos %v1527
      %v1529 = vstv %s1528
      %v1530 = vrsqrt.pop %v1529
      %v1531 = vmul.f32 %v1529, %v1530
      %vm1532 = vcmp.eq.f32.partialorder %v1529, inf
      %v1533 = vsel %vm1532, %v1529, %v1531
      %vm1534 = vcmp.eq.f32.partialorder %v1529, 0.0
      %v1535 = vand.u32 %v1529, 2147483648
      %v1536 = vsel %vm1534, %v1535, %v1533
      %s1537 = vtos %v1536
      %v1538 = vstv %s1537
      %v1539 = vrcp.pop %v1538
      %v1540 = vmul.f32 %v1515, %v1539
      %v1541 = vmul.f32 %v1408, 0.35355338
      %v1542 = vsub.f32 %v1540, %v1541
      %v1543 = vmul.f32 %v1542, %v1542
      %v1544 = vsel %vm1133, %v1543, 0.0
      %1545 = vadd.xlane.f32.xlu0 %v1544
      %v1546 = vpop.xlane.xlu0 %1545
      %v1547 = vrot.slane %v1546, 4
      %v1548 = vadd.f32 %v1546, %v1547
      %v1549 = vrot.slane %v1548, 2
      %v1550 = vadd.f32 %v1548, %v1549
      %v1551 = vrot.slane %v1550, 1
      %v1552 = vadd.f32 %v1550, %v1551
      %s1553 = vtos %v1552
      %v1554 = vstv %s1553
      %v1555 = vrsqrt.pop %v1554
      %v1556 = vmul.f32 %v1554, %v1555
      %vm1557 = vcmp.eq.f32.partialorder %v1554, inf
      %v1558 = vsel %vm1557, %v1554, %v1556
      %vm1559 = vcmp.eq.f32.partialorder %v1554, 0.0
      %v1560 = vand.u32 %v1554, 2147483648
      %v1561 = vsel %vm1559, %v1560, %v1558
      %s1562 = vtos %v1561
      %v1563 = vsub.f32 1.0, %v1408
      %v1564 = vmul.f32 %v1401, %v1563
      %v1565 = vsel %vm1133, %v1564, 0.0
      %1566 = vadd.xlane.f32.xlu0 %v1565
      %v1567 = vpop.xlane.xlu0 %1566
      %v1568 = vrsqrt.pop %v1567
      %v1569 = vmul.f32 %v1567, %v1568
      %vm1570 = vcmp.eq.f32.partialorder %v1567, inf
      %v1571 = vsel %vm1570, %v1567, %v1569
      %vm1572 = vcmp.eq.f32.partialorder %v1567, 0.0
      %v1573 = vand.u32 %v1567, 2147483648
      %v1574 = vsel %vm1572, %v1573, %v1571
      %v1575 = vadd.f32 %v1574, 1e-15
      %v1576 = vrcp.pop %v1575
      %v1577 = vmul.f32 1.0, %v1576
      %v1578 = vmul.f32 %v1408, %v1577
      %v1579 = vsel %vm1133, %v1578, 0.0
      %v1580 = vrot.slane %v1579, 4
      %v1581 = vadd.f32 %v1579, %v1580
      %v1582 = vrot.slane %v1581, 2
      %v1583 = vadd.f32 %v1581, %v1582
      %v1584 = vrot.slane %v1583, 1
      %v1585 = vadd.f32 %v1583, %v1584
      %v1586 = vmul.f32 %v1564, %v1577
      %v1587 = vmul.f32 %v1586, %v1585
      %v1588 = vsel %vm1133, %v1587, 0.0
      %1589 = vadd.xlane.f32.xlu0 %v1588
      %v1590 = vpop.xlane.xlu0 %1589
      %v1591 = vmax.f32 %v1590, 1.0
      %v1592 = vrcp.pop %v1591
      %v1593 = vmul.f32 1.0, %v1592
      %v1594 = vpack.c.bf16 %v1587, %v1587
      %v1595 = vld [vmem:[%s4] sm:$0xf]
      %v1596 = vld [vmem:[%s4 + $0x4] sm:$0xf]
      %v1597 = vld [vmem:[%s4 + $0x8] sm:$0xf]
      %v1598 = vld [vmem:[%s4 + $0xc] sm:$0xf]
      %v1599 = vld [vmem:[%s4 + $0x10] sm:$0xf]
      %v1600 = vld [vmem:[%s4 + $0x14] sm:$0xf]
      %v1601 = vld [vmem:[%s4 + $0x18] sm:$0xf]
      %v1602 = vld [vmem:[%s4 + $0x1c] sm:$0xf]
      %v1603 = vld [vmem:[%s4 + $0x20] sm:$0xf]
      %v1604 = vld [vmem:[%s4 + $0x24] sm:$0xf]
      %v1605 = vld [vmem:[%s4 + $0x28] sm:$0xf]
      %v1606 = vld [vmem:[%s4 + $0x2c] sm:$0xf]
      %v1607 = vld [vmem:[%s4 + $0x30] sm:$0xf]
      %v1608 = vld [vmem:[%s4 + $0x34] sm:$0xf]
      %v1609 = vld [vmem:[%s4 + $0x38] sm:$0xf]
      %v1610 = vld [vmem:[%s4 + $0x3c] sm:$0xf]
      %v1611 = vld [vmem:[%s4 + $0x40] sm:$0xf]
      %v1612 = vld [vmem:[%s4 + $0x44] sm:$0xf]
      %v1613 = vld [vmem:[%s4 + $0x48] sm:$0xf]
      %v1614 = vld [vmem:[%s4 + $0x4c] sm:$0xf]
      %v1615 = vld [vmem:[%s4 + $0x50] sm:$0xf]
      %v1616 = vld [vmem:[%s4 + $0x54] sm:$0xf]
      %v1617 = vld [vmem:[%s4 + $0x58] sm:$0xf]
      %v1618 = vld [vmem:[%s4 + $0x5c] sm:$0xf]
      %v1619 = vld [vmem:[%s5] sm:$0x1]
      %v1620 = vld [vmem:[%s5 + $0x1] sm:$0x1]
      %v1621 = vld [vmem:[%s5 + $0x2] sm:$0x1]
      %v1622 = vpack.c.bf16 %v1258, %v1258
      %v1624 = vsel %vm1133, %v1594, 0
      %vm1626 = vcmask 1043456
      %v1628 = vsel %vm1626, %v1622, 0
      %1630 = vmatprep.subr.bf16.mxu0 0
      %1631 = vmatpush1.bf16.msra.mxu0 0
      %1632 = vmatprep.subr.bf16.mxu0 0
      %1633 = vmatpush1.bf16.msra.mxu0 0
      %1634 = vmatprep.subr.bf16.mxu0 0
      %1635 = vmatpush1.bf16.msra.mxu0 0
      %1636 = vmatprep.subr.bf16.mxu0 0
      %1637 = vmatpush1.bf16.msra.mxu0 0
      %1638 = vmatprep.subr.bf16.mxu0 0
      %1639 = vmatpush1.bf16.msra.mxu0 0
      %1640 = vmatprep.subr.bf16.mxu0 0
      %1641 = vmatpush1.bf16.msra.mxu0 0
      %1642 = vmatprep.subr.bf16.mxu0 0
      %1643 = vmatpush1.bf16.msra.mxu0 0
      %1644 = vmatprep.subr.bf16.mxu0 0
      %1645 = vmatpush1.bf16.msra.mxu0 %v1628
      %1646 = vmatprep.subr.bf16.mxu0 0
      %1647 = vmatpush2.bf16.msra.mxu0 0
      %1648 = vmatprep.subr.bf16.mxu0 0
      %1649 = vmatpush2.bf16.msra.mxu0 0
      %1650 = vmatprep.subr.bf16.mxu0 0
      %1651 = vmatpush2.bf16.msra.mxu0 0
      %1652 = vmatprep.subr.bf16.mxu0 0
      %1653 = vmatpush2.bf16.msra.mxu0 0
      %1654 = vmatprep.subr.bf16.mxu0 0
      %1655 = vmatpush2.bf16.msra.mxu0 0
      %1656 = vmatprep.subr.bf16.mxu0 0
      %1657 = vmatpush2.bf16.msra.mxu0 0
      %1658 = vmatprep.subr.bf16.mxu0 0
      %1659 = vmatpush2.bf16.msra.mxu0 0
      %1660 = vmatprep.subr.bf16.mxu0 0
      %1661 = vmatpush2.bf16.msra.mxu0 0
      %1662 = vmatprep.mubr.bf16.mxu0 0
      %1663 = vmatmul.mubr.bf16.gmra.mxu0 %v1624
      %v1664 = vpop.f32.mrf.mxu0
      %v1665 = vadd.f32 0.0, %v1664
      %v1666 = vpop.f32.mrf.mxu0
      %v1667 = vpop.f32.mrf.mxu0
      %v1668 = vpop.f32.mrf.mxu0
      %1669 = vdwg.mxu0
      %v1670 = vmul.f32 %v1665, %v1593
      %1672 = vrot.lane.b32.xlu0 %v1258, 96
      %v1673 = vpop.permute.xlu0 %1672
      %v1675 = vsel %vm1088, %v1670, %v1673
      %v1676 = vpack.c.bf16 %v1675, %v1675
      %v1677 = vpack.c.bf16 %v1673, %v1673
      %v1678 = vlaneseq
      %v1679 = vshrl.u32 %v1678, 7
      %v1680 = vsub.s32 0, %v1679
      %v1681 = vrot.slane %v1619, %v1680
      %v1706 = vunpack.c.l.b16 %v1595
      %v1707 = vunpack.c.l.b16 %v1596
      %v1708 = vunpack.c.l.b16 %v1597
      %v1709 = vunpack.c.l.b16 %v1598
      %v1710 = vunpack.c.l.b16 %v1599
      %v1711 = vunpack.c.l.b16 %v1600
      %v1712 = vunpack.c.l.b16 %v1601
      %v1713 = vunpack.c.l.b16 %v1602
      %v1714 = vunpack.c.l.b16 %v1603
      %v1715 = vunpack.c.l.b16 %v1604
      %v1716 = vunpack.c.l.b16 %v1605
      %v1717 = vunpack.c.l.b16 %v1606
      %v1718 = vunpack.c.l.b16 %v1607
      %v1719 = vunpack.c.l.b16 %v1608
      %v1720 = vunpack.c.l.b16 %v1609
      %v1721 = vunpack.c.l.b16 %v1610
      %v1722 = vunpack.c.l.b16 %v1611
      %v1723 = vunpack.c.l.b16 %v1612
      %v1724 = vunpack.c.l.b16 %v1613
      %v1725 = vunpack.c.l.b16 %v1614
      %v1726 = vunpack.c.l.b16 %v1615
      %v1727 = vunpack.c.l.b16 %v1616
      %v1728 = vunpack.c.l.b16 %v1617
      %v1729 = vunpack.c.l.b16 %v1618
      %v1730 = vpack.c.b16 %v1707, %v1706
      %v1731 = vpack.c.b16 %v1709, %v1708
      %v1732 = vpack.c.b16 %v1711, %v1710
      %v1733 = vpack.c.b16 %v1713, %v1712
      %v1734 = vpack.c.b16 %v1715, %v1714
      %v1735 = vpack.c.b16 %v1717, %v1716
      %v1736 = vpack.c.b16 %v1719, %v1718
      %v1737 = vpack.c.b16 %v1721, %v1720
      %v1738 = vpack.c.b16 %v1723, %v1722
      %v1739 = vpack.c.b16 %v1725, %v1724
      %v1740 = vpack.c.b16 %v1727, %v1726
      %v1741 = vpack.c.b16 %v1729, %v1728
      %v1755 = vsel %vm807, %v1677, 0
      %1757 = vmatprep.subr.bf16.mxu0 0
      %1758 = vmatpush1.bf16.msra.mxu0 %v1737
      %1759 = vmatprep.subr.bf16.mxu0 0
      %1760 = vmatpush1.bf16.msra.mxu0 %v1736
      %1761 = vmatprep.subr.bf16.mxu0 0
      %1762 = vmatpush1.bf16.msra.mxu0 %v1735
      %1763 = vmatprep.subr.bf16.mxu0 0
      %1764 = vmatpush1.bf16.msra.mxu0 %v1734
      %1765 = vmatprep.subr.bf16.mxu0 0
      %1766 = vmatpush1.bf16.msra.mxu0 %v1733
      %1767 = vmatprep.subr.bf16.mxu0 0
      %1768 = vmatpush1.bf16.msra.mxu0 %v1732
      %1769 = vmatprep.subr.bf16.mxu0 0
      %1770 = vmatpush1.bf16.msra.mxu0 %v1731
      %1771 = vmatprep.subr.bf16.mxu0 0
      %1772 = vmatpush1.bf16.msra.mxu0 %v1730
      %1773 = vmatprep.subr.bf16.mxu0 0
      %1774 = vmatpush2.bf16.msra.mxu0 0
      %1775 = vmatprep.subr.bf16.mxu0 0
      %1776 = vmatpush2.bf16.msra.mxu0 0
      %1777 = vmatprep.subr.bf16.mxu0 0
      %1778 = vmatpush2.bf16.msra.mxu0 0
      %1779 = vmatprep.subr.bf16.mxu0 0
      %1780 = vmatpush2.bf16.msra.mxu0 0
      %1781 = vmatprep.subr.bf16.mxu0 0
      %1782 = vmatpush2.bf16.msra.mxu0 %v1741
      %1783 = vmatprep.subr.bf16.mxu0 0
      %1784 = vmatpush2.bf16.msra.mxu0 %v1740
      %1785 = vmatprep.subr.bf16.mxu0 0
      %1786 = vmatpush2.bf16.msra.mxu0 %v1739
      %1787 = vmatprep.subr.bf16.mxu0 0
      %1788 = vmatpush2.bf16.msra.mxu0 %v1738
      %1789 = vmatprep.mubr.bf16.mxu0 %v1755
      %1790 = vmatmul.mubr.bf16.gmra.mxu0 %v1676
      %v1791 = vpop.f32.mrf.mxu0
      %v1792 = vadd.f32 %v1681, %v1791
      %v1793 = vpop.f32.mrf.mxu0
      %v1794 = vpop.f32.mrf.mxu0
      %v1795 = vpop.f32.mrf.mxu0
      %1796 = vdwg.mxu0
      %v1797 = vmax.f32 %v1792, 0.0
      %v1798 = vlaneseq
      %v1799 = vshrl.u32 %v1798, 7
      %v1800 = vsub.s32 0, %v1799
      %v1801 = vrot.slane %v1620, %v1800
      %v1802 = vmul.f32 %v1797, %v1801
      %v1803 = vlaneseq
      %v1804 = vshrl.u32 %v1803, 7
      %v1805 = vsub.s32 0, %v1804
      %v1806 = vrot.slane %v1621, %v1805
      %v1807 = vadd.f32 %v1802, %v1806
      %v1808 = vld [vmem:[%s4 + $0x60] sm:$0xf]
      %v1809 = vld [vmem:[%s4 + $0x64] sm:$0xf]
      %v1810 = vld [vmem:[%s4 + $0x68] sm:$0xf]
      %v1811 = vld [vmem:[%s4 + $0x6c] sm:$0xf]
      %v1812 = vld [vmem:[%s4 + $0x70] sm:$0xf]
      %v1813 = vld [vmem:[%s4 + $0x74] sm:$0xf]
      %v1814 = vld [vmem:[%s4 + $0x78] sm:$0xf]
      %v1815 = vld [vmem:[%s4 + $0x7c] sm:$0xf]
      %v1816 = vld [vmem:[%s5 + $0x3] sm:$0x1]
      %v1817 = vld [vmem:[%s5 + $0x4] sm:$0x1]
      %v1818 = vld [vmem:[%s5 + $0x5] sm:$0x1]
      %v1819 = vpack.c.bf16 %v1807, %v1807
      %v1821 = vsel %vm1626, %v1819, 0
      %1823 = vmatprep.subr.bf16.mxu0 0
      %1824 = vmatpush1.bf16.msra.mxu0 0
      %1825 = vmatprep.subr.bf16.mxu0 0
      %1826 = vmatpush1.bf16.msra.mxu0 0
      %1827 = vmatprep.subr.bf16.mxu0 0
      %1828 = vmatpush1.bf16.msra.mxu0 0
      %1829 = vmatprep.subr.bf16.mxu0 0
      %1830 = vmatpush1.bf16.msra.mxu0 0
      %1831 = vmatprep.subr.bf16.mxu0 0
      %1832 = vmatpush1.bf16.msra.mxu0 0
      %1833 = vmatprep.subr.bf16.mxu0 0
      %1834 = vmatpush1.bf16.msra.mxu0 0
      %1835 = vmatprep.subr.bf16.mxu0 0
      %1836 = vmatpush1.bf16.msra.mxu0 0
      %1837 = vmatprep.subr.bf16.mxu0 0
      %1838 = vmatpush1.bf16.msra.mxu0 %v1821
      %1839 = vmatprep.subr.bf16.mxu0 0
      %1840 = vmatpush2.bf16.msra.mxu0 0
      %1841 = vmatprep.subr.bf16.mxu0 0
      %1842 = vmatpush2.bf16.msra.mxu0 0
      %1843 = vmatprep.subr.bf16.mxu0 0
      %1844 = vmatpush2.bf16.msra.mxu0 0
      %1845 = vmatprep.subr.bf16.mxu0 0
      %1846 = vmatpush2.bf16.msra.mxu0 0
      %1847 = vmatprep.subr.bf16.mxu0 0
      %1848 = vmatpush2.bf16.msra.mxu0 0
      %1849 = vmatprep.subr.bf16.mxu0 0
      %1850 = vmatpush2.bf16.msra.mxu0 0
      %1851 = vmatprep.subr.bf16.mxu0 0
      %1852 = vmatpush2.bf16.msra.mxu0 0
      %1853 = vmatprep.subr.bf16.mxu0 0
      %1854 = vmatpush2.bf16.msra.mxu0 0
      %1855 = vmatprep.mubr.bf16.mxu0 0
      %1856 = vmatmul.mubr.bf16.gmra.mxu0 %v1624
      %v1857 = vpop.f32.mrf.mxu0
      %v1858 = vadd.f32 0.0, %v1857
      %v1859 = vpop.f32.mrf.mxu0
      %v1860 = vpop.f32.mrf.mxu0
      %v1861 = vpop.f32.mrf.mxu0
      %1862 = vdwg.mxu0
      %v1863 = vmul.f32 %v1858, %v1593
      %1865 = vrot.lane.b32.xlu0 %v1807, 32
      %v1866 = vpop.permute.xlu0 %1865
      %v1868 = vsel %vm654, %v1863, %v1866
      %v1869 = vpack.c.bf16 %v1868, %v1868
      %v1870 = vlaneseq
      %v1871 = vshrl.u32 %v1870, 7
      %v1872 = vsub.s32 0, %v1871
      %v1873 = vrot.slane %v1816, %v1872
      %v1882 = vunpack.c.l.b16 %v1808
      %v1883 = vunpack.c.l.b16 %v1809
      %v1884 = vunpack.c.l.b16 %v1810
      %v1885 = vunpack.c.l.b16 %v1811
      %v1886 = vunpack.c.l.b16 %v1812
      %v1887 = vunpack.c.l.b16 %v1813
      %v1888 = vunpack.c.l.b16 %v1814
      %v1889 = vunpack.c.l.b16 %v1815
      %v1890 = vpack.c.b16 %v1883, %v1882
      %v1891 = vpack.c.b16 %v1885, %v1884
      %v1892 = vpack.c.b16 %v1887, %v1886
      %v1893 = vpack.c.b16 %v1889, %v1888
      %v1899 = vsel %vm807, %v1869, 0
      %1901 = vmatprep.subr.bf16.mxu0 0
      %1902 = vmatpush1.bf16.msra.mxu0 0
      %1903 = vmatprep.subr.bf16.mxu0 0
      %1904 = vmatpush1.bf16.msra.mxu0 0
      %1905 = vmatprep.subr.bf16.mxu0 0
      %1906 = vmatpush1.bf16.msra.mxu0 0
      %1907 = vmatprep.subr.bf16.mxu0 0
      %1908 = vmatpush1.bf16.msra.mxu0 0
      %1909 = vmatprep.subr.bf16.mxu0 0
      %1910 = vmatpush1.bf16.msra.mxu0 %v1893
      %1911 = vmatprep.subr.bf16.mxu0 0
      %1912 = vmatpush1.bf16.msra.mxu0 %v1892
      %1913 = vmatprep.subr.bf16.mxu0 0
      %1914 = vmatpush1.bf16.msra.mxu0 %v1891
      %1915 = vmatprep.subr.bf16.mxu0 0
      %1916 = vmatpush1.bf16.msra.mxu0 %v1890
      %1917 = vmatprep.subr.bf16.mxu0 0
      %1918 = vmatpush2.bf16.msra.mxu0 0
      %1919 = vmatprep.subr.bf16.mxu0 0
      %1920 = vmatpush2.bf16.msra.mxu0 0
      %1921 = vmatprep.subr.bf16.mxu0 0
      %1922 = vmatpush2.bf16.msra.mxu0 0
      %1923 = vmatprep.subr.bf16.mxu0 0
      %1924 = vmatpush2.bf16.msra.mxu0 0
      %1925 = vmatprep.subr.bf16.mxu0 0
      %1926 = vmatpush2.bf16.msra.mxu0 0
      %1927 = vmatprep.subr.bf16.mxu0 0
      %1928 = vmatpush2.bf16.msra.mxu0 0
      %1929 = vmatprep.subr.bf16.mxu0 0
      %1930 = vmatpush2.bf16.msra.mxu0 0
      %1931 = vmatprep.subr.bf16.mxu0 0
      %1932 = vmatpush2.bf16.msra.mxu0 0
      %1933 = vmatprep.mubr.bf16.mxu0 0
      %1934 = vmatmul.mubr.bf16.gmra.mxu0 %v1899
      %v1935 = vpop.f32.mrf.mxu0
      %v1936 = vadd.f32 %v1873, %v1935
      %v1937 = vpop.f32.mrf.mxu0
      %v1938 = vpop.f32.mrf.mxu0
      %v1939 = vpop.f32.mrf.mxu0
      %1940 = vdwg.mxu0
      %v1941 = vmax.f32 %v1936, 0.0
      %v1942 = vlaneseq
      %v1943 = vshrl.u32 %v1942, 7
      %v1944 = vsub.s32 0, %v1943
      %v1945 = vrot.slane %v1817, %v1944
      %v1946 = vmul.f32 %v1941, %v1945
      %v1947 = vlaneseq
      %v1948 = vshrl.u32 %v1947, 7
      %v1949 = vsub.s32 0, %v1948
      %v1950 = vrot.slane %v1818, %v1949
      %v1951 = vadd.f32 %v1946, %v1950
      %v1952 = vld [vmem:[%s4 + $0x80] sm:$0xf]
      %v1953 = vld [vmem:[%s4 + $0x84] sm:$0xf]
      %v1954 = vld [vmem:[%s4 + $0x88] sm:$0xf]
      %v1955 = vld [vmem:[%s4 + $0x8c] sm:$0xf]
      %v1956 = vld [vmem:[%s4 + $0x90] sm:$0xf]
      %v1957 = vld [vmem:[%s4 + $0x94] sm:$0xf]
      %v1958 = vld [vmem:[%s4 + $0x98] sm:$0xf]
      %v1959 = vld [vmem:[%s4 + $0x9c] sm:$0xf]
      %v1960 = vld [vmem:[%s5 + $0x6] sm:$0x1]
      %v1961 = vld [vmem:[%s5 + $0x7] sm:$0x1]
      %v1962 = vld [vmem:[%s5 + $0x8] sm:$0x1]
      %v1963 = vpack.c.bf16 %v1951, %v1951
      %v1965 = vsel %vm1626, %v1963, 0
      %1967 = vmatprep.subr.bf16.mxu0 0
      %1968 = vmatpush1.bf16.msra.mxu0 0
      %1969 = vmatprep.subr.bf16.mxu0 0
      %1970 = vmatpush1.bf16.msra.mxu0 0
      %1971 = vmatprep.subr.bf16.mxu0 0
      %1972 = vmatpush1.bf16.msra.mxu0 0
      %1973 = vmatprep.subr.bf16.mxu0 0
      %1974 = vmatpush1.bf16.msra.mxu0 0
      %1975 = vmatprep.subr.bf16.mxu0 0
      %1976 = vmatpush1.bf16.msra.mxu0 0
      %1977 = vmatprep.subr.bf16.mxu0 0
      %1978 = vmatpush1.bf16.msra.mxu0 0
      %1979 = vmatprep.subr.bf16.mxu0 0
      %1980 = vmatpush1.bf16.msra.mxu0 0
      %1981 = vmatprep.subr.bf16.mxu0 0
      %1982 = vmatpush1.bf16.msra.mxu0 %v1965
      %1983 = vmatprep.subr.bf16.mxu0 0
      %1984 = vmatpush2.bf16.msra.mxu0 0
      %1985 = vmatprep.subr.bf16.mxu0 0
      %1986 = vmatpush2.bf16.msra.mxu0 0
      %1987 = vmatprep.subr.bf16.mxu0 0
      %1988 = vmatpush2.bf16.msra.mxu0 0
      %1989 = vmatprep.subr.bf16.mxu0 0
      %1990 = vmatpush2.bf16.msra.mxu0 0
      %1991 = vmatprep.subr.bf16.mxu0 0
      %1992 = vmatpush2.bf16.msra.mxu0 0
      %1993 = vmatprep.subr.bf16.mxu0 0
      %1994 = vmatpush2.bf16.msra.mxu0 0
      %1995 = vmatprep.subr.bf16.mxu0 0
      %1996 = vmatpush2.bf16.msra.mxu0 0
      %1997 = vmatprep.subr.bf16.mxu0 0
      %1998 = vmatpush2.bf16.msra.mxu0 0
      %1999 = vmatprep.mubr.bf16.mxu0 0
      %2000 = vmatmul.mubr.bf16.gmra.mxu0 %v1624
      %v2001 = vpop.f32.mrf.mxu0
      %v2002 = vadd.f32 0.0, %v2001
      %v2003 = vpop.f32.mrf.mxu0
      %v2004 = vpop.f32.mrf.mxu0
      %v2005 = vpop.f32.mrf.mxu0
      %2006 = vdwg.mxu0
      %v2007 = vmul.f32 %v2002, %v1593
      %2009 = vrot.lane.b32.xlu0 %v1951, 32
      %v2010 = vpop.permute.xlu0 %2009
      %v2012 = vsel %vm654, %v2007, %v2010
      %v2013 = vpack.c.bf16 %v2012, %v2012
      %v2014 = vlaneseq
      %v2015 = vshrl.u32 %v2014, 7
      %v2016 = vsub.s32 0, %v2015
      %v2017 = vrot.slane %v1960, %v2016
      %v2026 = vunpack.c.l.b16 %v1952
      %v2027 = vunpack.c.l.b16 %v1953
      %v2028 = vunpack.c.l.b16 %v1954
      %v2029 = vunpack.c.l.b16 %v1955
      %v2030 = vunpack.c.l.b16 %v1956
      %v2031 = vunpack.c.l.b16 %v1957
      %v2032 = vunpack.c.l.b16 %v1958
      %v2033 = vunpack.c.l.b16 %v1959
      %v2034 = vpack.c.b16 %v2027, %v2026
      %v2035 = vpack.c.b16 %v2029, %v2028
      %v2036 = vpack.c.b16 %v2031, %v2030
      %v2037 = vpack.c.b16 %v2033, %v2032
      %v2043 = vsel %vm807, %v2013, 0
      %2045 = vmatprep.subr.bf16.mxu0 0
      %2046 = vmatpush1.bf16.msra.mxu0 0
      %2047 = vmatprep.subr.bf16.mxu0 0
      %2048 = vmatpush1.bf16.msra.mxu0 0
      %2049 = vmatprep.subr.bf16.mxu0 0
      %2050 = vmatpush1.bf16.msra.mxu0 0
      %2051 = vmatprep.subr.bf16.mxu0 0
      %2052 = vmatpush1.bf16.msra.mxu0 0
      %2053 = vmatprep.subr.bf16.mxu0 0
      %2054 = vmatpush1.bf16.msra.mxu0 %v2037
      %2055 = vmatprep.subr.bf16.mxu0 0
      %2056 = vmatpush1.bf16.msra.mxu0 %v2036
      %2057 = vmatprep.subr.bf16.mxu0 0
      %2058 = vmatpush1.bf16.msra.mxu0 %v2035
      %2059 = vmatprep.subr.bf16.mxu0 0
      %2060 = vmatpush1.bf16.msra.mxu0 %v2034
      %2061 = vmatprep.subr.bf16.mxu0 0
      %2062 = vmatpush2.bf16.msra.mxu0 0
      %2063 = vmatprep.subr.bf16.mxu0 0
      %2064 = vmatpush2.bf16.msra.mxu0 0
      %2065 = vmatprep.subr.bf16.mxu0 0
      %2066 = vmatpush2.bf16.msra.mxu0 0
      %2067 = vmatprep.subr.bf16.mxu0 0
      %2068 = vmatpush2.bf16.msra.mxu0 0
      %2069 = vmatprep.subr.bf16.mxu0 0
      %2070 = vmatpush2.bf16.msra.mxu0 0
      %2071 = vmatprep.subr.bf16.mxu0 0
      %2072 = vmatpush2.bf16.msra.mxu0 0
      %2073 = vmatprep.subr.bf16.mxu0 0
      %2074 = vmatpush2.bf16.msra.mxu0 0
      %2075 = vmatprep.subr.bf16.mxu0 0
      %2076 = vmatpush2.bf16.msra.mxu0 0
      %2077 = vmatprep.mubr.bf16.mxu0 0
      %2078 = vmatmul.mubr.bf16.gmra.mxu0 %v2043
      %v2079 = vpop.f32.mrf.mxu0
      %v2080 = vadd.f32 %v2017, %v2079
      %v2081 = vpop.f32.mrf.mxu0
      %v2082 = vpop.f32.mrf.mxu0
      %v2083 = vpop.f32.mrf.mxu0
      %2084 = vdwg.mxu0
      %v2085 = vmax.f32 %v2080, 0.0
      %v2086 = vlaneseq
      %v2087 = vshrl.u32 %v2086, 7
      %v2088 = vsub.s32 0, %v2087
      %v2089 = vrot.slane %v1961, %v2088
      %v2090 = vmul.f32 %v2085, %v2089
      %v2091 = vlaneseq
      %v2092 = vshrl.u32 %v2091, 7
      %v2093 = vsub.s32 0, %v2092
      %v2094 = vrot.slane %v1962, %v2093
      %v2095 = vadd.f32 %v2090, %v2094
      %2097 = vrot.lane.b32.xlu0 %v2095, 64
      %v2098 = vpop.permute.xlu0 %2097
      %v2100 = vsel %vm654, %v1807, %v2010
      %v2101 = vsel %vm807, %v2100, %v2098
      %v2102 = vmax.f32 %v2101, 0.0
      %v2103 = vpack.c.bf16 %v2102, %v2102
      %v2104 = vld [vmem:[%s10] sm:$0xf]
      %v2105 = vld [vmem:[%s10 + $0x4] sm:$0xf]
      %v2106 = vld [vmem:[%s10 + $0x8] sm:$0xf]
      %v2107 = vld [vmem:[%s10 + $0xc] sm:$0xf]
      %v2108 = vld [vmem:[%s10 + $0x10] sm:$0xf]
      %v2109 = vld [vmem:[%s10 + $0x14] sm:$0xf]
      %v2110 = vld [vmem:[%s10 + $0x18] sm:$0xf]
      %v2111 = vld [vmem:[%s10 + $0x1c] sm:$0xf]
      %v2112 = vld [vmem:[%s10 + $0x20] sm:$0xf]
      %v2113 = vld [vmem:[%s10 + $0x24] sm:$0xf]
      %v2114 = vld [vmem:[%s10 + $0x28] sm:$0xf]
      %v2115 = vld [vmem:[%s10 + $0x2c] sm:$0xf]
      %v2116 = vld [vmem:[%s11] sm:$0x1]
      %v2118 = vlaneseq
      %v2119 = vshrl.u32 %v2118, 7
      %v2120 = vsub.s32 0, %v2119
      %v2121 = vrot.slane %v2116, %v2120
      %v2135 = vunpack.c.l.b16 %v2104
      %v2136 = vunpack.c.l.b16 %v2105
      %v2137 = vunpack.c.l.b16 %v2106
      %v2138 = vunpack.c.l.b16 %v2107
      %v2139 = vunpack.c.l.b16 %v2108
      %v2140 = vunpack.c.l.b16 %v2109
      %v2141 = vunpack.c.l.b16 %v2110
      %v2142 = vunpack.c.l.b16 %v2111
      %v2143 = vunpack.c.l.b16 %v2112
      %v2144 = vunpack.c.l.b16 %v2113
      %v2145 = vunpack.c.l.b16 %v2114
      %v2146 = vunpack.c.l.b16 %v2115
      %v2147 = vpack.c.b16 %v2136, %v2135
      %v2148 = vpack.c.b16 %v2138, %v2137
      %v2149 = vpack.c.b16 %v2140, %v2139
      %v2150 = vpack.c.b16 %v2142, %v2141
      %v2151 = vpack.c.b16 %v2144, %v2143
      %v2152 = vpack.c.b16 %v2146, %v2145
      %v2160 = vsel %vm1088, %v2103, 0
      %2162 = vmatprep.subr.bf16.mxu0 0
      %2163 = vmatpush1.bf16.msra.mxu0 0
      %2164 = vmatprep.subr.bf16.mxu0 0
      %2165 = vmatpush1.bf16.msra.mxu0 0
      %2166 = vmatprep.subr.bf16.mxu0 0
      %2167 = vmatpush1.bf16.msra.mxu0 %v2152
      %2168 = vmatprep.subr.bf16.mxu0 0
      %2169 = vmatpush1.bf16.msra.mxu0 %v2151
      %2170 = vmatprep.subr.bf16.mxu0 0
      %2171 = vmatpush1.bf16.msra.mxu0 %v2150
      %2172 = vmatprep.subr.bf16.mxu0 0
      %2173 = vmatpush1.bf16.msra.mxu0 %v2149
      %2174 = vmatprep.subr.bf16.mxu0 0
      %2175 = vmatpush1.bf16.msra.mxu0 %v2148
      %2176 = vmatprep.subr.bf16.mxu0 0
      %2177 = vmatpush1.bf16.msra.mxu0 %v2147
      %2178 = vmatprep.subr.bf16.mxu0 0
      %2179 = vmatpush2.bf16.msra.mxu0 0
      %2180 = vmatprep.subr.bf16.mxu0 0
      %2181 = vmatpush2.bf16.msra.mxu0 0
      %2182 = vmatprep.subr.bf16.mxu0 0
      %2183 = vmatpush2.bf16.msra.mxu0 0
      %2184 = vmatprep.subr.bf16.mxu0 0
      %2185 = vmatpush2.bf16.msra.mxu0 0
      %2186 = vmatprep.subr.bf16.mxu0 0
      %2187 = vmatpush2.bf16.msra.mxu0 0
      %2188 = vmatprep.subr.bf16.mxu0 0
      %2189 = vmatpush2.bf16.msra.mxu0 0
      %2190 = vmatprep.subr.bf16.mxu0 0
      %2191 = vmatpush2.bf16.msra.mxu0 0
      %2192 = vmatprep.subr.bf16.mxu0 0
      %2193 = vmatpush2.bf16.msra.mxu0 0
      %2194 = vmatprep.mubr.bf16.mxu0 0
      %2195 = vmatmul.mubr.bf16.gmra.mxu0 %v2160
      %v2196 = vpop.f32.mrf.mxu0
      %v2197 = vadd.f32 %v2121, %v2196
      %v2198 = vpop.f32.mrf.mxu0
      %v2199 = vpop.f32.mrf.mxu0
      %v2200 = vpop.f32.mrf.mxu0
      %2201 = vdwg.mxu0
      %vm2202 = vcmask 31744
      %v2203 = vsel %vm2202, %v2197, -inf
      %2204 = vmax.xlane.f32.xlu0 %v2203
      %v2205 = vpop.xlane.xlu0 %2204
      %v2206 = vsub.f32 %v2197, %v2205
      %v2207 = vmul.f32 %v2206, 1.442695
      %v2208 = vpow.pop %v2207
      %v2209 = vsel %vm2202, %v2208, 0.0
      %2210 = vadd.xlane.f32.xlu0 %v2209
      %v2211 = vpop.xlane.xlu0 %2210
      %v2212 = vrcp.pop %v2211
      %v2213 = vmul.f32 %v2208, %v2212
      %2214 = vxpose.xlu0.b32.start [1/16] %v2213, 128
      %2215 = vxpose.xlu0.b32.cont [2/16] 0.0, 128
      %2216 = vxpose.xlu0.b32.cont [3/16] 0.0, 128
      %2217 = vxpose.xlu0.b32.cont [4/16] 0.0, 128
      %2218 = vxpose.xlu0.b32.cont [5/16] 0.0, 128
      %2219 = vxpose.xlu0.b32.cont [6/16] 0.0, 128
      %2220 = vxpose.xlu0.b32.cont [7/16] 0.0, 128
      %2221 = vxpose.xlu0.b32.cont [8/16] 0.0, 128
      %2222 = vxpose.xlu0.b32.cont [9/16] 0.0, 128
      %2223 = vxpose.xlu0.b32.cont [10/16] 0.0, 128
      %2224 = vxpose.xlu0.b32.cont [11/16] 0.0, 128
      %2225 = vxpose.xlu0.b32.cont [12/16] 0.0, 128
      %2226 = vxpose.xlu0.b32.cont [13/16] 0.0, 128
      %2227 = vxpose.xlu0.b32.cont [14/16] 0.0, 128
      %2228 = vxpose.xlu0.b32.cont [15/16] 0.0, 128
      %2229 = vxpose.xlu0.b32.end [16/16] 0.0, 128
      %v2230 = vpop.trf.xlu0
      %v2231 = vpop.trf.xlu0
      %v2232 = vpop.trf.xlu0
      %v2233 = vpop.trf.xlu0
      %v2234 = vpop.trf.xlu0
      %v2235 = vpop.trf.xlu0
      %v2236 = vpop.trf.xlu0
      %v2237 = vpop.trf.xlu0
      %v2238 = vpop.trf.xlu0
      %v2239 = vpop.trf.xlu0
      %v2240 = vpop.trf.xlu0
      %v2241 = vpop.trf.xlu0
      %v2242 = vpop.trf.xlu0
      %v2243 = vpop.trf.xlu0
      %v2244 = vpop.trf.xlu0
      %v2245 = vpop.trf.xlu0
      %v2247 = vsel %vm1133, %v2230, 0
      %2249 = vmatprep.subr.mxu0 0.0
      %2250 = vmatpush1.msra.mxu0 0.0
      %2251 = vmatprep.subr.mxu0 0.0
      %2252 = vmatpush1.msra.mxu0 0.0
      %2253 = vmatprep.subr.mxu0 0.0
      %2254 = vmatpush1.msra.mxu0 0.0
      %2255 = vmatprep.subr.mxu0 0.0
      %2256 = vmatpush1.msra.mxu0 0.0
      %2257 = vmatprep.subr.mxu0 0.0
      %2258 = vmatpush1.msra.mxu0 0.0
      %2259 = vmatprep.subr.mxu0 0.0
      %2260 = vmatpush1.msra.mxu0 0.0
      %2261 = vmatprep.subr.mxu0 0.0
      %2262 = vmatpush1.msra.mxu0 0.0
      %2263 = vmatprep.subr.mxu0 0.0
      %2264 = vmatpush1.msra.mxu0 0.0
      %2265 = vmatprep.subr.mxu0 0.0
      %2266 = vmatpush1.msra.mxu0 0.0
      %2267 = vmatprep.subr.mxu0 0.0
      %2268 = vmatpush1.msra.mxu0 0.0
      %2269 = vmatprep.subr.mxu0 0.0
      %2270 = vmatpush1.msra.mxu0 0.0
      %2271 = vmatprep.subr.mxu0 0.0
      %2272 = vmatpush1.msra.mxu0 0.0
      %2273 = vmatprep.subr.mxu0 0.0
      %2274 = vmatpush1.msra.mxu0 0.0
      %2275 = vmatprep.subr.mxu0 0.0
      %2276 = vmatpush1.msra.mxu0 0.0
      %2277 = vmatprep.subr.mxu0 0.0
      %2278 = vmatpush1.msra.mxu0 0.0
      %2279 = vmatprep.subr.mxu0 0.0
      %2280 = vmatpush1.msra.mxu0 %v2102
      %2281 = vmatprep.subr.mxu0 0.0
      %2282 = vmatpush2.msra.mxu0 0.0
      %2283 = vmatprep.subr.mxu0 0.0
      %2284 = vmatpush2.msra.mxu0 0.0
      %2285 = vmatprep.subr.mxu0 0.0
      %2286 = vmatpush2.msra.mxu0 0.0
      %2287 = vmatprep.subr.mxu0 0.0
      %2288 = vmatpush2.msra.mxu0 0.0
      %2289 = vmatprep.subr.mxu0 0.0
      %2290 = vmatpush2.msra.mxu0 0.0
      %2291 = vmatprep.subr.mxu0 0.0
      %2292 = vmatpush2.msra.mxu0 0.0
      %2293 = vmatprep.subr.mxu0 0.0
      %2294 = vmatpush2.msra.mxu0 0.0
      %2295 = vmatprep.subr.mxu0 0.0
      %2296 = vmatpush2.msra.mxu0 0.0
      %2297 = vmatprep.subr.mxu0 0.0
      %2298 = vmatpush2.msra.mxu0 0.0
      %2299 = vmatprep.subr.mxu0 0.0
      %2300 = vmatpush2.msra.mxu0 0.0
      %2301 = vmatprep.subr.mxu0 0.0
      %2302 = vmatpush2.msra.mxu0 0.0
      %2303 = vmatprep.subr.mxu0 0.0
      %2304 = vmatpush2.msra.mxu0 0.0
      %2305 = vmatprep.subr.mxu0 0.0
      %2306 = vmatpush2.msra.mxu0 0.0
      %2307 = vmatprep.subr.mxu0 0.0
      %2308 = vmatpush2.msra.mxu0 0.0
      %2309 = vmatprep.subr.mxu0 0.0
      %2310 = vmatpush2.msra.mxu0 0.0
      %2311 = vmatprep.subr.mxu0 0.0
      %2312 = vmatpush2.msra.mxu0 0.0
      %2313 = vmatprep.mubr.f32.mxu0 0.0
      %2314 = vmatmul.mubr.f32.gmra.mxu0 %v2247
      %v2315 = vpop.f32.mrf.mxu0
      %v2316 = vadd.f32 0.0, %v2315
      %v2317 = vpop.f32.mrf.mxu0
      %2318 = vdwg.mxu0
      %2319 = vmatprep.subr.mxu0 0.0
      %2320 = vmatpush1.msra.mxu0 0.0
      %2321 = vmatprep.subr.mxu0 0.0
      %2322 = vmatpush1.msra.mxu0 0.0
      %2323 = vmatprep.subr.mxu0 0.0
      %2324 = vmatpush1.msra.mxu0 0.0
      %2325 = vmatprep.subr.mxu0 0.0
      %2326 = vmatpush1.msra.mxu0 0.0
      %2327 = vmatprep.subr.mxu0 0.0
      %2328 = vmatpush1.msra.mxu0 0.0
      %2329 = vmatprep.subr.mxu0 0.0
      %2330 = vmatpush1.msra.mxu0 0.0
      %2331 = vmatprep.subr.mxu0 0.0
      %2332 = vmatpush1.msra.mxu0 0.0
      %2333 = vmatprep.subr.mxu0 0.0
      %2334 = vmatpush1.msra.mxu0 0.0
      %2335 = vmatprep.subr.mxu0 0.0
      %2336 = vmatpush1.msra.mxu0 0.0
      %2337 = vmatprep.subr.mxu0 0.0
      %2338 = vmatpush1.msra.mxu0 0.0
      %2339 = vmatprep.subr.mxu0 0.0
      %2340 = vmatpush1.msra.mxu0 0.0
      %2341 = vmatprep.subr.mxu0 0.0
      %2342 = vmatpush1.msra.mxu0 0.0
      %2343 = vmatprep.subr.mxu0 0.0
      %2344 = vmatpush1.msra.mxu0 0.0
      %2345 = vmatprep.subr.mxu0 0.0
      %2346 = vmatpush1.msra.mxu0 0.0
      %2347 = vmatprep.subr.mxu0 0.0
      %2348 = vmatpush1.msra.mxu0 0.0
      %2349 = vmatprep.subr.mxu0 0.0
      %2350 = vmatpush1.msra.mxu0 %v1587
      %2351 = vmatprep.subr.mxu0 0.0
      %2352 = vmatpush2.msra.mxu0 0.0
      %2353 = vmatprep.subr.mxu0 0.0
      %2354 = vmatpush2.msra.mxu0 0.0
      %2355 = vmatprep.subr.mxu0 0.0
      %2356 = vmatpush2.msra.mxu0 0.0
      %2357 = vmatprep.subr.mxu0 0.0
      %2358 = vmatpush2.msra.mxu0 0.0
      %2359 = vmatprep.subr.mxu0 0.0
      %2360 = vmatpush2.msra.mxu0 0.0
      %2361 = vmatprep.subr.mxu0 0.0
      %2362 = vmatpush2.msra.mxu0 0.0
      %2363 = vmatprep.subr.mxu0 0.0
      %2364 = vmatpush2.msra.mxu0 0.0
      %2365 = vmatprep.subr.mxu0 0.0
      %2366 = vmatpush2.msra.mxu0 0.0
      %2367 = vmatprep.subr.mxu0 0.0
      %2368 = vmatpush2.msra.mxu0 0.0
      %2369 = vmatprep.subr.mxu0 0.0
      %2370 = vmatpush2.msra.mxu0 0.0
      %2371 = vmatprep.subr.mxu0 0.0
      %2372 = vmatpush2.msra.mxu0 0.0
      %2373 = vmatprep.subr.mxu0 0.0
      %2374 = vmatpush2.msra.mxu0 0.0
      %2375 = vmatprep.subr.mxu0 0.0
      %2376 = vmatpush2.msra.mxu0 0.0
      %2377 = vmatprep.subr.mxu0 0.0
      %2378 = vmatpush2.msra.mxu0 0.0
      %2379 = vmatprep.subr.mxu0 0.0
      %2380 = vmatpush2.msra.mxu0 0.0
      %2381 = vmatprep.subr.mxu0 0.0
      %2382 = vmatpush2.msra.mxu0 0.0
      %2383 = vmatprep.mubr.f32.mxu0 0.0
      %2384 = vmatmul.mubr.f32.gmra.mxu0 %v2247
      %v2385 = vpop.f32.mrf.mxu0
      %v2386 = vadd.f32 0.0, %v2385
      %v2387 = vpop.f32.mrf.mxu0
      %2388 = vdwg.mxu0
      %v2390 = vsel %vm1133, %v2386, 0
      %2392 = vmatprep.subr.mxu0 0.0
      %2393 = vmatpush1.msra.mxu0 0.0
      %2394 = vmatprep.subr.mxu0 0.0
      %2395 = vmatpush1.msra.mxu0 0.0
      %2396 = vmatprep.subr.mxu0 0.0
      %2397 = vmatpush1.msra.mxu0 0.0
      %2398 = vmatprep.subr.mxu0 0.0
      %2399 = vmatpush1.msra.mxu0 0.0
      %2400 = vmatprep.subr.mxu0 0.0
      %2401 = vmatpush1.msra.mxu0 0.0
      %2402 = vmatprep.subr.mxu0 0.0
      %2403 = vmatpush1.msra.mxu0 0.0
      %2404 = vmatprep.subr.mxu0 0.0
      %2405 = vmatpush1.msra.mxu0 0.0
      %2406 = vmatprep.subr.mxu0 0.0
      %2407 = vmatpush1.msra.mxu0 0.0
      %2408 = vmatprep.subr.mxu0 0.0
      %2409 = vmatpush1.msra.mxu0 0.0
      %2410 = vmatprep.subr.mxu0 0.0
      %2411 = vmatpush1.msra.mxu0 0.0
      %2412 = vmatprep.subr.mxu0 0.0
      %2413 = vmatpush1.msra.mxu0 0.0
      %2414 = vmatprep.subr.mxu0 0.0
      %2415 = vmatpush1.msra.mxu0 0.0
      %2416 = vmatprep.subr.mxu0 0.0
      %2417 = vmatpush1.msra.mxu0 0.0
      %2418 = vmatprep.subr.mxu0 0.0
      %2419 = vmatpush1.msra.mxu0 0.0
      %2420 = vmatprep.subr.mxu0 0.0
      %2421 = vmatpush1.msra.mxu0 0.0
      %2422 = vmatprep.subr.mxu0 0.0
      %2423 = vmatpush1.msra.mxu0 %v2213
      %2424 = vmatprep.subr.mxu0 0.0
      %2425 = vmatpush2.msra.mxu0 0.0
      %2426 = vmatprep.subr.mxu0 0.0
      %2427 = vmatpush2.msra.mxu0 0.0
      %2428 = vmatprep.subr.mxu0 0.0
      %2429 = vmatpush2.msra.mxu0 0.0
      %2430 = vmatprep.subr.mxu0 0.0
      %2431 = vmatpush2.msra.mxu0 0.0
      %2432 = vmatprep.subr.mxu0 0.0
      %2433 = vmatpush2.msra.mxu0 0.0
      %2434 = vmatprep.subr.mxu0 0.0
      %2435 = vmatpush2.msra.mxu0 0.0
      %2436 = vmatprep.subr.mxu0 0.0
      %2437 = vmatpush2.msra.mxu0 0.0
      %2438 = vmatprep.subr.mxu0 0.0
      %2439 = vmatpush2.msra.mxu0 0.0
      %2440 = vmatprep.subr.mxu0 0.0
      %2441 = vmatpush2.msra.mxu0 0.0
      %2442 = vmatprep.subr.mxu0 0.0
      %2443 = vmatpush2.msra.mxu0 0.0
      %2444 = vmatprep.subr.mxu0 0.0
      %2445 = vmatpush2.msra.mxu0 0.0
      %2446 = vmatprep.subr.mxu0 0.0
      %2447 = vmatpush2.msra.mxu0 0.0
      %2448 = vmatprep.subr.mxu0 0.0
      %2449 = vmatpush2.msra.mxu0 0.0
      %2450 = vmatprep.subr.mxu0 0.0
      %2451 = vmatpush2.msra.mxu0 0.0
      %2452 = vmatprep.subr.mxu0 0.0
      %2453 = vmatpush2.msra.mxu0 0.0
      %2454 = vmatprep.subr.mxu0 0.0
      %2455 = vmatpush2.msra.mxu0 0.0
      %2456 = vmatprep.mubr.f32.mxu0 0.0
      %2457 = vmatmul.mubr.f32.gmra.mxu0 %v2390
      %v2458 = vpop.f32.mrf.mxu0
      %v2459 = vadd.f32 0.0, %v2458
      %v2460 = vpop.f32.mrf.mxu0
      %2461 = vdwg.mxu0
      %v2462 = vmul.f32 %v2459, %v1408
      %vm2463 = vcmask 27648
      %v2464 = vsel %vm2463, %v2462, 0.0
      %2465 = vadd.xlane.f32.xlu0 %v2464
      %v2466 = vpop.xlane.xlu0 %2465
      %v2467 = vrot.slane %v2466, 4
      %v2468 = vadd.f32 %v2466, %v2467
      %v2469 = vrot.slane %v2468, 2
      %v2470 = vadd.f32 %v2468, %v2469
      %v2471 = vrot.slane %v2470, 1
      %v2472 = vadd.f32 %v2470, %v2471
      %s2473 = vtos %v2472
      %v2474 = vmul.f32 %v2213, %v2213
      %v2475 = vsel %vm2202, %v2474, 0.0
      %2476 = vadd.xlane.f32.xlu0 %v2475
      %v2477 = vpop.xlane.xlu0 %2476
      %v2478 = vmul.f32 %v1590, %v2477
      %v2479 = vsel %vm1430, %v2478, 0.0
      %2480 = vadd.xlane.f32.xlu0 %v2479
      %v2481 = vpop.xlane.xlu0 %2480
      %v2482 = vrot.slane %v2481, 4
      %v2483 = vadd.f32 %v2481, %v2482
      %v2484 = vrot.slane %v2483, 2
      %v2485 = vadd.f32 %v2483, %v2484
      %v2486 = vrot.slane %v2485, 1
      %v2487 = vadd.f32 %v2485, %v2486
      %s2488 = vtos %v2487
      %v2489 = vstv %s2488
      %v2490 = vrcp.pop %v2489
      %s2491 = vtos %v2490
      %s2492 = smul.f32 %s2473, %s2491
      %s2493 = ssub.f32 0.0, %s2492
      %2494 = vmatprep.subr.mxu0 0.0
      %2495 = vmatpush1.msra.mxu0 0.0
      %2496 = vmatprep.subr.mxu0 0.0
      %2497 = vmatpush1.msra.mxu0 0.0
      %2498 = vmatprep.subr.mxu0 0.0
      %2499 = vmatpush1.msra.mxu0 0.0
      %2500 = vmatprep.subr.mxu0 0.0
      %2501 = vmatpush1.msra.mxu0 0.0
      %2502 = vmatprep.subr.mxu0 0.0
      %2503 = vmatpush1.msra.mxu0 0.0
      %2504 = vmatprep.subr.mxu0 0.0
      %2505 = vmatpush1.msra.mxu0 0.0
      %2506 = vmatprep.subr.mxu0 0.0
      %2507 = vmatpush1.msra.mxu0 0.0
      %2508 = vmatprep.subr.mxu0 0.0
      %2509 = vmatpush1.msra.mxu0 0.0
      %2510 = vmatprep.subr.mxu0 0.0
      %2511 = vmatpush1.msra.mxu0 0.0
      %2512 = vmatprep.subr.mxu0 0.0
      %2513 = vmatpush1.msra.mxu0 0.0
      %2514 = vmatprep.subr.mxu0 0.0
      %2515 = vmatpush1.msra.mxu0 0.0
      %2516 = vmatprep.subr.mxu0 0.0
      %2517 = vmatpush1.msra.mxu0 0.0
      %2518 = vmatprep.subr.mxu0 0.0
      %2519 = vmatpush1.msra.mxu0 0.0
      %2520 = vmatprep.subr.mxu0 0.0
      %2521 = vmatpush1.msra.mxu0 0.0
      %2522 = vmatprep.subr.mxu0 0.0
      %2523 = vmatpush1.msra.mxu0 0.0
      %2524 = vmatprep.subr.mxu0 0.0
      %2525 = vmatpush1.msra.mxu0 %v2213
      %2526 = vmatprep.subr.mxu0 0.0
      %2527 = vmatpush2.msra.mxu0 0.0
      %2528 = vmatprep.subr.mxu0 0.0
      %2529 = vmatpush2.msra.mxu0 0.0
      %2530 = vmatprep.subr.mxu0 0.0
      %2531 = vmatpush2.msra.mxu0 0.0
      %2532 = vmatprep.subr.mxu0 0.0
      %2533 = vmatpush2.msra.mxu0 0.0
      %2534 = vmatprep.subr.mxu0 0.0
      %2535 = vmatpush2.msra.mxu0 0.0
      %2536 = vmatprep.subr.mxu0 0.0
      %2537 = vmatpush2.msra.mxu0 0.0
      %2538 = vmatprep.subr.mxu0 0.0
      %2539 = vmatpush2.msra.mxu0 0.0
      %2540 = vmatprep.subr.mxu0 0.0
      %2541 = vmatpush2.msra.mxu0 0.0
      %2542 = vmatprep.subr.mxu0 0.0
      %2543 = vmatpush2.msra.mxu0 0.0
      %2544 = vmatprep.subr.mxu0 0.0
      %2545 = vmatpush2.msra.mxu0 0.0
      %2546 = vmatprep.subr.mxu0 0.0
      %2547 = vmatpush2.msra.mxu0 0.0
      %2548 = vmatprep.subr.mxu0 0.0
      %2549 = vmatpush2.msra.mxu0 0.0
      %2550 = vmatprep.subr.mxu0 0.0
      %2551 = vmatpush2.msra.mxu0 0.0
      %2552 = vmatprep.subr.mxu0 0.0
      %2553 = vmatpush2.msra.mxu0 0.0
      %2554 = vmatprep.subr.mxu0 0.0
      %2555 = vmatpush2.msra.mxu0 0.0
      %2556 = vmatprep.subr.mxu0 0.0
      %2557 = vmatpush2.msra.mxu0 0.0
      %2558 = vmatprep.mubr.f32.mxu0 0.0
      %2559 = vmatmul.mubr.f32.gmra.mxu0 %v2247
      %v2560 = vpop.f32.mrf.mxu0
      %v2561 = vadd.f32 0.0, %v2560
      %v2562 = vpop.f32.mrf.mxu0
      %2563 = vdwg.mxu0
      %v2564 = vmul.f32 %v2561, %v2561
      %v2565 = vsel %vm2463, %v2564, 0.0
      %2566 = vadd.xlane.f32.xlu0 %v2565
      %v2567 = vpop.xlane.xlu0 %2566
      %v2568 = vrot.slane %v2567, 4
      %v2569 = vadd.f32 %v2567, %v2568
      %v2570 = vrot.slane %v2569, 2
      %v2571 = vadd.f32 %v2569, %v2570
      %v2572 = vrot.slane %v2571, 1
      %v2573 = vadd.f32 %v2571, %v2572
      %s2574 = vtos %v2573
      %v2575 = vstv %s2574
      %v2576 = vrsqrt.pop %v2575
      %v2577 = vmul.f32 %v2575, %v2576
      %vm2578 = vcmp.eq.f32.partialorder %v2575, inf
      %v2579 = vsel %vm2578, %v2575, %v2577
      %vm2580 = vcmp.eq.f32.partialorder %v2575, 0.0
      %v2581 = vand.u32 %v2575, 2147483648
      %v2582 = vsel %vm2580, %v2581, %v2579
      %s2583 = vtos %v2582
      %v2584 = vstv %s2583
      %v2585 = vrcp.pop %v2584
      %v2586 = vmul.f32 %v2561, %v2585
      %v2587 = vmul.f32 %v1408, 0.5
      %v2588 = vsub.f32 %v2586, %v2587
      %v2589 = vmul.f32 %v2588, %v2588
      %v2590 = vsel %vm2463, %v2589, 0.0
      %2591 = vadd.xlane.f32.xlu0 %v2590
      %v2592 = vpop.xlane.xlu0 %2591
      %v2593 = vrot.slane %v2592, 4
      %v2594 = vadd.f32 %v2592, %v2593
      %v2595 = vrot.slane %v2594, 2
      %v2596 = vadd.f32 %v2594, %v2595
      %v2597 = vrot.slane %v2596, 1
      %v2598 = vadd.f32 %v2596, %v2597
      %s2599 = vtos %v2598
      %v2600 = vstv %s2599
      %v2601 = vrsqrt.pop %v2600
      %v2602 = vmul.f32 %v2600, %v2601
      %vm2603 = vcmp.eq.f32.partialorder %v2600, inf
      %v2604 = vsel %vm2603, %v2600, %v2602
      %vm2605 = vcmp.eq.f32.partialorder %v2600, 0.0
      %v2606 = vand.u32 %v2600, 2147483648
      %v2607 = vsel %vm2605, %v2606, %v2604
      %s2608 = vtos %v2607
      %v2609 = vmul.f32 %v2459, %v1563
      %v2610 = vsel %vm2463, %v2609, 0.0
      %2611 = vadd.xlane.f32.xlu0 %v2610
      %v2612 = vpop.xlane.xlu0 %2611
      %v2613 = vrsqrt.pop %v2612
      %v2614 = vmul.f32 %v2612, %v2613
      %vm2615 = vcmp.eq.f32.partialorder %v2612, inf
      %v2616 = vsel %vm2615, %v2612, %v2614
      %vm2617 = vcmp.eq.f32.partialorder %v2612, 0.0
      %v2618 = vand.u32 %v2612, 2147483648
      %v2619 = vsel %vm2617, %v2618, %v2616
      %v2620 = vadd.f32 %v2619, 1e-15
      %v2621 = vrcp.pop %v2620
      %v2622 = vmul.f32 1.0, %v2621
      %v2623 = vmul.f32 %v1408, %v2622
      %v2624 = vsel %vm2463, %v2623, 0.0
      %v2625 = vrot.slane %v2624, 4
      %v2626 = vadd.f32 %v2624, %v2625
      %v2627 = vrot.slane %v2626, 2
      %v2628 = vadd.f32 %v2626, %v2627
      %v2629 = vrot.slane %v2628, 1
      %v2630 = vadd.f32 %v2628, %v2629
      %v2631 = vmul.f32 %v2609, %v2622
      %v2632 = vmul.f32 %v2631, %v2630
      %v2633 = vsel %vm2463, %v2632, 0.0
      %2634 = vadd.xlane.f32.xlu0 %v2633
      %v2635 = vpop.xlane.xlu0 %2634
      %v2636 = vmax.f32 %v2635, 1.0
      %v2637 = vrcp.pop %v2636
      %v2638 = vmul.f32 1.0, %v2637
      %v2639 = vpack.c.bf16 %v2632, %v2632
      %v2640 = vld [vmem:[%s6] sm:$0xf]
      %v2641 = vld [vmem:[%s6 + $0x4] sm:$0xf]
      %v2642 = vld [vmem:[%s6 + $0x8] sm:$0xf]
      %v2643 = vld [vmem:[%s6 + $0xc] sm:$0xf]
      %v2644 = vld [vmem:[%s6 + $0x10] sm:$0xf]
      %v2645 = vld [vmem:[%s6 + $0x14] sm:$0xf]
      %v2646 = vld [vmem:[%s6 + $0x18] sm:$0xf]
      %v2647 = vld [vmem:[%s6 + $0x1c] sm:$0xf]
      %v2648 = vld [vmem:[%s6 + $0x20] sm:$0xf]
      %v2649 = vld [vmem:[%s6 + $0x24] sm:$0xf]
      %v2650 = vld [vmem:[%s6 + $0x28] sm:$0xf]
      %v2651 = vld [vmem:[%s6 + $0x2c] sm:$0xf]
      %v2652 = vld [vmem:[%s6 + $0x30] sm:$0xf]
      %v2653 = vld [vmem:[%s6 + $0x34] sm:$0xf]
      %v2654 = vld [vmem:[%s6 + $0x38] sm:$0xf]
      %v2655 = vld [vmem:[%s6 + $0x3c] sm:$0xf]
      %v2656 = vld [vmem:[%s6 + $0x40] sm:$0xf]
      %v2657 = vld [vmem:[%s6 + $0x44] sm:$0xf]
      %v2658 = vld [vmem:[%s6 + $0x48] sm:$0xf]
      %v2659 = vld [vmem:[%s6 + $0x4c] sm:$0xf]
      %v2660 = vld [vmem:[%s6 + $0x50] sm:$0xf]
      %v2661 = vld [vmem:[%s6 + $0x54] sm:$0xf]
      %v2662 = vld [vmem:[%s6 + $0x58] sm:$0xf]
      %v2663 = vld [vmem:[%s6 + $0x5c] sm:$0xf]
      %v2664 = vld [vmem:[%s7] sm:$0x1]
      %v2665 = vld [vmem:[%s7 + $0x1] sm:$0x1]
      %v2666 = vld [vmem:[%s7 + $0x2] sm:$0x1]
      %v2667 = vpack.c.bf16 %v2316, %v2316
      %v2669 = vsel %vm2202, %v2639, 0
      %vm2671 = vcmask 1041408
      %v2673 = vsel %vm2671, %v2667, 0
      %2675 = vmatprep.subr.bf16.mxu0 0
      %2676 = vmatpush1.bf16.msra.mxu0 0
      %2677 = vmatprep.subr.bf16.mxu0 0
      %2678 = vmatpush1.bf16.msra.mxu0 0
      %2679 = vmatprep.subr.bf16.mxu0 0
      %2680 = vmatpush1.bf16.msra.mxu0 0
      %2681 = vmatprep.subr.bf16.mxu0 0
      %2682 = vmatpush1.bf16.msra.mxu0 0
      %2683 = vmatprep.subr.bf16.mxu0 0
      %2684 = vmatpush1.bf16.msra.mxu0 0
      %2685 = vmatprep.subr.bf16.mxu0 0
      %2686 = vmatpush1.bf16.msra.mxu0 0
      %2687 = vmatprep.subr.bf16.mxu0 0
      %2688 = vmatpush1.bf16.msra.mxu0 0
      %2689 = vmatprep.subr.bf16.mxu0 0
      %2690 = vmatpush1.bf16.msra.mxu0 %v2673
      %2691 = vmatprep.subr.bf16.mxu0 0
      %2692 = vmatpush2.bf16.msra.mxu0 0
      %2693 = vmatprep.subr.bf16.mxu0 0
      %2694 = vmatpush2.bf16.msra.mxu0 0
      %2695 = vmatprep.subr.bf16.mxu0 0
      %2696 = vmatpush2.bf16.msra.mxu0 0
      %2697 = vmatprep.subr.bf16.mxu0 0
      %2698 = vmatpush2.bf16.msra.mxu0 0
      %2699 = vmatprep.subr.bf16.mxu0 0
      %2700 = vmatpush2.bf16.msra.mxu0 0
      %2701 = vmatprep.subr.bf16.mxu0 0
      %2702 = vmatpush2.bf16.msra.mxu0 0
      %2703 = vmatprep.subr.bf16.mxu0 0
      %2704 = vmatpush2.bf16.msra.mxu0 0
      %2705 = vmatprep.subr.bf16.mxu0 0
      %2706 = vmatpush2.bf16.msra.mxu0 0
      %2707 = vmatprep.mubr.bf16.mxu0 0
      %2708 = vmatmul.mubr.bf16.gmra.mxu0 %v2669
      %v2709 = vpop.f32.mrf.mxu0
      %v2710 = vadd.f32 0.0, %v2709
      %v2711 = vpop.f32.mrf.mxu0
      %v2712 = vpop.f32.mrf.mxu0
      %v2713 = vpop.f32.mrf.mxu0
      %2714 = vdwg.mxu0
      %v2715 = vmul.f32 %v2710, %v2638
      %2717 = vrot.lane.b32.xlu0 %v2316, 96
      %v2718 = vpop.permute.xlu0 %2717
      %v2720 = vsel %vm1088, %v2715, %v2718
      %v2721 = vpack.c.bf16 %v2720, %v2720
      %v2722 = vpack.c.bf16 %v2718, %v2718
      %v2723 = vlaneseq
      %v2724 = vshrl.u32 %v2723, 7
      %v2725 = vsub.s32 0, %v2724
      %v2726 = vrot.slane %v2664, %v2725
      %v2751 = vunpack.c.l.b16 %v2640
      %v2752 = vunpack.c.l.b16 %v2641
      %v2753 = vunpack.c.l.b16 %v2642
      %v2754 = vunpack.c.l.b16 %v2643
      %v2755 = vunpack.c.l.b16 %v2644
      %v2756 = vunpack.c.l.b16 %v2645
      %v2757 = vunpack.c.l.b16 %v2646
      %v2758 = vunpack.c.l.b16 %v2647
      %v2759 = vunpack.c.l.b16 %v2648
      %v2760 = vunpack.c.l.b16 %v2649
      %v2761 = vunpack.c.l.b16 %v2650
      %v2762 = vunpack.c.l.b16 %v2651
      %v2763 = vunpack.c.l.b16 %v2652
      %v2764 = vunpack.c.l.b16 %v2653
      %v2765 = vunpack.c.l.b16 %v2654
      %v2766 = vunpack.c.l.b16 %v2655
      %v2767 = vunpack.c.l.b16 %v2656
      %v2768 = vunpack.c.l.b16 %v2657
      %v2769 = vunpack.c.l.b16 %v2658
      %v2770 = vunpack.c.l.b16 %v2659
      %v2771 = vunpack.c.l.b16 %v2660
      %v2772 = vunpack.c.l.b16 %v2661
      %v2773 = vunpack.c.l.b16 %v2662
      %v2774 = vunpack.c.l.b16 %v2663
      %v2775 = vpack.c.b16 %v2752, %v2751
      %v2776 = vpack.c.b16 %v2754, %v2753
      %v2777 = vpack.c.b16 %v2756, %v2755
      %v2778 = vpack.c.b16 %v2758, %v2757
      %v2779 = vpack.c.b16 %v2760, %v2759
      %v2780 = vpack.c.b16 %v2762, %v2761
      %v2781 = vpack.c.b16 %v2764, %v2763
      %v2782 = vpack.c.b16 %v2766, %v2765
      %v2783 = vpack.c.b16 %v2768, %v2767
      %v2784 = vpack.c.b16 %v2770, %v2769
      %v2785 = vpack.c.b16 %v2772, %v2771
      %v2786 = vpack.c.b16 %v2774, %v2773
      %v2800 = vsel %vm807, %v2722, 0
      %2802 = vmatprep.subr.bf16.mxu0 0
      %2803 = vmatpush1.bf16.msra.mxu0 %v2782
      %2804 = vmatprep.subr.bf16.mxu0 0
      %2805 = vmatpush1.bf16.msra.mxu0 %v2781
      %2806 = vmatprep.subr.bf16.mxu0 0
      %2807 = vmatpush1.bf16.msra.mxu0 %v2780
      %2808 = vmatprep.subr.bf16.mxu0 0
      %2809 = vmatpush1.bf16.msra.mxu0 %v2779
      %2810 = vmatprep.subr.bf16.mxu0 0
      %2811 = vmatpush1.bf16.msra.mxu0 %v2778
      %2812 = vmatprep.subr.bf16.mxu0 0
      %2813 = vmatpush1.bf16.msra.mxu0 %v2777
      %2814 = vmatprep.subr.bf16.mxu0 0
      %2815 = vmatpush1.bf16.msra.mxu0 %v2776
      %2816 = vmatprep.subr.bf16.mxu0 0
      %2817 = vmatpush1.bf16.msra.mxu0 %v2775
      %2818 = vmatprep.subr.bf16.mxu0 0
      %2819 = vmatpush2.bf16.msra.mxu0 0
      %2820 = vmatprep.subr.bf16.mxu0 0
      %2821 = vmatpush2.bf16.msra.mxu0 0
      %2822 = vmatprep.subr.bf16.mxu0 0
      %2823 = vmatpush2.bf16.msra.mxu0 0
      %2824 = vmatprep.subr.bf16.mxu0 0
      %2825 = vmatpush2.bf16.msra.mxu0 0
      %2826 = vmatprep.subr.bf16.mxu0 0
      %2827 = vmatpush2.bf16.msra.mxu0 %v2786
      %2828 = vmatprep.subr.bf16.mxu0 0
      %2829 = vmatpush2.bf16.msra.mxu0 %v2785
      %2830 = vmatprep.subr.bf16.mxu0 0
      %2831 = vmatpush2.bf16.msra.mxu0 %v2784
      %2832 = vmatprep.subr.bf16.mxu0 0
      %2833 = vmatpush2.bf16.msra.mxu0 %v2783
      %2834 = vmatprep.mubr.bf16.mxu0 %v2800
      %2835 = vmatmul.mubr.bf16.gmra.mxu0 %v2721
      %v2836 = vpop.f32.mrf.mxu0
      %v2837 = vadd.f32 %v2726, %v2836
      %v2838 = vpop.f32.mrf.mxu0
      %v2839 = vpop.f32.mrf.mxu0
      %v2840 = vpop.f32.mrf.mxu0
      %2841 = vdwg.mxu0
      %v2842 = vmax.f32 %v2837, 0.0
      %v2843 = vlaneseq
      %v2844 = vshrl.u32 %v2843, 7
      %v2845 = vsub.s32 0, %v2844
      %v2846 = vrot.slane %v2665, %v2845
      %v2847 = vmul.f32 %v2842, %v2846
      %v2848 = vlaneseq
      %v2849 = vshrl.u32 %v2848, 7
      %v2850 = vsub.s32 0, %v2849
      %v2851 = vrot.slane %v2666, %v2850
      %v2852 = vadd.f32 %v2847, %v2851
      %v2853 = vld [vmem:[%s6 + $0x60] sm:$0xf]
      %v2854 = vld [vmem:[%s6 + $0x64] sm:$0xf]
      %v2855 = vld [vmem:[%s6 + $0x68] sm:$0xf]
      %v2856 = vld [vmem:[%s6 + $0x6c] sm:$0xf]
      %v2857 = vld [vmem:[%s6 + $0x70] sm:$0xf]
      %v2858 = vld [vmem:[%s6 + $0x74] sm:$0xf]
      %v2859 = vld [vmem:[%s6 + $0x78] sm:$0xf]
      %v2860 = vld [vmem:[%s6 + $0x7c] sm:$0xf]
      %v2861 = vld [vmem:[%s7 + $0x3] sm:$0x1]
      %v2862 = vld [vmem:[%s7 + $0x4] sm:$0x1]
      %v2863 = vld [vmem:[%s7 + $0x5] sm:$0x1]
      %v2864 = vpack.c.bf16 %v2852, %v2852
      %v2866 = vsel %vm2671, %v2864, 0
      %2868 = vmatprep.subr.bf16.mxu0 0
      %2869 = vmatpush1.bf16.msra.mxu0 0
      %2870 = vmatprep.subr.bf16.mxu0 0
      %2871 = vmatpush1.bf16.msra.mxu0 0
      %2872 = vmatprep.subr.bf16.mxu0 0
      %2873 = vmatpush1.bf16.msra.mxu0 0
      %2874 = vmatprep.subr.bf16.mxu0 0
      %2875 = vmatpush1.bf16.msra.mxu0 0
      %2876 = vmatprep.subr.bf16.mxu0 0
      %2877 = vmatpush1.bf16.msra.mxu0 0
      %2878 = vmatprep.subr.bf16.mxu0 0
      %2879 = vmatpush1.bf16.msra.mxu0 0
      %2880 = vmatprep.subr.bf16.mxu0 0
      %2881 = vmatpush1.bf16.msra.mxu0 0
      %2882 = vmatprep.subr.bf16.mxu0 0
      %2883 = vmatpush1.bf16.msra.mxu0 %v2866
      %2884 = vmatprep.subr.bf16.mxu0 0
      %2885 = vmatpush2.bf16.msra.mxu0 0
      %2886 = vmatprep.subr.bf16.mxu0 0
      %2887 = vmatpush2.bf16.msra.mxu0 0
      %2888 = vmatprep.subr.bf16.mxu0 0
      %2889 = vmatpush2.bf16.msra.mxu0 0
      %2890 = vmatprep.subr.bf16.mxu0 0
      %2891 = vmatpush2.bf16.msra.mxu0 0
      %2892 = vmatprep.subr.bf16.mxu0 0
      %2893 = vmatpush2.bf16.msra.mxu0 0
      %2894 = vmatprep.subr.bf16.mxu0 0
      %2895 = vmatpush2.bf16.msra.mxu0 0
      %2896 = vmatprep.subr.bf16.mxu0 0
      %2897 = vmatpush2.bf16.msra.mxu0 0
      %2898 = vmatprep.subr.bf16.mxu0 0
      %2899 = vmatpush2.bf16.msra.mxu0 0
      %2900 = vmatprep.mubr.bf16.mxu0 0
      %2901 = vmatmul.mubr.bf16.gmra.mxu0 %v2669
      %v2902 = vpop.f32.mrf.mxu0
      %v2903 = vadd.f32 0.0, %v2902
      %v2904 = vpop.f32.mrf.mxu0
      %v2905 = vpop.f32.mrf.mxu0
      %v2906 = vpop.f32.mrf.mxu0
      %2907 = vdwg.mxu0
      %v2908 = vmul.f32 %v2903, %v2638
      %2910 = vrot.lane.b32.xlu0 %v2852, 32
      %v2911 = vpop.permute.xlu0 %2910
      %v2913 = vsel %vm654, %v2908, %v2911
      %v2914 = vpack.c.bf16 %v2913, %v2913
      %v2915 = vlaneseq
      %v2916 = vshrl.u32 %v2915, 7
      %v2917 = vsub.s32 0, %v2916
      %v2918 = vrot.slane %v2861, %v2917
      %v2927 = vunpack.c.l.b16 %v2853
      %v2928 = vunpack.c.l.b16 %v2854
      %v2929 = vunpack.c.l.b16 %v2855
      %v2930 = vunpack.c.l.b16 %v2856
      %v2931 = vunpack.c.l.b16 %v2857
      %v2932 = vunpack.c.l.b16 %v2858
      %v2933 = vunpack.c.l.b16 %v2859
      %v2934 = vunpack.c.l.b16 %v2860
      %v2935 = vpack.c.b16 %v2928, %v2927
      %v2936 = vpack.c.b16 %v2930, %v2929
      %v2937 = vpack.c.b16 %v2932, %v2931
      %v2938 = vpack.c.b16 %v2934, %v2933
      %v2944 = vsel %vm807, %v2914, 0
      %2946 = vmatprep.subr.bf16.mxu0 0
      %2947 = vmatpush1.bf16.msra.mxu0 0
      %2948 = vmatprep.subr.bf16.mxu0 0
      %2949 = vmatpush1.bf16.msra.mxu0 0
      %2950 = vmatprep.subr.bf16.mxu0 0
      %2951 = vmatpush1.bf16.msra.mxu0 0
      %2952 = vmatprep.subr.bf16.mxu0 0
      %2953 = vmatpush1.bf16.msra.mxu0 0
      %2954 = vmatprep.subr.bf16.mxu0 0
      %2955 = vmatpush1.bf16.msra.mxu0 %v2938
      %2956 = vmatprep.subr.bf16.mxu0 0
      %2957 = vmatpush1.bf16.msra.mxu0 %v2937
      %2958 = vmatprep.subr.bf16.mxu0 0
      %2959 = vmatpush1.bf16.msra.mxu0 %v2936
      %2960 = vmatprep.subr.bf16.mxu0 0
      %2961 = vmatpush1.bf16.msra.mxu0 %v2935
      %2962 = vmatprep.subr.bf16.mxu0 0
      %2963 = vmatpush2.bf16.msra.mxu0 0
      %2964 = vmatprep.subr.bf16.mxu0 0
      %2965 = vmatpush2.bf16.msra.mxu0 0
      %2966 = vmatprep.subr.bf16.mxu0 0
      %2967 = vmatpush2.bf16.msra.mxu0 0
      %2968 = vmatprep.subr.bf16.mxu0 0
      %2969 = vmatpush2.bf16.msra.mxu0 0
      %2970 = vmatprep.subr.bf16.mxu0 0
      %2971 = vmatpush2.bf16.msra.mxu0 0
      %2972 = vmatprep.subr.bf16.mxu0 0
      %2973 = vmatpush2.bf16.msra.mxu0 0
      %2974 = vmatprep.subr.bf16.mxu0 0
      %2975 = vmatpush2.bf16.msra.mxu0 0
      %2976 = vmatprep.subr.bf16.mxu0 0
      %2977 = vmatpush2.bf16.msra.mxu0 0
      %2978 = vmatprep.mubr.bf16.mxu0 0
      %2979 = vmatmul.mubr.bf16.gmra.mxu0 %v2944
      %v2980 = vpop.f32.mrf.mxu0
      %v2981 = vadd.f32 %v2918, %v2980
      %v2982 = vpop.f32.mrf.mxu0
      %v2983 = vpop.f32.mrf.mxu0
      %v2984 = vpop.f32.mrf.mxu0
      %2985 = vdwg.mxu0
      %v2986 = vmax.f32 %v2981, 0.0
      %v2987 = vlaneseq
      %v2988 = vshrl.u32 %v2987, 7
      %v2989 = vsub.s32 0, %v2988
      %v2990 = vrot.slane %v2862, %v2989
      %v2991 = vmul.f32 %v2986, %v2990
      %v2992 = vlaneseq
      %v2993 = vshrl.u32 %v2992, 7
      %v2994 = vsub.s32 0, %v2993
      %v2995 = vrot.slane %v2863, %v2994
      %v2996 = vadd.f32 %v2991, %v2995
      %v2997 = vld [vmem:[%s6 + $0x80] sm:$0xf]
      %v2998 = vld [vmem:[%s6 + $0x84] sm:$0xf]
      %v2999 = vld [vmem:[%s6 + $0x88] sm:$0xf]
      %v3000 = vld [vmem:[%s6 + $0x8c] sm:$0xf]
      %v3001 = vld [vmem:[%s6 + $0x90] sm:$0xf]
      %v3002 = vld [vmem:[%s6 + $0x94] sm:$0xf]
      %v3003 = vld [vmem:[%s6 + $0x98] sm:$0xf]
      %v3004 = vld [vmem:[%s6 + $0x9c] sm:$0xf]
      %v3005 = vld [vmem:[%s7 + $0x6] sm:$0x1]
      %v3006 = vld [vmem:[%s7 + $0x7] sm:$0x1]
      %v3007 = vld [vmem:[%s7 + $0x8] sm:$0x1]
      %v3008 = vpack.c.bf16 %v2996, %v2996
      %v3010 = vsel %vm2671, %v3008, 0
      %3012 = vmatprep.subr.bf16.mxu0 0
      %3013 = vmatpush1.bf16.msra.mxu0 0
      %3014 = vmatprep.subr.bf16.mxu0 0
      %3015 = vmatpush1.bf16.msra.mxu0 0
      %3016 = vmatprep.subr.bf16.mxu0 0
      %3017 = vmatpush1.bf16.msra.mxu0 0
      %3018 = vmatprep.subr.bf16.mxu0 0
      %3019 = vmatpush1.bf16.msra.mxu0 0
      %3020 = vmatprep.subr.bf16.mxu0 0
      %3021 = vmatpush1.bf16.msra.mxu0 0
      %3022 = vmatprep.subr.bf16.mxu0 0
      %3023 = vmatpush1.bf16.msra.mxu0 0
      %3024 = vmatprep.subr.bf16.mxu0 0
      %3025 = vmatpush1.bf16.msra.mxu0 0
      %3026 = vmatprep.subr.bf16.mxu0 0
      %3027 = vmatpush1.bf16.msra.mxu0 %v3010
      %3028 = vmatprep.subr.bf16.mxu0 0
      %3029 = vmatpush2.bf16.msra.mxu0 0
      %3030 = vmatprep.subr.bf16.mxu0 0
      %3031 = vmatpush2.bf16.msra.mxu0 0
      %3032 = vmatprep.subr.bf16.mxu0 0
      %3033 = vmatpush2.bf16.msra.mxu0 0
      %3034 = vmatprep.subr.bf16.mxu0 0
      %3035 = vmatpush2.bf16.msra.mxu0 0
      %3036 = vmatprep.subr.bf16.mxu0 0
      %3037 = vmatpush2.bf16.msra.mxu0 0
      %3038 = vmatprep.subr.bf16.mxu0 0
      %3039 = vmatpush2.bf16.msra.mxu0 0
      %3040 = vmatprep.subr.bf16.mxu0 0
      %3041 = vmatpush2.bf16.msra.mxu0 0
      %3042 = vmatprep.subr.bf16.mxu0 0
      %3043 = vmatpush2.bf16.msra.mxu0 0
      %3044 = vmatprep.mubr.bf16.mxu0 0
      %3045 = vmatmul.mubr.bf16.gmra.mxu0 %v2669
      %v3046 = vpop.f32.mrf.mxu0
      %v3047 = vadd.f32 0.0, %v3046
      %v3048 = vpop.f32.mrf.mxu0
      %v3049 = vpop.f32.mrf.mxu0
      %v3050 = vpop.f32.mrf.mxu0
      %3051 = vdwg.mxu0
      %v3052 = vmul.f32 %v3047, %v2638
      %3054 = vrot.lane.b32.xlu0 %v2996, 32
      %v3055 = vpop.permute.xlu0 %3054
      %v3057 = vsel %vm654, %v3052, %v3055
      %v3058 = vpack.c.bf16 %v3057, %v3057
      %v3059 = vlaneseq
      %v3060 = vshrl.u32 %v3059, 7
      %v3061 = vsub.s32 0, %v3060
      %v3062 = vrot.slane %v3005, %v3061
      %v3071 = vunpack.c.l.b16 %v2997
      %v3072 = vunpack.c.l.b16 %v2998
      %v3073 = vunpack.c.l.b16 %v2999
      %v3074 = vunpack.c.l.b16 %v3000
      %v3075 = vunpack.c.l.b16 %v3001
      %v3076 = vunpack.c.l.b16 %v3002
      %v3077 = vunpack.c.l.b16 %v3003
      %v3078 = vunpack.c.l.b16 %v3004
      %v3079 = vpack.c.b16 %v3072, %v3071
      %v3080 = vpack.c.b16 %v3074, %v3073
      %v3081 = vpack.c.b16 %v3076, %v3075
      %v3082 = vpack.c.b16 %v3078, %v3077
      %v3088 = vsel %vm807, %v3058, 0
      %3090 = vmatprep.subr.bf16.mxu0 0
      %3091 = vmatpush1.bf16.msra.mxu0 0
      %3092 = vmatprep.subr.bf16.mxu0 0
      %3093 = vmatpush1.bf16.msra.mxu0 0
      %3094 = vmatprep.subr.bf16.mxu0 0
      %3095 = vmatpush1.bf16.msra.mxu0 0
      %3096 = vmatprep.subr.bf16.mxu0 0
      %3097 = vmatpush1.bf16.msra.mxu0 0
      %3098 = vmatprep.subr.bf16.mxu0 0
      %3099 = vmatpush1.bf16.msra.mxu0 %v3082
      %3100 = vmatprep.subr.bf16.mxu0 0
      %3101 = vmatpush1.bf16.msra.mxu0 %v3081
      %3102 = vmatprep.subr.bf16.mxu0 0
      %3103 = vmatpush1.bf16.msra.mxu0 %v3080
      %3104 = vmatprep.subr.bf16.mxu0 0
      %3105 = vmatpush1.bf16.msra.mxu0 %v3079
      %3106 = vmatprep.subr.bf16.mxu0 0
      %3107 = vmatpush2.bf16.msra.mxu0 0
      %3108 = vmatprep.subr.bf16.mxu0 0
      %3109 = vmatpush2.bf16.msra.mxu0 0
      %3110 = vmatprep.subr.bf16.mxu0 0
      %3111 = vmatpush2.bf16.msra.mxu0 0
      %3112 = vmatprep.subr.bf16.mxu0 0
      %3113 = vmatpush2.bf16.msra.mxu0 0
      %3114 = vmatprep.subr.bf16.mxu0 0
      %3115 = vmatpush2.bf16.msra.mxu0 0
      %3116 = vmatprep.subr.bf16.mxu0 0
      %3117 = vmatpush2.bf16.msra.mxu0 0
      %3118 = vmatprep.subr.bf16.mxu0 0
      %3119 = vmatpush2.bf16.msra.mxu0 0
      %3120 = vmatprep.subr.bf16.mxu0 0
      %3121 = vmatpush2.bf16.msra.mxu0 0
      %3122 = vmatprep.mubr.bf16.mxu0 0
      %3123 = vmatmul.mubr.bf16.gmra.mxu0 %v3088
      %v3124 = vpop.f32.mrf.mxu0
      %v3125 = vadd.f32 %v3062, %v3124
      %v3126 = vpop.f32.mrf.mxu0
      %v3127 = vpop.f32.mrf.mxu0
      %v3128 = vpop.f32.mrf.mxu0
      %3129 = vdwg.mxu0
      %v3130 = vmax.f32 %v3125, 0.0
      %v3131 = vlaneseq
      %v3132 = vshrl.u32 %v3131, 7
      %v3133 = vsub.s32 0, %v3132
      %v3134 = vrot.slane %v3006, %v3133
      %v3135 = vmul.f32 %v3130, %v3134
      %v3136 = vlaneseq
      %v3137 = vshrl.u32 %v3136, 7
      %v3138 = vsub.s32 0, %v3137
      %v3139 = vrot.slane %v3007, %v3138
      %v3140 = vadd.f32 %v3135, %v3139
      %3142 = vrot.lane.b32.xlu0 %v3140, 64
      %v3143 = vpop.permute.xlu0 %3142
      %v3145 = vsel %vm654, %v2852, %v3055
      %v3146 = vsel %vm807, %v3145, %v3143
      %vm3147 = vcmask 781312
      %v3148 = vsel %vm3147, %v3146, 0.0
      %v3149 = vrot.slane %v3148, 4
      %v3150 = vadd.f32 %v3148, %v3149
      %v3151 = vrot.slane %v3150, 2
      %v3152 = vadd.f32 %v3150, %v3151
      %v3153 = vrot.slane %v3152, 1
      %v3154 = vadd.f32 %v3152, %v3153
      %v3155 = vrcp.pop 4.0
      %v3156 = vmul.f32 %v3154, %v3155
      %v3157 = vpack.c.bf16 %v3156, %v3156
      %v3158 = vld [vmem:[%s12] sm:$0xf]
      %v3159 = vld [vmem:[%s12 + $0x4] sm:$0xf]
      %v3160 = vld [vmem:[%s12 + $0x8] sm:$0xf]
      %v3161 = vld [vmem:[%s12 + $0xc] sm:$0xf]
      %v3162 = vld [vmem:[%s12 + $0x10] sm:$0xf]
      %v3163 = vld [vmem:[%s12 + $0x14] sm:$0xf]
      %v3164 = vld [vmem:[%s12 + $0x18] sm:$0xf]
      %v3165 = vld [vmem:[%s12 + $0x1c] sm:$0xf]
      %v3166 = vld [vmem:[%s12 + $0x20] sm:$0xf]
      %v3167 = vld [vmem:[%s12 + $0x24] sm:$0xf]
      %v3168 = vld [vmem:[%s12 + $0x28] sm:$0xf]
      %v3169 = vld [vmem:[%s12 + $0x2c] sm:$0xf]
      %v3170 = vld [vmem:[%s13] sm:$0x1]
      %v3183 = vunpack.c.l.b16 %v3158
      %v3184 = vunpack.c.l.b16 %v3159
      %v3185 = vunpack.c.l.b16 %v3160
      %v3186 = vunpack.c.l.b16 %v3161
      %v3187 = vunpack.c.l.b16 %v3162
      %v3188 = vunpack.c.l.b16 %v3163
      %v3189 = vunpack.c.l.b16 %v3164
      %v3190 = vunpack.c.l.b16 %v3165
      %v3191 = vunpack.c.l.b16 %v3166
      %v3192 = vunpack.c.l.b16 %v3167
      %v3193 = vunpack.c.l.b16 %v3168
      %v3194 = vunpack.c.l.b16 %v3169
      %v3195 = vpack.c.b16 %v3184, %v3183
      %v3196 = vpack.c.b16 %v3186, %v3185
      %v3197 = vpack.c.b16 %v3188, %v3187
      %v3198 = vpack.c.b16 %v3190, %v3189
      %v3199 = vpack.c.b16 %v3192, %v3191
      %v3200 = vpack.c.b16 %v3194, %v3193
      %v3208 = vsel %vm1088, %v3157, 0
      %3210 = vmatprep.subr.bf16.mxu0 0
      %3211 = vmatpush1.bf16.msra.mxu0 0
      %3212 = vmatprep.subr.bf16.mxu0 0
      %3213 = vmatpush1.bf16.msra.mxu0 0
      %3214 = vmatprep.subr.bf16.mxu0 0
      %3215 = vmatpush1.bf16.msra.mxu0 %v3200
      %3216 = vmatprep.subr.bf16.mxu0 0
      %3217 = vmatpush1.bf16.msra.mxu0 %v3199
      %3218 = vmatprep.subr.bf16.mxu0 0
      %3219 = vmatpush1.bf16.msra.mxu0 %v3198
      %3220 = vmatprep.subr.bf16.mxu0 0
      %3221 = vmatpush1.bf16.msra.mxu0 %v3197
      %3222 = vmatprep.subr.bf16.mxu0 0
      %3223 = vmatpush1.bf16.msra.mxu0 %v3196
      %3224 = vmatprep.subr.bf16.mxu0 0
      %3225 = vmatpush1.bf16.msra.mxu0 %v3195
      %3226 = vmatprep.subr.bf16.mxu0 0
      %3227 = vmatpush2.bf16.msra.mxu0 0
      %3228 = vmatprep.subr.bf16.mxu0 0
      %3229 = vmatpush2.bf16.msra.mxu0 0
      %3230 = vmatprep.subr.bf16.mxu0 0
      %3231 = vmatpush2.bf16.msra.mxu0 0
      %3232 = vmatprep.subr.bf16.mxu0 0
      %3233 = vmatpush2.bf16.msra.mxu0 0
      %3234 = vmatprep.subr.bf16.mxu0 0
      %3235 = vmatpush2.bf16.msra.mxu0 0
      %3236 = vmatprep.subr.bf16.mxu0 0
      %3237 = vmatpush2.bf16.msra.mxu0 0
      %3238 = vmatprep.subr.bf16.mxu0 0
      %3239 = vmatpush2.bf16.msra.mxu0 0
      %3240 = vmatprep.subr.bf16.mxu0 0
      %3241 = vmatpush2.bf16.msra.mxu0 0
      %3242 = vmatprep.mubr.bf16.mxu0 0
      %3243 = vmatmul.mubr.bf16.gmra.mxu0 %v3208
      %v3244 = vpop.f32.mrf.mxu0
      %v3245 = vadd.f32 %v3170, %v3244
      %v3246 = vpop.f32.mrf.mxu0
      %v3247 = vpop.f32.mrf.mxu0
      %v3248 = vpop.f32.mrf.mxu0
      %3249 = vdwg.mxu0
      %v3250 = vmax.f32 %v3245, 0.0
      %v3251 = vpack.c.bf16 %v3250, %v3250
      %v3252 = vld [vmem:[%s14] sm:$0xf]
      %v3253 = vld [vmem:[%s14 + $0x4] sm:$0xf]
      %v3254 = vld [vmem:[%s14 + $0x8] sm:$0xf]
      %v3255 = vld [vmem:[%s14 + $0xc] sm:$0xf]
      %v3256 = vld [vmem:[%s15] sm:$0x1]
      %v3261 = vunpack.c.l.b16 %v3252
      %v3262 = vunpack.c.l.b16 %v3253
      %v3263 = vunpack.c.l.b16 %v3254
      %v3264 = vunpack.c.l.b16 %v3255
      %v3265 = vpack.c.b16 %v3262, %v3261
      %v3266 = vpack.c.b16 %v3264, %v3263
      %v3270 = vsel %vm654, %v3251, 0
      %3272 = vmatprep.subr.bf16.mxu0 0
      %3273 = vmatpush1.bf16.msra.mxu0 0
      %3274 = vmatprep.subr.bf16.mxu0 0
      %3275 = vmatpush1.bf16.msra.mxu0 0
      %3276 = vmatprep.subr.bf16.mxu0 0
      %3277 = vmatpush1.bf16.msra.mxu0 0
      %3278 = vmatprep.subr.bf16.mxu0 0
      %3279 = vmatpush1.bf16.msra.mxu0 0
      %3280 = vmatprep.subr.bf16.mxu0 0
      %3281 = vmatpush1.bf16.msra.mxu0 0
      %3282 = vmatprep.subr.bf16.mxu0 0
      %3283 = vmatpush1.bf16.msra.mxu0 0
      %3284 = vmatprep.subr.bf16.mxu0 0
      %3285 = vmatpush1.bf16.msra.mxu0 %v3266
      %3286 = vmatprep.subr.bf16.mxu0 0
      %3287 = vmatpush1.bf16.msra.mxu0 %v3265
      %3288 = vmatprep.subr.bf16.mxu0 0
      %3289 = vmatpush2.bf16.msra.mxu0 0
      %3290 = vmatprep.subr.bf16.mxu0 0
      %3291 = vmatpush2.bf16.msra.mxu0 0
      %3292 = vmatprep.subr.bf16.mxu0 0
      %3293 = vmatpush2.bf16.msra.mxu0 0
      %3294 = vmatprep.subr.bf16.mxu0 0
      %3295 = vmatpush2.bf16.msra.mxu0 0
      %3296 = vmatprep.subr.bf16.mxu0 0
      %3297 = vmatpush2.bf16.msra.mxu0 0
      %3298 = vmatprep.subr.bf16.mxu0 0
      %3299 = vmatpush2.bf16.msra.mxu0 0
      %3300 = vmatprep.subr.bf16.mxu0 0
      %3301 = vmatpush2.bf16.msra.mxu0 0
      %3302 = vmatprep.subr.bf16.mxu0 0
      %3303 = vmatpush2.bf16.msra.mxu0 0
      %3304 = vmatprep.mubr.bf16.mxu0 0
      %3305 = vmatmul.mubr.bf16.gmra.mxu0 %v3270
      %v3306 = vpop.f32.mrf.mxu0
      %v3307 = vadd.f32 %v3256, %v3306
      %v3308 = vpop.f32.mrf.mxu0
      %v3309 = vpop.f32.mrf.mxu0
      %v3310 = vpop.f32.mrf.mxu0
      %3311 = vdwg.mxu0
      %v3312 = vsel %vm541, %v3307, -inf
      %vm3313 = vcmask 1040384
      %v3314 = vsel %vm3313, %v3312, -inf
      %3315 = vmax.xlane.f32.xlu0 %v3314
      %v3316 = vpop.xlane.xlu0 %3315
      %v3317 = vsub.f32 %v3307, %v3316
      %v3318 = vmul.f32 %v3317, 1.442695
      %v3319 = vpow.pop %v3318
      %v3320 = vsel %vm541, %v3319, 0.0
      %v3321 = vsel %vm3313, %v3320, 0.0
      %3322 = vadd.xlane.f32.xlu0 %v3321
      %v3323 = vpop.xlane.xlu0 %3322
      %v3324 = vlog2.pop %v3323
      %v3325 = vmul.f32 %v3324, 0.6931472
      %v3326 = vadd.f32 %v3325, %v3316
      %v3327 = vsub.f32 %v3307, %v3326
      %v3328 = vsel %vm541, %v3327, 0.0
      %vm3329 = vcmp.eq.s32.totalorder %v540, 4
      %s3330 = sadd.f32 %s1447, %s2493
      %v3331 = vstv %s3330
      %v3332 = vsel %vm3329, %v3331, %v3328
      %vm3333 = vcmp.eq.s32.totalorder %v540, 5
      %s3334 = sadd.f32 %s1562, %s2608
      %v3335 = vstv %s3334
      %v3336 = vsel %vm3333, %v3335, %v3332
      %3337 = vst [vmem:[%s537] sm:$0x1] %v3336
      %p3338 = scmp.lt.s32.totalorder %s27, 1
      %s3339 = scalar_select %p3338, %s27, 1
      %s3340 = scalar_lea.vmem %s16, %s3339
      // Predicated region
      $region85: #{mincut_pool_net_forward.1} parent=83 // pred_check
        %p3341 = pneg %p391
      $region86: #{mincut_pool_net_forward.1} parent=83 // pred_check_branch
        %3343 = sbr.rel (%p3341) target = $region88
      $region87: #{mincut_pool_net_forward.1} parent=83 // pred_region
        _
      $region88: #{mincut_pool_net_forward.1} parent=83 // pred_fallthru
        _
    $region84: #{mincut_pool_net_forward.1} parent=5 // pred_fallthru
      _
    %p3344 = scmp.le.s32.totalorder 2, %s22
    // Predicated region
    $region89: #{mincut_pool_net_forward.1} parent=5 // pred_check
      %p3345 = pneg %p3344
    $region90: #{mincut_pool_net_forward.1} parent=5 // pred_check_branch
      %3347 = sbr.rel (%p3345) target = $region92
    $region91: #{mincut_pool_net_forward.1} parent=5 // pred_region
      %s3348 = ssub.s32 %s22, 2
      // Predicated region
      $region93: #{mincut_pool_net_forward.1} parent=91 // pred_check
        %p3349 = pneg %p397
      $region94: #{mincut_pool_net_forward.1} parent=91 // pred_check_branch
        %3351 = sbr.rel (%p3349) target = $region96
      $region95: #{mincut_pool_net_forward.1} parent=91 // pred_region
        %p3352 = scmp.lt.s32.totalorder %s28, 1
        %s3353 = scalar_select %p3352, %s28, 1
        %s3354 = scalar_lea.vmem %s16, %s3353
      $region96: #{mincut_pool_net_forward.1} parent=91 // pred_fallthru
        _
    $region92: #{mincut_pool_net_forward.1} parent=5 // pred_fallthru
      _
  $region6: #{mincut_pool_net_forward.1} parent=0 // loop_footer
    %s26 = sadd.s32 1, %s22
  $region7: #{mincut_pool_net_forward.1} parent=0 // loop_footer_branch
    %21 = sbr.rel target = $region3
  $region8: #{mincut_pool_net_forward.1} parent=0 // loop_exit
    _

</llo_original>
